<compile_context>
chip_gen: v6e
topology: v6e:2x2x1
jax: 0.10.0
libtpu: 0.0.40
codegen_flags: <defaults>
</compile_context>

<pallas_src>
import functools

import numpy as np
import jax
import jax.numpy as jnp
from jax.experimental import pallas as pl
from jax.experimental.pallas import tpu as pltpu

EMBED_DIM = 48                      # embedding_dim
COND_PREF = 4                       # cond_embed_pref
COND_DIM = EMBED_DIM * COND_PREF    # 192
IN_CHANNELS = 1
KSIZE = 3
PAD = 1


# --------------------------------------------------------------------------
# glue: timestep embedding (matches the torch.logspace-based reference exactly)
# --------------------------------------------------------------------------
def get_timestep_embedding(timesteps, embedding_dim, max_timescale=10000, min_timescale=1):
    t = timesteps.astype(jnp.float32) * 1000.0
    assert t.ndim == 1
    assert embedding_dim % 2 == 0
    num_timescales = embedding_dim // 2
    inv_timescales = jnp.logspace(
        -np.log10(min_timescale), -np.log10(max_timescale),
        num_timescales, dtype=jnp.float32)
    emb = t[:, None] * inv_timescales[None, :]
    return jnp.concatenate([jnp.sin(emb), jnp.cos(emb)], axis=1)


# --------------------------------------------------------------------------
# Pallas kernel 1: conditioning MLP (Linear -> SiLU -> Linear -> SiLU)
# Single invocation (no grid); batch rows padded to 8 sublanes by the wrapper.
# --------------------------------------------------------------------------
def _mlp_kernel(t_ref, w1_ref, b1_ref, w2_ref, b2_ref, o_ref):
    h = jnp.dot(t_ref[...], w1_ref[...], preferred_element_type=jnp.float32) + b1_ref[...]
    h = h * jax.nn.sigmoid(h)                        # SiLU
    h2 = jnp.dot(h, w2_ref[...], preferred_element_type=jnp.float32) + b2_ref[...]
    o_ref[...] = h2 * jax.nn.sigmoid(h2)             # SiLU


def embed_conditioning(t_emb, w1, b1, w2, b2):
    B = t_emb.shape[0]
    Bp = max(8, ((B + 7) // 8) * 8)                  # pad rows to a full sublane tile
    t_pad = jnp.pad(t_emb, ((0, Bp - B), (0, 0)))
    out = pl.pallas_call(
        _mlp_kernel,
        out_shape=jax.ShapeDtypeStruct((Bp, COND_DIM), jnp.float32),
    )(t_pad, w1, b1, w2, b2)
    return out[:B]


# --------------------------------------------------------------------------
# Pallas kernel 2: conv_in (3x3x3, padding=1) as a fused in-kernel im2col + GEMM.
#
#   Input prep (XLA, ~input-sized traffic only): depth halo of 1 and a flat (W+1)
#   zero halo on the flattened (h, w) axis -> every tap (kd, kh, kw) of an output
#   voxel is a plain shifted lane slice of a resident row; only W-boundary wraps
#   need zeroing, handled by a small constant (27, H*W) mask.
#
#   Per grid step (batch b, depth-tile dt):
#     for each depth slice in the tile:
#       taps(27, HW)  <- 27 shifted lane slices of 3 resident rows, * mask
#       out(48, HW)   <- Wmat(48, 27) @ taps + bias      (f32 acc, bf16 store)
# --------------------------------------------------------------------------
def _conv_in_kernel(mask_ref, w_ref, b_ref, x_ref, o_ref, *, cin, td, n_dt, H, W):
    HW = H * W
    mask = mask_ref[...]                             # (cin*27, HW) f32
    wmat = w_ref[...]                                # (Cout, cin*27) f32
    bcol = b_ref[...]                                # (Cout, 1) f32, lane-broadcast
    d0 = 0 if n_dt == 1 else pl.program_id(1) * td
    for dd in range(td):                             # static unroll over depth slices
        rows = []
        for c in range(cin):
            for kd in range(3):
                line = x_ref[0, c, pl.ds(d0 + dd + kd, 1), :]      # (1, Lp)
                for kh in range(3):
                    for kw in range(3):
                        s = kh * W + kw              # flat tap shift (W+1 halo folded in)
                        rows.append(line[:, s:s + HW])
        taps = jnp.concatenate(rows, axis=0) * mask                # (cin*27, HW)
        acc = jnp.dot(wmat, taps, preferred_element_type=jnp.float32) + bcol
        o_ref[0, :, dd * HW:(dd + 1) * HW] = acc.astype(o_ref.dtype)


def _pick_depth_tile(D, HW, batch, target_lanes=8192):
    # candidates: divisors of D whose lane block (td*HW) is a multiple of 128
    cands = [t for t in range(1, D + 1) if D % t == 0 and (t * HW) % 128 == 0]
    if not cands:
        return D                                     # full-extent lane block is always legal
    within = [t for t in cands if t * HW <= target_lanes] or [min(cands)]
    if batch == 1:                                   # only force >=2 grid steps when the batch
        two = [t for t in within if D // t >= 2]     # axis cannot feed both v7x TensorCores
        if two:
            return max(two)
    return max(within)


def _tap_boundary_mask(cin, H, W):
    hw = np.arange(H * W)
    h, w = hw // W, hw % W
    rows = []
    for kd in range(3):
        for kh in range(3):
            for kw in range(3):
                ok = ((h + kh - 1 >= 0) & (h + kh - 1 < H) &
                      (w + kw - 1 >= 0) & (w + kw - 1 < W))
                rows.append(ok.astype(np.float32))
    m = np.stack(rows, axis=0)                       # (27, HW)
    return jnp.asarray(np.tile(m, (cin, 1)))         # (cin*27, HW)


def conv3d_in(x, weight, bias, out_dtype=jnp.bfloat16):
    """3x3x3 'same' conv.  x: (B, Cin, D, H, W) NCDHW; weight: (Cout, Cin, 3, 3, 3)."""
    B, Cin, D, H, W = x.shape
    Cout = weight.shape[0]
    HW = H * W
    Dp = D + 2 * PAD
    Lp = HW + 2 * (W + 1)
    K = Cin * KSIZE ** 3

    # glue (tiny vs. output traffic): depth halo + flat (W+1) zero halo on the
    # flattened (h, w) axis so every in-kernel tap is a shifted lane slice.
    xfp = jnp.pad(x.reshape(B, Cin, D, HW),
                  ((0, 0), (0, 0), (PAD, PAD), (W + 1, W + 1)))    # (B, Cin, Dp, Lp) f32

    wmat = weight.reshape(Cout, K).astype(jnp.float32)             # (Cout, 27)
    bcol = bias.reshape(Cout, 1).astype(jnp.float32)               # lane-broadcast column
    mask = _tap_boundary_mask(Cin, H, W)                           # (27, HW) constant

    td = _pick_depth_tile(D, HW, B)
    n_dt = D // td

    # VMEM headroom (mainly for v5e's 16 MiB default scoped limit when blocks grow).
    est = (2 * (Cin * Dp * Lp * 4)
           + 2 * (Cout * td * HW * jnp.dtype(out_dtype).itemsize)
           + K * HW * 4 + Cout * K * 4 + (1 << 20))
    vmem_limit = int(min(56 * 2 ** 20, max(32 * 2 ** 20, 2 * est)))

    kernel = functools.partial(_conv_in_kernel, cin=Cin, td=td, n_dt=n_dt, H=H, W=W)
    out = pl.pallas_call(
        kernel,
        out_shape=jax.ShapeDtypeStruct((B, Cout, D * HW), out_dtype),
        grid=(B, n_dt),
        in_specs=[
            pl.BlockSpec((K, HW), lambda b, dt: (0, 0)),                 # resident tap mask
            pl.BlockSpec((Cout, K), lambda b, dt: (0, 0)),               # resident weights
            pl.BlockSpec((Cout, 1), lambda b, dt: (0, 0)),               # resident bias
            pl.BlockSpec((1, Cin, Dp, Lp), lambda b, dt: (b, 0, 0, 0)),  # per-batch volume
        ],
        out_specs=pl.BlockSpec((1, Cout, td * HW), lambda b, dt: (b, 0, dt)),
        compiler_params=pltpu.CompilerParams(
            dimension_semantics=("parallel", "parallel"),
            vmem_limit_bytes=vmem_limit),
    )(mask, wmat, bcol, xfp)

    return out.reshape(B, Cout, D, H, W)             # metadata-only reshape, no copy


# --------------------------------------------------------------------------
# Model: deterministic parameter init + forward
# --------------------------------------------------------------------------
def init_params(key):
    k1, k2, k3, k4, k5, k6 = jax.random.split(key, 6)
    scale = 0.02
    return {
        "w1": scale * jax.random.normal(k1, (EMBED_DIM, COND_DIM), jnp.float32),
        "b1": scale * jax.random.normal(k2, (1, COND_DIM), jnp.float32),
        "w2": scale * jax.random.normal(k3, (COND_DIM, COND_DIM), jnp.float32),
        "b2": scale * jax.random.normal(k4, (1, COND_DIM), jnp.float32),
        "conv_w": scale * jax.random.normal(
            k5, (EMBED_DIM, IN_CHANNELS, KSIZE, KSIZE, KSIZE), jnp.float32),
        "conv_b": scale * jax.random.normal(k6, (EMBED_DIM,), jnp.float32),
    }


def my_model_forward(params, time, x):
    B = x.shape[0]
    time_b = jnp.broadcast_to(jnp.reshape(time, (-1,)), (B,))     # time.expand(B)
    assert time_b.shape == (B,)
    t_embedding = get_timestep_embedding(time_b, EMBED_DIM)
    cond = embed_conditioning(
        t_embedding, params["w1"], params["b1"], params["w2"], params["b2"])
    h = conv3d_in(x, params["conv_w"], params["conv_b"])
    # TODO(synk): UNet3D definition is missing from the reference; UNET(h, cond) not applied.
    return h, cond


# pure-XLA reference (for the in-script correctness check only)
def reference_forward(params, time, x):
    B = x.shape[0]
    t = jnp.broadcast_to(jnp.reshape(time, (-1,)), (B,))
    emb = get_timestep_embedding(t, EMBED_DIM)
    h = emb @ params["w1"] + params["b1"]
    h = h * jax.nn.sigmoid(h)
    h = h @ params["w2"] + params["b2"]
    cond = h * jax.nn.sigmoid(h)
    conv = jax.lax.conv_general_dilated(
        x, params["conv_w"], window_strides=(1, 1, 1),
        padding=((PAD, PAD), (PAD, PAD), (PAD, PAD)),
        dimension_numbers=("NCDHW", "OIDHW", "NCDHW"))
    conv = conv + params["conv_b"][None, :, None, None, None]
    return conv, cond


if __name__ == "__main__":
    key = jax.random.PRNGKey(0)
    kp, kx = jax.random.split(key)
    params = init_params(kp)

    # small shapes consistent with the module: batch=2, Cin=1, spatial 8^3 (NCDHW)
    x = jax.random.normal(kx, (2, IN_CHANNELS, 8, 8, 8), jnp.float32)
    time = jnp.array(0.5, jnp.float32)

    h, cond = jax.jit(my_model_forward)(params, time, x)
    jax.block_until_ready((h, cond))

    assert h.shape == (2, EMBED_DIM, 8, 8, 8)
    assert cond.shape == (2, COND_DIM)

    # correctness check vs. pure-XLA reference (bf16 output -> loose tolerance)
    h_ref, cond_ref = jax.jit(reference_forward)(params, time, x)
    np.testing.assert_allclose(np.asarray(jnp.asarray(h, jnp.float32)),
                               np.asarray(h_ref), rtol=0.05, atol=5e-3)
    np.testing.assert_allclose(np.asarray(cond), np.asarray(cond_ref),
                               rtol=0.05, atol=1e-3)
    print("KERNEL_OK")
</pallas_src>

<mosaic_0001>
module attributes {stable_mosaic.version = 11 : i64} {
  func.func @_conv_in_kernel(%arg0: i32, %arg1: i32, %arg2: memref<27x64xf32, #tpu.memory_space<vmem>>, %arg3: memref<48x27xf32, #tpu.memory_space<vmem>>, %arg4: memref<48x1xf32, #tpu.memory_space<vmem>>, %arg5: memref<1x1x10x82xf32, #tpu.memory_space<vmem>>, %arg6: memref<1x48x512xbf16, #tpu.memory_space<vmem>>) attributes {dimension_semantics = [#tpu.dimension_semantics<parallel>, #tpu.dimension_semantics<parallel>], iteration_bounds = array<i64: 2, 1>, scalar_prefetch = 0 : i64, scratch_operands = 0 : i64, tpu.core_type = #tpu.core_type<tc>, window_params = [{pipeline_mode = #tpu.pipeline_mode<synchronous>, transform_indices = @transform_0, window_bounds = array<i64: 27, 64>}, {pipeline_mode = #tpu.pipeline_mode<synchronous>, transform_indices = @transform_1, window_bounds = array<i64: 48, 27>}, {pipeline_mode = #tpu.pipeline_mode<synchronous>, transform_indices = @transform_2, window_bounds = array<i64: 48, 1>}, {transform_indices = @transform_3, window_bounds = array<i64: 1, 1, 10, 82>}, {transform_indices = @transform_4, window_bounds = array<i64: 1, 48, 512>}]} {
    %c0 = arith.constant 0 : index
    %c0_0 = arith.constant 0 : index
    %0 = vector.load %arg2[%c0, %c0_0] : memref<27x64xf32, #tpu.memory_space<vmem>>, vector<27x64xf32>
    %c0_1 = arith.constant 0 : index
    %c0_2 = arith.constant 0 : index
    %1 = vector.load %arg3[%c0_1, %c0_2] : memref<48x27xf32, #tpu.memory_space<vmem>>, vector<48x27xf32>
    %c0_3 = arith.constant 0 : index
    %c0_4 = arith.constant 0 : index
    %2 = vector.load %arg4[%c0_3, %c0_4] : memref<48x1xf32, #tpu.memory_space<vmem>>, vector<48x1xf32>
    %c0_5 = arith.constant 0 : index
    %c0_6 = arith.constant 0 : index
    %c0_7 = arith.constant 0 : index
    %c0_8 = arith.constant 0 : index
    %3 = vector.load %arg5[%c0_5, %c0_6, %c0_7, %c0_8] : memref<1x1x10x82xf32, #tpu.memory_space<vmem>>, vector<1x1x1x82xf32>
    %4 = vector.shape_cast %3 : vector<1x1x1x82xf32> to vector<1x82xf32>
    %5 = vector.extract_strided_slice %4 {offsets = [0, 0], sizes = [1, 64], strides = [1, 1]} : vector<1x82xf32> to vector<1x64xf32>
    %6 = vector.extract_strided_slice %4 {offsets = [0, 1], sizes = [1, 64], strides = [1, 1]} : vector<1x82xf32> to vector<1x64xf32>
    %7 = vector.extract_strided_slice %4 {offsets = [0, 2], sizes = [1, 64], strides = [1, 1]} : vector<1x82xf32> to vector<1x64xf32>
    %8 = vector.extract_strided_slice %4 {offsets = [0, 8], sizes = [1, 64], strides = [1, 1]} : vector<1x82xf32> to vector<1x64xf32>
    %9 = vector.extract_strided_slice %4 {offsets = [0, 9], sizes = [1, 64], strides = [1, 1]} : vector<1x82xf32> to vector<1x64xf32>
    %10 = vector.extract_strided_slice %4 {offsets = [0, 10], sizes = [1, 64], strides = [1, 1]} : vector<1x82xf32> to vector<1x64xf32>
    %11 = vector.extract_strided_slice %4 {offsets = [0, 16], sizes = [1, 64], strides = [1, 1]} : vector<1x82xf32> to vector<1x64xf32>
    %12 = vector.extract_strided_slice %4 {offsets = [0, 17], sizes = [1, 64], strides = [1, 1]} : vector<1x82xf32> to vector<1x64xf32>
    %13 = vector.extract_strided_slice %4 {offsets = [0, 18], sizes = [1, 64], strides = [1, 1]} : vector<1x82xf32> to vector<1x64xf32>
    %c0_9 = arith.constant 0 : index
    %c0_10 = arith.constant 0 : index
    %c1 = arith.constant 1 : index
    %c0_11 = arith.constant 0 : index
    %14 = vector.load %arg5[%c0_9, %c0_10, %c1, %c0_11] : memref<1x1x10x82xf32, #tpu.memory_space<vmem>>, vector<1x1x1x82xf32>
    %15 = vector.shape_cast %14 : vector<1x1x1x82xf32> to vector<1x82xf32>
    %16 = vector.extract_strided_slice %15 {offsets = [0, 0], sizes = [1, 64], strides = [1, 1]} : vector<1x82xf32> to vector<1x64xf32>
    %17 = vector.extract_strided_slice %15 {offsets = [0, 1], sizes = [1, 64], strides = [1, 1]} : vector<1x82xf32> to vector<1x64xf32>
    %18 = vector.extract_strided_slice %15 {offsets = [0, 2], sizes = [1, 64], strides = [1, 1]} : vector<1x82xf32> to vector<1x64xf32>
    %19 = vector.extract_strided_slice %15 {offsets = [0, 8], sizes = [1, 64], strides = [1, 1]} : vector<1x82xf32> to vector<1x64xf32>
    %20 = vector.extract_strided_slice %15 {offsets = [0, 9], sizes = [1, 64], strides = [1, 1]} : vector<1x82xf32> to vector<1x64xf32>
    %21 = vector.extract_strided_slice %15 {offsets = [0, 10], sizes = [1, 64], strides = [1, 1]} : vector<1x82xf32> to vector<1x64xf32>
    %22 = vector.extract_strided_slice %15 {offsets = [0, 16], sizes = [1, 64], strides = [1, 1]} : vector<1x82xf32> to vector<1x64xf32>
    %23 = vector.extract_strided_slice %15 {offsets = [0, 17], sizes = [1, 64], strides = [1, 1]} : vector<1x82xf32> to vector<1x64xf32>
    %24 = vector.extract_strided_slice %15 {offsets = [0, 18], sizes = [1, 64], strides = [1, 1]} : vector<1x82xf32> to vector<1x64xf32>
    %c0_12 = arith.constant 0 : index
    %c0_13 = arith.constant 0 : index
    %c2 = arith.constant 2 : index
    %c0_14 = arith.constant 0 : index
    %25 = vector.load %arg5[%c0_12, %c0_13, %c2, %c0_14] : memref<1x1x10x82xf32, #tpu.memory_space<vmem>>, vector<1x1x1x82xf32>
    %26 = vector.shape_cast %25 : vector<1x1x1x82xf32> to vector<1x82xf32>
    %27 = vector.extract_strided_slice %26 {offsets = [0, 0], sizes = [1, 64], strides = [1, 1]} : vector<1x82xf32> to vector<1x64xf32>
    %28 = vector.extract_strided_slice %26 {offsets = [0, 1], sizes = [1, 64], strides = [1, 1]} : vector<1x82xf32> to vector<1x64xf32>
    %29 = vector.extract_strided_slice %26 {offsets = [0, 2], sizes = [1, 64], strides = [1, 1]} : vector<1x82xf32> to vector<1x64xf32>
    %30 = vector.extract_strided_slice %26 {offsets = [0, 8], sizes = [1, 64], strides = [1, 1]} : vector<1x82xf32> to vector<1x64xf32>
    %31 = vector.extract_strided_slice %26 {offsets = [0, 9], sizes = [1, 64], strides = [1, 1]} : vector<1x82xf32> to vector<1x64xf32>
    %32 = vector.extract_strided_slice %26 {offsets = [0, 10], sizes = [1, 64], strides = [1, 1]} : vector<1x82xf32> to vector<1x64xf32>
    %33 = vector.extract_strided_slice %26 {offsets = [0, 16], sizes = [1, 64], strides = [1, 1]} : vector<1x82xf32> to vector<1x64xf32>
    %34 = vector.extract_strided_slice %26 {offsets = [0, 17], sizes = [1, 64], strides = [1, 1]} : vector<1x82xf32> to vector<1x64xf32>
    %35 = vector.extract_strided_slice %26 {offsets = [0, 18], sizes = [1, 64], strides = [1, 1]} : vector<1x82xf32> to vector<1x64xf32>
    %36 = tpu.concatenate %5, %6, %7, %8, %9, %10, %11, %12, %13, %16, %17, %18, %19, %20, %21, %22 in 0 : vector<1x64xf32>, vector<1x64xf32>, vector<1x64xf32>, vector<1x64xf32>, vector<1x64xf32>, vector<1x64xf32>, vector<1x64xf32>, vector<1x64xf32>, vector<1x64xf32>, vector<1x64xf32>, vector<1x64xf32>, vector<1x64xf32>, vector<1x64xf32>, vector<1x64xf32>, vector<1x64xf32>, vector<1x64xf32> -> vector<16x64xf32>
    %37 = tpu.concatenate %23, %24, %27, %28, %29, %30, %31, %32, %33, %34, %35 in 0 : vector<1x64xf32>, vector<1x64xf32>, vector<1x64xf32>, vector<1x64xf32>, vector<1x64xf32>, vector<1x64xf32>, vector<1x64xf32>, vector<1x64xf32>, vector<1x64xf32>, vector<1x64xf32>, vector<1x64xf32> -> vector<11x64xf32>
    %38 = tpu.concatenate %36, %37 in 0 : vector<16x64xf32>, vector<11x64xf32> -> vector<27x64xf32>
    %39 = arith.mulf %38, %0 : vector<27x64xf32>
    %cst = arith.constant dense<0.000000e+00> : vector<48x64xf32>
    %40 = tpu.matmul %1, %39, %cst {dimension_numbers = #tpu.dot_dimension_numbers<[1], [0], [0], [1], [0, 0, 1, 1], [], []>} : vector<48x27xf32>, vector<27x64xf32>, vector<48x64xf32> -> vector<48x64xf32>
    %41 = vector.broadcast %2 : vector<48x1xf32> to vector<48x64xf32>
    %42 = arith.addf %40, %41 : vector<48x64xf32>
    %43 = arith.truncf %42 : vector<48x64xf32> to vector<48x64xbf16>
    %c0_15 = arith.constant 0 : index
    %c0_16 = arith.constant 0 : index
    %c0_17 = arith.constant 0 : index
    %44 = vector.load %arg6[%c0_15, %c0_16, %c0_17] : memref<1x48x512xbf16, #tpu.memory_space<vmem>>, vector<1x48x64xbf16>
    %45 = vector.shape_cast %44 : vector<1x48x64xbf16> to vector<48x64xbf16>
    %46 = vector.shape_cast %43 : vector<48x64xbf16> to vector<1x48x64xbf16>
    tpu.vector_store %arg6[%c0_15, %c0_16, %c0_17], %46 {strides = array<i32>} : memref<1x48x512xbf16, #tpu.memory_space<vmem>>, vector<1x48x64xbf16>,
    %c0_18 = arith.constant 0 : index
    %c0_19 = arith.constant 0 : index
    %c1_20 = arith.constant 1 : index
    %c0_21 = arith.constant 0 : index
    %47 = vector.load %arg5[%c0_18, %c0_19, %c1_20, %c0_21] : memref<1x1x10x82xf32, #tpu.memory_space<vmem>>, vector<1x1x1x82xf32>
    %48 = vector.shape_cast %47 : vector<1x1x1x82xf32> to vector<1x82xf32>
    %49 = vector.extract_strided_slice %48 {offsets = [0, 0], sizes = [1, 64], strides = [1, 1]} : vector<1x82xf32> to vector<1x64xf32>
    %50 = vector.extract_strided_slice %48 {offsets = [0, 1], sizes = [1, 64], strides = [1, 1]} : vector<1x82xf32> to vector<1x64xf32>
    %51 = vector.extract_strided_slice %48 {offsets = [0, 2], sizes = [1, 64], strides = [1, 1]} : vector<1x82xf32> to vector<1x64xf32>
    %52 = vector.extract_strided_slice %48 {offsets = [0, 8], sizes = [1, 64], strides = [1, 1]} : vector<1x82xf32> to vector<1x64xf32>
    %53 = vector.extract_strided_slice %48 {offsets = [0, 9], sizes = [1, 64], strides = [1, 1]} : vector<1x82xf32> to vector<1x64xf32>
    %54 = vector.extract_strided_slice %48 {offsets = [0, 10], sizes = [1, 64], strides = [1, 1]} : vector<1x82xf32> to vector<1x64xf32>
    %55 = vector.extract_strided_slice %48 {offsets = [0, 16], sizes = [1, 64], strides = [1, 1]} : vector<1x82xf32> to vector<1x64xf32>
    %56 = vector.extract_strided_slice %48 {offsets = [0, 17], sizes = [1, 64], strides = [1, 1]} : vector<1x82xf32> to vector<1x64xf32>
    %57 = vector.extract_strided_slice %48 {offsets = [0, 18], sizes = [1, 64], strides = [1, 1]} : vector<1x82xf32> to vector<1x64xf32>
    %c0_22 = arith.constant 0 : index
    %c0_23 = arith.constant 0 : index
    %c2_24 = arith.constant 2 : index
    %c0_25 = arith.constant 0 : index
    %58 = vector.load %arg5[%c0_22, %c0_23, %c2_24, %c0_25] : memref<1x1x10x82xf32, #tpu.memory_space<vmem>>, vector<1x1x1x82xf32>
    %59 = vector.shape_cast %58 : vector<1x1x1x82xf32> to vector<1x82xf32>
    %60 = vector.extract_strided_slice %59 {offsets = [0, 0], sizes = [1, 64], strides = [1, 1]} : vector<1x82xf32> to vector<1x64xf32>
    %61 = vector.extract_strided_slice %59 {offsets = [0, 1], sizes = [1, 64], strides = [1, 1]} : vector<1x82xf32> to vector<1x64xf32>
    %62 = vector.extract_strided_slice %59 {offsets = [0, 2], sizes = [1, 64], strides = [1, 1]} : vector<1x82xf32> to vector<1x64xf32>
    %63 = vector.extract_strided_slice %59 {offsets = [0, 8], sizes = [1, 64], strides = [1, 1]} : vector<1x82xf32> to vector<1x64xf32>
    %64 = vector.extract_strided_slice %59 {offsets = [0, 9], sizes = [1, 64], strides = [1, 1]} : vector<1x82xf32> to vector<1x64xf32>
    %65 = vector.extract_strided_slice %59 {offsets = [0, 10], sizes = [1, 64], strides = [1, 1]} : vector<1x82xf32> to vector<1x64xf32>
    %66 = vector.extract_strided_slice %59 {offsets = [0, 16], sizes = [1, 64], strides = [1, 1]} : vector<1x82xf32> to vector<1x64xf32>
    %67 = vector.extract_strided_slice %59 {offsets = [0, 17], sizes = [1, 64], strides = [1, 1]} : vector<1x82xf32> to vector<1x64xf32>
    %68 = vector.extract_strided_slice %59 {offsets = [0, 18], sizes = [1, 64], strides = [1, 1]} : vector<1x82xf32> to vector<1x64xf32>
    %c0_26 = arith.constant 0 : index
    %c0_27 = arith.constant 0 : index
    %c3 = arith.constant 3 : index
    %c0_28 = arith.constant 0 : index
    %69 = vector.load %arg5[%c0_26, %c0_27, %c3, %c0_28] : memref<1x1x10x82xf32, #tpu.memory_space<vmem>>, vector<1x1x1x82xf32>
    %70 = vector.shape_cast %69 : vector<1x1x1x82xf32> to vector<1x82xf32>
    %71 = vector.extract_strided_slice %70 {offsets = [0, 0], sizes = [1, 64], strides = [1, 1]} : vector<1x82xf32> to vector<1x64xf32>
    %72 = vector.extract_strided_slice %70 {offsets = [0, 1], sizes = [1, 64], strides = [1, 1]} : vector<1x82xf32> to vector<1x64xf32>
    %73 = vector.extract_strided_slice %70 {offsets = [0, 2], sizes = [1, 64], strides = [1, 1]} : vector<1x82xf32> to vector<1x64xf32>
    %74 = vector.extract_strided_slice %70 {offsets = [0, 8], sizes = [1, 64], strides = [1, 1]} : vector<1x82xf32> to vector<1x64xf32>
    %75 = vector.extract_strided_slice %70 {offsets = [0, 9], sizes = [1, 64], strides = [1, 1]} : vector<1x82xf32> to vector<1x64xf32>
    %76 = vector.extract_strided_slice %70 {offsets = [0, 10], sizes = [1, 64], strides = [1, 1]} : vector<1x82xf32> to vector<1x64xf32>
    %77 = vector.extract_strided_slice %70 {offsets = [0, 16], sizes = [1, 64], strides = [1, 1]} : vector<1x82xf32> to vector<1x64xf32>
    %78 = vector.extract_strided_slice %70 {offsets = [0, 17], sizes = [1, 64], strides = [1, 1]} : vector<1x82xf32> to vector<1x64xf32>
    %79 = vector.extract_strided_slice %70 {offsets = [0, 18], sizes = [1, 64], strides = [1, 1]} : vector<1x82xf32> to vector<1x64xf32>
    %80 = tpu.concatenate %49, %50, %51, %52, %53, %54, %55, %56, %57, %60, %61, %62, %63, %64, %65, %66 in 0 : vector<1x64xf32>, vector<1x64xf32>, vector<1x64xf32>, vector<1x64xf32>, vector<1x64xf32>, vector<1x64xf32>, vector<1x64xf32>, vector<1x64xf32>, vector<1x64xf32>, vector<1x64xf32>, vector<1x64xf32>, vector<1x64xf32>, vector<1x64xf32>, vector<1x64xf32>, vector<1x64xf32>, vector<1x64xf32> -> vector<16x64xf32>
    %81 = tpu.concatenate %67, %68, %71, %72, %73, %74, %75, %76, %77, %78, %79 in 0 : vector<1x64xf32>, vector<1x64xf32>, vector<1x64xf32>, vector<1x64xf32>, vector<1x64xf32>, vector<1x64xf32>, vector<1x64xf32>, vector<1x64xf32>, vector<1x64xf32>, vector<1x64xf32>, vector<1x64xf32> -> vector<11x64xf32>
    %82 = tpu.concatenate %80, %81 in 0 : vector<16x64xf32>, vector<11x64xf32> -> vector<27x64xf32>
    %83 = arith.mulf %82, %0 : vector<27x64xf32>
    %cst_29 = arith.constant dense<0.000000e+00> : vector<48x64xf32>
    %84 = tpu.matmul %1, %83, %cst_29 {dimension_numbers = #tpu.dot_dimension_numbers<[1], [0], [0], [1], [0, 0, 1, 1], [], []>} : vector<48x27xf32>, vector<27x64xf32>, vector<48x64xf32> -> vector<48x64xf32>
    %85 = vector.broadcast %2 : vector<48x1xf32> to vector<48x64xf32>
    %86 = arith.addf %84, %85 : vector<48x64xf32>
    %87 = arith.truncf %86 : vector<48x64xf32> to vector<48x64xbf16>
    %c0_30 = arith.constant 0 : index
    %c0_31 = arith.constant 0 : index
    %c64 = arith.constant 64 : index
    %88 = vector.load %arg6[%c0_30, %c0_31, %c64] : memref<1x48x512xbf16, #tpu.memory_space<vmem>>, vector<1x48x64xbf16>
    %89 = vector.shape_cast %88 : vector<1x48x64xbf16> to vector<48x64xbf16>
    %90 = vector.shape_cast %87 : vector<48x64xbf16> to vector<1x48x64xbf16>
    tpu.vector_store %arg6[%c0_30, %c0_31, %c64], %90 {strides = array<i32>} : memref<1x48x512xbf16, #tpu.memory_space<vmem>>, vector<1x48x64xbf16>,
    %c0_32 = arith.constant 0 : index
    %c0_33 = arith.constant 0 : index
    %c2_34 = arith.constant 2 : index
    %c0_35 = arith.constant 0 : index
    %91 = vector.load %arg5[%c0_32, %c0_33, %c2_34, %c0_35] : memref<1x1x10x82xf32, #tpu.memory_space<vmem>>, vector<1x1x1x82xf32>
    %92 = vector.shape_cast %91 : vector<1x1x1x82xf32> to vector<1x82xf32>
    %93 = vector.extract_strided_slice %92 {offsets = [0, 0], sizes = [1, 64], strides = [1, 1]} : vector<1x82xf32> to vector<1x64xf32>
    %94 = vector.extract_strided_slice %92 {offsets = [0, 1], sizes = [1, 64], strides = [1, 1]} : vector<1x82xf32> to vector<1x64xf32>
    %95 = vector.extract_strided_slice %92 {offsets = [0, 2], sizes = [1, 64], strides = [1, 1]} : vector<1x82xf32> to vector<1x64xf32>
    %96 = vector.extract_strided_slice %92 {offsets = [0, 8], sizes = [1, 64], strides = [1, 1]} : vector<1x82xf32> to vector<1x64xf32>
    %97 = vector.extract_strided_slice %92 {offsets = [0, 9], sizes = [1, 64], strides = [1, 1]} : vector<1x82xf32> to vector<1x64xf32>
    %98 = vector.extract_strided_slice %92 {offsets = [0, 10], sizes = [1, 64], strides = [1, 1]} : vector<1x82xf32> to vector<1x64xf32>
    %99 = vector.extract_strided_slice %92 {offsets = [0, 16], sizes = [1, 64], strides = [1, 1]} : vector<1x82xf32> to vector<1x64xf32>
    %100 = vector.extract_strided_slice %92 {offsets = [0, 17], sizes = [1, 64], strides = [1, 1]} : vector<1x82xf32> to vector<1x64xf32>
    %101 = vector.extract_strided_slice %92 {offsets = [0, 18], sizes = [1, 64], strides = [1, 1]} : vector<1x82xf32> to vector<1x64xf32>
    %c0_36 = arith.constant 0 : index
    %c0_37 = arith.constant 0 : index
    %c3_38 = arith.constant 3 : index
    %c0_39 = arith.constant 0 : index
    %102 = vector.load %arg5[%c0_36, %c0_37, %c3_38, %c0_39] : memref<1x1x10x82xf32, #tpu.memory_space<vmem>>, vector<1x1x1x82xf32>
    %103 = vector.shape_cast %102 : vector<1x1x1x82xf32> to vector<1x82xf32>
    %104 = vector.extract_strided_slice %103 {offsets = [0, 0], sizes = [1, 64], strides = [1, 1]} : vector<1x82xf32> to vector<1x64xf32>
    %105 = vector.extract_strided_slice %103 {offsets = [0, 1], sizes = [1, 64], strides = [1, 1]} : vector<1x82xf32> to vector<1x64xf32>
    %106 = vector.extract_strided_slice %103 {offsets = [0, 2], sizes = [1, 64], strides = [1, 1]} : vector<1x82xf32> to vector<1x64xf32>
    %107 = vector.extract_strided_slice %103 {offsets = [0, 8], sizes = [1, 64], strides = [1, 1]} : vector<1x82xf32> to vector<1x64xf32>
    %108 = vector.extract_strided_slice %103 {offsets = [0, 9], sizes = [1, 64], strides = [1, 1]} : vector<1x82xf32> to vector<1x64xf32>
    %109 = vector.extract_strided_slice %103 {offsets = [0, 10], sizes = [1, 64], strides = [1, 1]} : vector<1x82xf32> to vector<1x64xf32>
    %110 = vector.extract_strided_slice %103 {offsets = [0, 16], sizes = [1, 64], strides = [1, 1]} : vector<1x82xf32> to vector<1x64xf32>
    %111 = vector.extract_strided_slice %103 {offsets = [0, 17], sizes = [1, 64], strides = [1, 1]} : vector<1x82xf32> to vector<1x64xf32>
    %112 = vector.extract_strided_slice %103 {offsets = [0, 18], sizes = [1, 64], strides = [1, 1]} : vector<1x82xf32> to vector<1x64xf32>
    %c0_40 = arith.constant 0 : index
    %c0_41 = arith.constant 0 : index
    %c4 = arith.constant 4 : index
    %c0_42 = arith.constant 0 : index
    %113 = vector.load %arg5[%c0_40, %c0_41, %c4, %c0_42] : memref<1x1x10x82xf32, #tpu.memory_space<vmem>>, vector<1x1x1x82xf32>
    %114 = vector.shape_cast %113 : vector<1x1x1x82xf32> to vector<1x82xf32>
    %115 = vector.extract_strided_slice %114 {offsets = [0, 0], sizes = [1, 64], strides = [1, 1]} : vector<1x82xf32> to vector<1x64xf32>
    %116 = vector.extract_strided_slice %114 {offsets = [0, 1], sizes = [1, 64], strides = [1, 1]} : vector<1x82xf32> to vector<1x64xf32>
    %117 = vector.extract_strided_slice %114 {offsets = [0, 2], sizes = [1, 64], strides = [1, 1]} : vector<1x82xf32> to vector<1x64xf32>
    %118 = vector.extract_strided_slice %114 {offsets = [0, 8], sizes = [1, 64], strides = [1, 1]} : vector<1x82xf32> to vector<1x64xf32>
    %119 = vector.extract_strided_slice %114 {offsets = [0, 9], sizes = [1, 64], strides = [1, 1]} : vector<1x82xf32> to vector<1x64xf32>
    %120 = vector.extract_strided_slice %114 {offsets = [0, 10], sizes = [1, 64], strides = [1, 1]} : vector<1x82xf32> to vector<1x64xf32>
    %121 = vector.extract_strided_slice %114 {offsets = [0, 16], sizes = [1, 64], strides = [1, 1]} : vector<1x82xf32> to vector<1x64xf32>
    %122 = vector.extract_strided_slice %114 {offsets = [0, 17], sizes = [1, 64], strides = [1, 1]} : vector<1x82xf32> to vector<1x64xf32>
    %123 = vector.extract_strided_slice %114 {offsets = [0, 18], sizes = [1, 64], strides = [1, 1]} : vector<1x82xf32> to vector<1x64xf32>
    %124 = tpu.concatenate %93, %94, %95, %96, %97, %98, %99, %100, %101, %104, %105, %106, %107, %108, %109, %110 in 0 : vector<1x64xf32>, vector<1x64xf32>, vector<1x64xf32>, vector<1x64xf32>, vector<1x64xf32>, vector<1x64xf32>, vector<1x64xf32>, vector<1x64xf32>, vector<1x64xf32>, vector<1x64xf32>, vector<1x64xf32>, vector<1x64xf32>, vector<1x64xf32>, vector<1x64xf32>, vector<1x64xf32>, vector<1x64xf32> -> vector<16x64xf32>
    %125 = tpu.concatenate %111, %112, %115, %116, %117, %118, %119, %120, %121, %122, %123 in 0 : vector<1x64xf32>, vector<1x64xf32>, vector<1x64xf32>, vector<1x64xf32>, vector<1x64xf32>, vector<1x64xf32>, vector<1x64xf32>, vector<1x64xf32>, vector<1x64xf32>, vector<1x64xf32>, vector<1x64xf32> -> vector<11x64xf32>
    %126 = tpu.concatenate %124, %125 in 0 : vector<16x64xf32>, vector<11x64xf32> -> vector<27x64xf32>
    %127 = arith.mulf %126, %0 : vector<27x64xf32>
    %cst_43 = arith.constant dense<0.000000e+00> : vector<48x64xf32>
    %128 = tpu.matmul %1, %127, %cst_43 {dimension_numbers = #tpu.dot_dimension_numbers<[1], [0], [0], [1], [0, 0, 1, 1], [], []>} : vector<48x27xf32>, vector<27x64xf32>, vector<48x64xf32> -> vector<48x64xf32>
    %129 = vector.broadcast %2 : vector<48x1xf32> to vector<48x64xf32>
    %130 = arith.addf %128, %129 : vector<48x64xf32>
    %131 = arith.truncf %130 : vector<48x64xf32> to vector<48x64xbf16>
    %c0_44 = arith.constant 0 : index
    %c0_45 = arith.constant 0 : index
    %c128 = arith.constant 128 : index
    %132 = vector.load %arg6[%c0_44, %c0_45, %c128] : memref<1x48x512xbf16, #tpu.memory_space<vmem>>, vector<1x48x64xbf16>
    %133 = vector.shape_cast %132 : vector<1x48x64xbf16> to vector<48x64xbf16>
    %134 = vector.shape_cast %131 : vector<48x64xbf16> to vector<1x48x64xbf16>
    tpu.vector_store %arg6[%c0_44, %c0_45, %c128], %134 {strides = array<i32>} : memref<1x48x512xbf16, #tpu.memory_space<vmem>>, vector<1x48x64xbf16>,
    %c0_46 = arith.constant 0 : index
    %c0_47 = arith.constant 0 : index
    %c3_48 = arith.constant 3 : index
    %c0_49 = arith.constant 0 : index
    %135 = vector.load %arg5[%c0_46, %c0_47, %c3_48, %c0_49] : memref<1x1x10x82xf32, #tpu.memory_space<vmem>>, vector<1x1x1x82xf32>
    %136 = vector.shape_cast %135 : vector<1x1x1x82xf32> to vector<1x82xf32>
    %137 = vector.extract_strided_slice %136 {offsets = [0, 0], sizes = [1, 64], strides = [1, 1]} : vector<1x82xf32> to vector<1x64xf32>
    %138 = vector.extract_strided_slice %136 {offsets = [0, 1], sizes = [1, 64], strides = [1, 1]} : vector<1x82xf32> to vector<1x64xf32>
    %139 = vector.extract_strided_slice %136 {offsets = [0, 2], sizes = [1, 64], strides = [1, 1]} : vector<1x82xf32> to vector<1x64xf32>
    %140 = vector.extract_strided_slice %136 {offsets = [0, 8], sizes = [1, 64], strides = [1, 1]} : vector<1x82xf32> to vector<1x64xf32>
    %141 = vector.extract_strided_slice %136 {offsets = [0, 9], sizes = [1, 64], strides = [1, 1]} : vector<1x82xf32> to vector<1x64xf32>
    %142 = vector.extract_strided_slice %136 {offsets = [0, 10], sizes = [1, 64], strides = [1, 1]} : vector<1x82xf32> to vector<1x64xf32>
    %143 = vector.extract_strided_slice %136 {offsets = [0, 16], sizes = [1, 64], strides = [1, 1]} : vector<1x82xf32> to vector<1x64xf32>
    %144 = vector.extract_strided_slice %136 {offsets = [0, 17], sizes = [1, 64], strides = [1, 1]} : vector<1x82xf32> to vector<1x64xf32>
    %145 = vector.extract_strided_slice %136 {offsets = [0, 18], sizes = [1, 64], strides = [1, 1]} : vector<1x82xf32> to vector<1x64xf32>
    %c0_50 = arith.constant 0 : index
    %c0_51 = arith.constant 0 : index
    %c4_52 = arith.constant 4 : index
    %c0_53 = arith.constant 0 : index
    %146 = vector.load %arg5[%c0_50, %c0_51, %c4_52, %c0_53] : memref<1x1x10x82xf32, #tpu.memory_space<vmem>>, vector<1x1x1x82xf32>
    %147 = vector.shape_cast %146 : vector<1x1x1x82xf32> to vector<1x82xf32>
    %148 = vector.extract_strided_slice %147 {offsets = [0, 0], sizes = [1, 64], strides = [1, 1]} : vector<1x82xf32> to vector<1x64xf32>
    %149 = vector.extract_strided_slice %147 {offsets = [0, 1], sizes = [1, 64], strides = [1, 1]} : vector<1x82xf32> to vector<1x64xf32>
    %150 = vector.extract_strided_slice %147 {offsets = [0, 2], sizes = [1, 64], strides = [1, 1]} : vector<1x82xf32> to vector<1x64xf32>
    %151 = vector.extract_strided_slice %147 {offsets = [0, 8], sizes = [1, 64], strides = [1, 1]} : vector<1x82xf32> to vector<1x64xf32>
    %152 = vector.extract_strided_slice %147 {offsets = [0, 9], sizes = [1, 64], strides = [1, 1]} : vector<1x82xf32> to vector<1x64xf32>
    %153 = vector.extract_strided_slice %147 {offsets = [0, 10], sizes = [1, 64], strides = [1, 1]} : vector<1x82xf32> to vector<1x64xf32>
    %154 = vector.extract_strided_slice %147 {offsets = [0, 16], sizes = [1, 64], strides = [1, 1]} : vector<1x82xf32> to vector<1x64xf32>
    %155 = vector.extract_strided_slice %147 {offsets = [0, 17], sizes = [1, 64], strides = [1, 1]} : vector<1x82xf32> to vector<1x64xf32>
    %156 = vector.extract_strided_slice %147 {offsets = [0, 18], sizes = [1, 64], strides = [1, 1]} : vector<1x82xf32> to vector<1x64xf32>
    %c0_54 = arith.constant 0 : index
    %c0_55 = arith.constant 0 : index
    %c5 = arith.constant 5 : index
    %c0_56 = arith.constant 0 : index
    %157 = vector.load %arg5[%c0_54, %c0_55, %c5, %c0_56] : memref<1x1x10x82xf32, #tpu.memory_space<vmem>>, vector<1x1x1x82xf32>
    %158 = vector.shape_cast %157 : vector<1x1x1x82xf32> to vector<1x82xf32>
    %159 = vector.extract_strided_slice %158 {offsets = [0, 0], sizes = [1, 64], strides = [1, 1]} : vector<1x82xf32> to vector<1x64xf32>
    %160 = vector.extract_strided_slice %158 {offsets = [0, 1], sizes = [1, 64], strides = [1, 1]} : vector<1x82xf32> to vector<1x64xf32>
    %161 = vector.extract_strided_slice %158 {offsets = [0, 2], sizes = [1, 64], strides = [1, 1]} : vector<1x82xf32> to vector<1x64xf32>
    %162 = vector.extract_strided_slice %158 {offsets = [0, 8], sizes = [1, 64], strides = [1, 1]} : vector<1x82xf32> to vector<1x64xf32>
    %163 = vector.extract_strided_slice %158 {offsets = [0, 9], sizes = [1, 64], strides = [1, 1]} : vector<1x82xf32> to vector<1x64xf32>
    %164 = vector.extract_strided_slice %158 {offsets = [0, 10], sizes = [1, 64], strides = [1, 1]} : vector<1x82xf32> to vector<1x64xf32>
    %165 = vector.extract_strided_slice %158 {offsets = [0, 16], sizes = [1, 64], strides = [1, 1]} : vector<1x82xf32> to vector<1x64xf32>
    %166 = vector.extract_strided_slice %158 {offsets = [0, 17], sizes = [1, 64], strides = [1, 1]} : vector<1x82xf32> to vector<1x64xf32>
    %167 = vector.extract_strided_slice %158 {offsets = [0, 18], sizes = [1, 64], strides = [1, 1]} : vector<1x82xf32> to vector<1x64xf32>
    %168 = tpu.concatenate %137, %138, %139, %140, %141, %142, %143, %144, %145, %148, %149, %150, %151, %152, %153, %154 in 0 : vector<1x64xf32>, vector<1x64xf32>, vector<1x64xf32>, vector<1x64xf32>, vector<1x64xf32>, vector<1x64xf32>, vector<1x64xf32>, vector<1x64xf32>, vector<1x64xf32>, vector<1x64xf32>, vector<1x64xf32>, vector<1x64xf32>, vector<1x64xf32>, vector<1x64xf32>, vector<1x64xf32>, vector<1x64xf32> -> vector<16x64xf32>
    %169 = tpu.concatenate %155, %156, %159, %160, %161, %162, %163, %164, %165, %166, %167 in 0 : vector<1x64xf32>, vector<1x64xf32>, vector<1x64xf32>, vector<1x64xf32>, vector<1x64xf32>, vector<1x64xf32>, vector<1x64xf32>, vector<1x64xf32>, vector<1x64xf32>, vector<1x64xf32>, vector<1x64xf32> -> vector<11x64xf32>
    %170 = tpu.concatenate %168, %169 in 0 : vector<16x64xf32>, vector<11x64xf32> -> vector<27x64xf32>
    %171 = arith.mulf %170, %0 : vector<27x64xf32>
    %cst_57 = arith.constant dense<0.000000e+00> : vector<48x64xf32>
    %172 = tpu.matmul %1, %171, %cst_57 {dimension_numbers = #tpu.dot_dimension_numbers<[1], [0], [0], [1], [0, 0, 1, 1], [], []>} : vector<48x27xf32>, vector<27x64xf32>, vector<48x64xf32> -> vector<48x64xf32>
    %173 = vector.broadcast %2 : vector<48x1xf32> to vector<48x64xf32>
    %174 = arith.addf %172, %173 : vector<48x64xf32>
    %175 = arith.truncf %174 : vector<48x64xf32> to vector<48x64xbf16>
    %c0_58 = arith.constant 0 : index
    %c0_59 = arith.constant 0 : index
    %c192 = arith.constant 192 : index
    %176 = vector.load %arg6[%c0_58, %c0_59, %c192] : memref<1x48x512xbf16, #tpu.memory_space<vmem>>, vector<1x48x64xbf16>
    %177 = vector.shape_cast %176 : vector<1x48x64xbf16> to vector<48x64xbf16>
    %178 = vector.shape_cast %175 : vector<48x64xbf16> to vector<1x48x64xbf16>
    tpu.vector_store %arg6[%c0_58, %c0_59, %c192], %178 {strides = array<i32>} : memref<1x48x512xbf16, #tpu.memory_space<vmem>>, vector<1x48x64xbf16>,
    %c0_60 = arith.constant 0 : index
    %c0_61 = arith.constant 0 : index
    %c4_62 = arith.constant 4 : index
    %c0_63 = arith.constant 0 : index
    %179 = vector.load %arg5[%c0_60, %c0_61, %c4_62, %c0_63] : memref<1x1x10x82xf32, #tpu.memory_space<vmem>>, vector<1x1x1x82xf32>
    %180 = vector.shape_cast %179 : vector<1x1x1x82xf32> to vector<1x82xf32>
    %181 = vector.extract_strided_slice %180 {offsets = [0, 0], sizes = [1, 64], strides = [1, 1]} : vector<1x82xf32> to vector<1x64xf32>
    %182 = vector.extract_strided_slice %180 {offsets = [0, 1], sizes = [1, 64], strides = [1, 1]} : vector<1x82xf32> to vector<1x64xf32>
    %183 = vector.extract_strided_slice %180 {offsets = [0, 2], sizes = [1, 64], strides = [1, 1]} : vector<1x82xf32> to vector<1x64xf32>
    %184 = vector.extract_strided_slice %180 {offsets = [0, 8], sizes = [1, 64], strides = [1, 1]} : vector<1x82xf32> to vector<1x64xf32>
    %185 = vector.extract_strided_slice %180 {offsets = [0, 9], sizes = [1, 64], strides = [1, 1]} : vector<1x82xf32> to vector<1x64xf32>
    %186 = vector.extract_strided_slice %180 {offsets = [0, 10], sizes = [1, 64], strides = [1, 1]} : vector<1x82xf32> to vector<1x64xf32>
    %187 = vector.extract_strided_slice %180 {offsets = [0, 16], sizes = [1, 64], strides = [1, 1]} : vector<1x82xf32> to vector<1x64xf32>
    %188 = vector.extract_strided_slice %180 {offsets = [0, 17], sizes = [1, 64], strides = [1, 1]} : vector<1x82xf32> to vector<1x64xf32>
    %189 = vector.extract_strided_slice %180 {offsets = [0, 18], sizes = [1, 64], strides = [1, 1]} : vector<1x82xf32> to vector<1x64xf32>
    %c0_64 = arith.constant 0 : index
    %c0_65 = arith.constant 0 : index
    %c5_66 = arith.constant 5 : index
    %c0_67 = arith.constant 0 : index
    %190 = vector.load %arg5[%c0_64, %c0_65, %c5_66, %c0_67] : memref<1x1x10x82xf32, #tpu.memory_space<vmem>>, vector<1x1x1x82xf32>
    %191 = vector.shape_cast %190 : vector<1x1x1x82xf32> to vector<1x82xf32>
    %192 = vector.extract_strided_slice %191 {offsets = [0, 0], sizes = [1, 64], strides = [1, 1]} : vector<1x82xf32> to vector<1x64xf32>
    %193 = vector.extract_strided_slice %191 {offsets = [0, 1], sizes = [1, 64], strides = [1, 1]} : vector<1x82xf32> to vector<1x64xf32>
    %194 = vector.extract_strided_slice %191 {offsets = [0, 2], sizes = [1, 64], strides = [1, 1]} : vector<1x82xf32> to vector<1x64xf32>
    %195 = vector.extract_strided_slice %191 {offsets = [0, 8], sizes = [1, 64], strides = [1, 1]} : vector<1x82xf32> to vector<1x64xf32>
    %196 = vector.extract_strided_slice %191 {offsets = [0, 9], sizes = [1, 64], strides = [1, 1]} : vector<1x82xf32> to vector<1x64xf32>
    %197 = vector.extract_strided_slice %191 {offsets = [0, 10], sizes = [1, 64], strides = [1, 1]} : vector<1x82xf32> to vector<1x64xf32>
    %198 = vector.extract_strided_slice %191 {offsets = [0, 16], sizes = [1, 64], strides = [1, 1]} : vector<1x82xf32> to vector<1x64xf32>
    %199 = vector.extract_strided_slice %191 {offsets = [0, 17], sizes = [1, 64], strides = [1, 1]} : vector<1x82xf32> to vector<1x64xf32>
    %200 = vector.extract_strided_slice %191 {offsets = [0, 18], sizes = [1, 64], strides = [1, 1]} : vector<1x82xf32> to vector<1x64xf32>
    %c0_68 = arith.constant 0 : index
    %c0_69 = arith.constant 0 : index
    %c6 = arith.constant 6 : index
    %c0_70 = arith.constant 0 : index
    %201 = vector.load %arg5[%c0_68, %c0_69, %c6, %c0_70] : memref<1x1x10x82xf32, #tpu.memory_space<vmem>>, vector<1x1x1x82xf32>
    %202 = vector.shape_cast %201 : vector<1x1x1x82xf32> to vector<1x82xf32>
    %203 = vector.extract_strided_slice %202 {offsets = [0, 0], sizes = [1, 64], strides = [1, 1]} : vector<1x82xf32> to vector<1x64xf32>
    %204 = vector.extract_strided_slice %202 {offsets = [0, 1], sizes = [1, 64], strides = [1, 1]} : vector<1x82xf32> to vector<1x64xf32>
    %205 = vector.extract_strided_slice %202 {offsets = [0, 2], sizes = [1, 64], strides = [1, 1]} : vector<1x82xf32> to vector<1x64xf32>
    %206 = vector.extract_strided_slice %202 {offsets = [0, 8], sizes = [1, 64], strides = [1, 1]} : vector<1x82xf32> to vector<1x64xf32>
    %207 = vector.extract_strided_slice %202 {offsets = [0, 9], sizes = [1, 64], strides = [1, 1]} : vector<1x82xf32> to vector<1x64xf32>
    %208 = vector.extract_strided_slice %202 {offsets = [0, 10], sizes = [1, 64], strides = [1, 1]} : vector<1x82xf32> to vector<1x64xf32>
    %209 = vector.extract_strided_slice %202 {offsets = [0, 16], sizes = [1, 64], strides = [1, 1]} : vector<1x82xf32> to vector<1x64xf32>
    %210 = vector.extract_strided_slice %202 {offsets = [0, 17], sizes = [1, 64], strides = [1, 1]} : vector<1x82xf32> to vector<1x64xf32>
    %211 = vector.extract_strided_slice %202 {offsets = [0, 18], sizes = [1, 64], strides = [1, 1]} : vector<1x82xf32> to vector<1x64xf32>
    %212 = tpu.concatenate %181, %182, %183, %184, %185, %186, %187, %188, %189, %192, %193, %194, %195, %196, %197, %198 in 0 : vector<1x64xf32>, vector<1x64xf32>, vector<1x64xf32>, vector<1x64xf32>, vector<1x64xf32>, vector<1x64xf32>, vector<1x64xf32>, vector<1x64xf32>, vector<1x64xf32>, vector<1x64xf32>, vector<1x64xf32>, vector<1x64xf32>, vector<1x64xf32>, vector<1x64xf32>, vector<1x64xf32>, vector<1x64xf32> -> vector<16x64xf32>
    %213 = tpu.concatenate %199, %200, %203, %204, %205, %206, %207, %208, %209, %210, %211 in 0 : vector<1x64xf32>, vector<1x64xf32>, vector<1x64xf32>, vector<1x64xf32>, vector<1x64xf32>, vector<1x64xf32>, vector<1x64xf32>, vector<1x64xf32>, vector<1x64xf32>, vector<1x64xf32>, vector<1x64xf32> -> vector<11x64xf32>
    %214 = tpu.concatenate %212, %213 in 0 : vector<16x64xf32>, vector<11x64xf32> -> vector<27x64xf32>
    %215 = arith.mulf %214, %0 : vector<27x64xf32>
    %cst_71 = arith.constant dense<0.000000e+00> : vector<48x64xf32>
    %216 = tpu.matmul %1, %215, %cst_71 {dimension_numbers = #tpu.dot_dimension_numbers<[1], [0], [0], [1], [0, 0, 1, 1], [], []>} : vector<48x27xf32>, vector<27x64xf32>, vector<48x64xf32> -> vector<48x64xf32>
    %217 = vector.broadcast %2 : vector<48x1xf32> to vector<48x64xf32>
    %218 = arith.addf %216, %217 : vector<48x64xf32>
    %219 = arith.truncf %218 : vector<48x64xf32> to vector<48x64xbf16>
    %c0_72 = arith.constant 0 : index
    %c0_73 = arith.constant 0 : index
    %c256 = arith.constant 256 : index
    %220 = vector.load %arg6[%c0_72, %c0_73, %c256] : memref<1x48x512xbf16, #tpu.memory_space<vmem>>, vector<1x48x64xbf16>
    %221 = vector.shape_cast %220 : vector<1x48x64xbf16> to vector<48x64xbf16>
    %222 = vector.shape_cast %219 : vector<48x64xbf16> to vector<1x48x64xbf16>
    tpu.vector_store %arg6[%c0_72, %c0_73, %c256], %222 {strides = array<i32>} : memref<1x48x512xbf16, #tpu.memory_space<vmem>>, vector<1x48x64xbf16>,
    %c0_74 = arith.constant 0 : index
    %c0_75 = arith.constant 0 : index
    %c5_76 = arith.constant 5 : index
    %c0_77 = arith.constant 0 : index
    %223 = vector.load %arg5[%c0_74, %c0_75, %c5_76, %c0_77] : memref<1x1x10x82xf32, #tpu.memory_space<vmem>>, vector<1x1x1x82xf32>
    %224 = vector.shape_cast %223 : vector<1x1x1x82xf32> to vector<1x82xf32>
    %225 = vector.extract_strided_slice %224 {offsets = [0, 0], sizes = [1, 64], strides = [1, 1]} : vector<1x82xf32> to vector<1x64xf32>
    %226 = vector.extract_strided_slice %224 {offsets = [0, 1], sizes = [1, 64], strides = [1, 1]} : vector<1x82xf32> to vector<1x64xf32>
    %227 = vector.extract_strided_slice %224 {offsets = [0, 2], sizes = [1, 64], strides = [1, 1]} : vector<1x82xf32> to vector<1x64xf32>
    %228 = vector.extract_strided_slice %224 {offsets = [0, 8], sizes = [1, 64], strides = [1, 1]} : vector<1x82xf32> to vector<1x64xf32>
    %229 = vector.extract_strided_slice %224 {offsets = [0, 9], sizes = [1, 64], strides = [1, 1]} : vector<1x82xf32> to vector<1x64xf32>
    %230 = vector.extract_strided_slice %224 {offsets = [0, 10], sizes = [1, 64], strides = [1, 1]} : vector<1x82xf32> to vector<1x64xf32>
    %231 = vector.extract_strided_slice %224 {offsets = [0, 16], sizes = [1, 64], strides = [1, 1]} : vector<1x82xf32> to vector<1x64xf32>
    %232 = vector.extract_strided_slice %224 {offsets = [0, 17], sizes = [1, 64], strides = [1, 1]} : vector<1x82xf32> to vector<1x64xf32>
    %233 = vector.extract_strided_slice %224 {offsets = [0, 18], sizes = [1, 64], strides = [1, 1]} : vector<1x82xf32> to vector<1x64xf32>
    %c0_78 = arith.constant 0 : index
    %c0_79 = arith.constant 0 : index
    %c6_80 = arith.constant 6 : index
    %c0_81 = arith.constant 0 : index
    %234 = vector.load %arg5[%c0_78, %c0_79, %c6_80, %c0_81] : memref<1x1x10x82xf32, #tpu.memory_space<vmem>>, vector<1x1x1x82xf32>
    %235 = vector.shape_cast %234 : vector<1x1x1x82xf32> to vector<1x82xf32>
    %236 = vector.extract_strided_slice %235 {offsets = [0, 0], sizes = [1, 64], strides = [1, 1]} : vector<1x82xf32> to vector<1x64xf32>
    %237 = vector.extract_strided_slice %235 {offsets = [0, 1], sizes = [1, 64], strides = [1, 1]} : vector<1x82xf32> to vector<1x64xf32>
    %238 = vector.extract_strided_slice %235 {offsets = [0, 2], sizes = [1, 64], strides = [1, 1]} : vector<1x82xf32> to vector<1x64xf32>
    %239 = vector.extract_strided_slice %235 {offsets = [0, 8], sizes = [1, 64], strides = [1, 1]} : vector<1x82xf32> to vector<1x64xf32>
    %240 = vector.extract_strided_slice %235 {offsets = [0, 9], sizes = [1, 64], strides = [1, 1]} : vector<1x82xf32> to vector<1x64xf32>
    %241 = vector.extract_strided_slice %235 {offsets = [0, 10], sizes = [1, 64], strides = [1, 1]} : vector<1x82xf32> to vector<1x64xf32>
    %242 = vector.extract_strided_slice %235 {offsets = [0, 16], sizes = [1, 64], strides = [1, 1]} : vector<1x82xf32> to vector<1x64xf32>
    %243 = vector.extract_strided_slice %235 {offsets = [0, 17], sizes = [1, 64], strides = [1, 1]} : vector<1x82xf32> to vector<1x64xf32>
    %244 = vector.extract_strided_slice %235 {offsets = [0, 18], sizes = [1, 64], strides = [1, 1]} : vector<1x82xf32> to vector<1x64xf32>
    %c0_82 = arith.constant 0 : index
    %c0_83 = arith.constant 0 : index
    %c7 = arith.constant 7 : index
    %c0_84 = arith.constant 0 : index
    %245 = vector.load %arg5[%c0_82, %c0_83, %c7, %c0_84] : memref<1x1x10x82xf32, #tpu.memory_space<vmem>>, vector<1x1x1x82xf32>
    %246 = vector.shape_cast %245 : vector<1x1x1x82xf32> to vector<1x82xf32>
    %247 = vector.extract_strided_slice %246 {offsets = [0, 0], sizes = [1, 64], strides = [1, 1]} : vector<1x82xf32> to vector<1x64xf32>
    %248 = vector.extract_strided_slice %246 {offsets = [0, 1], sizes = [1, 64], strides = [1, 1]} : vector<1x82xf32> to vector<1x64xf32>
    %249 = vector.extract_strided_slice %246 {offsets = [0, 2], sizes = [1, 64], strides = [1, 1]} : vector<1x82xf32> to vector<1x64xf32>
    %250 = vector.extract_strided_slice %246 {offsets = [0, 8], sizes = [1, 64], strides = [1, 1]} : vector<1x82xf32> to vector<1x64xf32>
    %251 = vector.extract_strided_slice %246 {offsets = [0, 9], sizes = [1, 64], strides = [1, 1]} : vector<1x82xf32> to vector<1x64xf32>
    %252 = vector.extract_strided_slice %246 {offsets = [0, 10], sizes = [1, 64], strides = [1, 1]} : vector<1x82xf32> to vector<1x64xf32>
    %253 = vector.extract_strided_slice %246 {offsets = [0, 16], sizes = [1, 64], strides = [1, 1]} : vector<1x82xf32> to vector<1x64xf32>
    %254 = vector.extract_strided_slice %246 {offsets = [0, 17], sizes = [1, 64], strides = [1, 1]} : vector<1x82xf32> to vector<1x64xf32>
    %255 = vector.extract_strided_slice %246 {offsets = [0, 18], sizes = [1, 64], strides = [1, 1]} : vector<1x82xf32> to vector<1x64xf32>
    %256 = tpu.concatenate %225, %226, %227, %228, %229, %230, %231, %232, %233, %236, %237, %238, %239, %240, %241, %242 in 0 : vector<1x64xf32>, vector<1x64xf32>, vector<1x64xf32>, vector<1x64xf32>, vector<1x64xf32>, vector<1x64xf32>, vector<1x64xf32>, vector<1x64xf32>, vector<1x64xf32>, vector<1x64xf32>, vector<1x64xf32>, vector<1x64xf32>, vector<1x64xf32>, vector<1x64xf32>, vector<1x64xf32>, vector<1x64xf32> -> vector<16x64xf32>
    %257 = tpu.concatenate %243, %244, %247, %248, %249, %250, %251, %252, %253, %254, %255 in 0 : vector<1x64xf32>, vector<1x64xf32>, vector<1x64xf32>, vector<1x64xf32>, vector<1x64xf32>, vector<1x64xf32>, vector<1x64xf32>, vector<1x64xf32>, vector<1x64xf32>, vector<1x64xf32>, vector<1x64xf32> -> vector<11x64xf32>
    %258 = tpu.concatenate %256, %257 in 0 : vector<16x64xf32>, vector<11x64xf32> -> vector<27x64xf32>
    %259 = arith.mulf %258, %0 : vector<27x64xf32>
    %cst_85 = arith.constant dense<0.000000e+00> : vector<48x64xf32>
    %260 = tpu.matmul %1, %259, %cst_85 {dimension_numbers = #tpu.dot_dimension_numbers<[1], [0], [0], [1], [0, 0, 1, 1], [], []>} : vector<48x27xf32>, vector<27x64xf32>, vector<48x64xf32> -> vector<48x64xf32>
    %261 = vector.broadcast %2 : vector<48x1xf32> to vector<48x64xf32>
    %262 = arith.addf %260, %261 : vector<48x64xf32>
    %263 = arith.truncf %262 : vector<48x64xf32> to vector<48x64xbf16>
    %c0_86 = arith.constant 0 : index
    %c0_87 = arith.constant 0 : index
    %c320 = arith.constant 320 : index
    %264 = vector.load %arg6[%c0_86, %c0_87, %c320] : memref<1x48x512xbf16, #tpu.memory_space<vmem>>, vector<1x48x64xbf16>
    %265 = vector.shape_cast %264 : vector<1x48x64xbf16> to vector<48x64xbf16>
    %266 = vector.shape_cast %263 : vector<48x64xbf16> to vector<1x48x64xbf16>
    tpu.vector_store %arg6[%c0_86, %c0_87, %c320], %266 {strides = array<i32>} : memref<1x48x512xbf16, #tpu.memory_space<vmem>>, vector<1x48x64xbf16>,
    %c0_88 = arith.constant 0 : index
    %c0_89 = arith.constant 0 : index
    %c6_90 = arith.constant 6 : index
    %c0_91 = arith.constant 0 : index
    %267 = vector.load %arg5[%c0_88, %c0_89, %c6_90, %c0_91] : memref<1x1x10x82xf32, #tpu.memory_space<vmem>>, vector<1x1x1x82xf32>
    %268 = vector.shape_cast %267 : vector<1x1x1x82xf32> to vector<1x82xf32>
    %269 = vector.extract_strided_slice %268 {offsets = [0, 0], sizes = [1, 64], strides = [1, 1]} : vector<1x82xf32> to vector<1x64xf32>
    %270 = vector.extract_strided_slice %268 {offsets = [0, 1], sizes = [1, 64], strides = [1, 1]} : vector<1x82xf32> to vector<1x64xf32>
    %271 = vector.extract_strided_slice %268 {offsets = [0, 2], sizes = [1, 64], strides = [1, 1]} : vector<1x82xf32> to vector<1x64xf32>
    %272 = vector.extract_strided_slice %268 {offsets = [0, 8], sizes = [1, 64], strides = [1, 1]} : vector<1x82xf32> to vector<1x64xf32>
    %273 = vector.extract_strided_slice %268 {offsets = [0, 9], sizes = [1, 64], strides = [1, 1]} : vector<1x82xf32> to vector<1x64xf32>
    %274 = vector.extract_strided_slice %268 {offsets = [0, 10], sizes = [1, 64], strides = [1, 1]} : vector<1x82xf32> to vector<1x64xf32>
    %275 = vector.extract_strided_slice %268 {offsets = [0, 16], sizes = [1, 64], strides = [1, 1]} : vector<1x82xf32> to vector<1x64xf32>
    %276 = vector.extract_strided_slice %268 {offsets = [0, 17], sizes = [1, 64], strides = [1, 1]} : vector<1x82xf32> to vector<1x64xf32>
    %277 = vector.extract_strided_slice %268 {offsets = [0, 18], sizes = [1, 64], strides = [1, 1]} : vector<1x82xf32> to vector<1x64xf32>
    %c0_92 = arith.constant 0 : index
    %c0_93 = arith.constant 0 : index
    %c7_94 = arith.constant 7 : index
    %c0_95 = arith.constant 0 : index
    %278 = vector.load %arg5[%c0_92, %c0_93, %c7_94, %c0_95] : memref<1x1x10x82xf32, #tpu.memory_space<vmem>>, vector<1x1x1x82xf32>
    %279 = vector.shape_cast %278 : vector<1x1x1x82xf32> to vector<1x82xf32>
    %280 = vector.extract_strided_slice %279 {offsets = [0, 0], sizes = [1, 64], strides = [1, 1]} : vector<1x82xf32> to vector<1x64xf32>
    %281 = vector.extract_strided_slice %279 {offsets = [0, 1], sizes = [1, 64], strides = [1, 1]} : vector<1x82xf32> to vector<1x64xf32>
    %282 = vector.extract_strided_slice %279 {offsets = [0, 2], sizes = [1, 64], strides = [1, 1]} : vector<1x82xf32> to vector<1x64xf32>
    %283 = vector.extract_strided_slice %279 {offsets = [0, 8], sizes = [1, 64], strides = [1, 1]} : vector<1x82xf32> to vector<1x64xf32>
    %284 = vector.extract_strided_slice %279 {offsets = [0, 9], sizes = [1, 64], strides = [1, 1]} : vector<1x82xf32> to vector<1x64xf32>
    %285 = vector.extract_strided_slice %279 {offsets = [0, 10], sizes = [1, 64], strides = [1, 1]} : vector<1x82xf32> to vector<1x64xf32>
    %286 = vector.extract_strided_slice %279 {offsets = [0, 16], sizes = [1, 64], strides = [1, 1]} : vector<1x82xf32> to vector<1x64xf32>
    %287 = vector.extract_strided_slice %279 {offsets = [0, 17], sizes = [1, 64], strides = [1, 1]} : vector<1x82xf32> to vector<1x64xf32>
    %288 = vector.extract_strided_slice %279 {offsets = [0, 18], sizes = [1, 64], strides = [1, 1]} : vector<1x82xf32> to vector<1x64xf32>
    %c0_96 = arith.constant 0 : index
    %c0_97 = arith.constant 0 : index
    %c8 = arith.constant 8 : index
    %c0_98 = arith.constant 0 : index
    %289 = vector.load %arg5[%c0_96, %c0_97, %c8, %c0_98] : memref<1x1x10x82xf32, #tpu.memory_space<vmem>>, vector<1x1x1x82xf32>
    %290 = vector.shape_cast %289 : vector<1x1x1x82xf32> to vector<1x82xf32>
    %291 = vector.extract_strided_slice %290 {offsets = [0, 0], sizes = [1, 64], strides = [1, 1]} : vector<1x82xf32> to vector<1x64xf32>
    %292 = vector.extract_strided_slice %290 {offsets = [0, 1], sizes = [1, 64], strides = [1, 1]} : vector<1x82xf32> to vector<1x64xf32>
    %293 = vector.extract_strided_slice %290 {offsets = [0, 2], sizes = [1, 64], strides = [1, 1]} : vector<1x82xf32> to vector<1x64xf32>
    %294 = vector.extract_strided_slice %290 {offsets = [0, 8], sizes = [1, 64], strides = [1, 1]} : vector<1x82xf32> to vector<1x64xf32>
    %295 = vector.extract_strided_slice %290 {offsets = [0, 9], sizes = [1, 64], strides = [1, 1]} : vector<1x82xf32> to vector<1x64xf32>
    %296 = vector.extract_strided_slice %290 {offsets = [0, 10], sizes = [1, 64], strides = [1, 1]} : vector<1x82xf32> to vector<1x64xf32>
    %297 = vector.extract_strided_slice %290 {offsets = [0, 16], sizes = [1, 64], strides = [1, 1]} : vector<1x82xf32> to vector<1x64xf32>
    %298 = vector.extract_strided_slice %290 {offsets = [0, 17], sizes = [1, 64], strides = [1, 1]} : vector<1x82xf32> to vector<1x64xf32>
    %299 = vector.extract_strided_slice %290 {offsets = [0, 18], sizes = [1, 64], strides = [1, 1]} : vector<1x82xf32> to vector<1x64xf32>
    %300 = tpu.concatenate %269, %270, %271, %272, %273, %274, %275, %276, %277, %280, %281, %282, %283, %284, %285, %286 in 0 : vector<1x64xf32>, vector<1x64xf32>, vector<1x64xf32>, vector<1x64xf32>, vector<1x64xf32>, vector<1x64xf32>, vector<1x64xf32>, vector<1x64xf32>, vector<1x64xf32>, vector<1x64xf32>, vector<1x64xf32>, vector<1x64xf32>, vector<1x64xf32>, vector<1x64xf32>, vector<1x64xf32>, vector<1x64xf32> -> vector<16x64xf32>
    %301 = tpu.concatenate %287, %288, %291, %292, %293, %294, %295, %296, %297, %298, %299 in 0 : vector<1x64xf32>, vector<1x64xf32>, vector<1x64xf32>, vector<1x64xf32>, vector<1x64xf32>, vector<1x64xf32>, vector<1x64xf32>, vector<1x64xf32>, vector<1x64xf32>, vector<1x64xf32>, vector<1x64xf32> -> vector<11x64xf32>
    %302 = tpu.concatenate %300, %301 in 0 : vector<16x64xf32>, vector<11x64xf32> -> vector<27x64xf32>
    %303 = arith.mulf %302, %0 : vector<27x64xf32>
    %cst_99 = arith.constant dense<0.000000e+00> : vector<48x64xf32>
    %304 = tpu.matmul %1, %303, %cst_99 {dimension_numbers = #tpu.dot_dimension_numbers<[1], [0], [0], [1], [0, 0, 1, 1], [], []>} : vector<48x27xf32>, vector<27x64xf32>, vector<48x64xf32> -> vector<48x64xf32>
    %305 = vector.broadcast %2 : vector<48x1xf32> to vector<48x64xf32>
    %306 = arith.addf %304, %305 : vector<48x64xf32>
    %307 = arith.truncf %306 : vector<48x64xf32> to vector<48x64xbf16>
    %c0_100 = arith.constant 0 : index
    %c0_101 = arith.constant 0 : index
    %c384 = arith.constant 384 : index
    %308 = vector.load %arg6[%c0_100, %c0_101, %c384] : memref<1x48x512xbf16, #tpu.memory_space<vmem>>, vector<1x48x64xbf16>
    %309 = vector.shape_cast %308 : vector<1x48x64xbf16> to vector<48x64xbf16>
    %310 = vector.shape_cast %307 : vector<48x64xbf16> to vector<1x48x64xbf16>
    tpu.vector_store %arg6[%c0_100, %c0_101, %c384], %310 {strides = array<i32>} : memref<1x48x512xbf16, #tpu.memory_space<vmem>>, vector<1x48x64xbf16>,
    %c0_102 = arith.constant 0 : index
    %c0_103 = arith.constant 0 : index
    %c7_104 = arith.constant 7 : index
    %c0_105 = arith.constant 0 : index
    %311 = vector.load %arg5[%c0_102, %c0_103, %c7_104, %c0_105] : memref<1x1x10x82xf32, #tpu.memory_space<vmem>>, vector<1x1x1x82xf32>
    %312 = vector.shape_cast %311 : vector<1x1x1x82xf32> to vector<1x82xf32>
    %313 = vector.extract_strided_slice %312 {offsets = [0, 0], sizes = [1, 64], strides = [1, 1]} : vector<1x82xf32> to vector<1x64xf32>
    %314 = vector.extract_strided_slice %312 {offsets = [0, 1], sizes = [1, 64], strides = [1, 1]} : vector<1x82xf32> to vector<1x64xf32>
    %315 = vector.extract_strided_slice %312 {offsets = [0, 2], sizes = [1, 64], strides = [1, 1]} : vector<1x82xf32> to vector<1x64xf32>
    %316 = vector.extract_strided_slice %312 {offsets = [0, 8], sizes = [1, 64], strides = [1, 1]} : vector<1x82xf32> to vector<1x64xf32>
    %317 = vector.extract_strided_slice %312 {offsets = [0, 9], sizes = [1, 64], strides = [1, 1]} : vector<1x82xf32> to vector<1x64xf32>
    %318 = vector.extract_strided_slice %312 {offsets = [0, 10], sizes = [1, 64], strides = [1, 1]} : vector<1x82xf32> to vector<1x64xf32>
    %319 = vector.extract_strided_slice %312 {offsets = [0, 16], sizes = [1, 64], strides = [1, 1]} : vector<1x82xf32> to vector<1x64xf32>
    %320 = vector.extract_strided_slice %312 {offsets = [0, 17], sizes = [1, 64], strides = [1, 1]} : vector<1x82xf32> to vector<1x64xf32>
    %321 = vector.extract_strided_slice %312 {offsets = [0, 18], sizes = [1, 64], strides = [1, 1]} : vector<1x82xf32> to vector<1x64xf32>
    %c0_106 = arith.constant 0 : index
    %c0_107 = arith.constant 0 : index
    %c8_108 = arith.constant 8 : index
    %c0_109 = arith.constant 0 : index
    %322 = vector.load %arg5[%c0_106, %c0_107, %c8_108, %c0_109] : memref<1x1x10x82xf32, #tpu.memory_space<vmem>>, vector<1x1x1x82xf32>
    %323 = vector.shape_cast %322 : vector<1x1x1x82xf32> to vector<1x82xf32>
    %324 = vector.extract_strided_slice %323 {offsets = [0, 0], sizes = [1, 64], strides = [1, 1]} : vector<1x82xf32> to vector<1x64xf32>
    %325 = vector.extract_strided_slice %323 {offsets = [0, 1], sizes = [1, 64], strides = [1, 1]} : vector<1x82xf32> to vector<1x64xf32>
    %326 = vector.extract_strided_slice %323 {offsets = [0, 2], sizes = [1, 64], strides = [1, 1]} : vector<1x82xf32> to vector<1x64xf32>
    %327 = vector.extract_strided_slice %323 {offsets = [0, 8], sizes = [1, 64], strides = [1, 1]} : vector<1x82xf32> to vector<1x64xf32>
    %328 = vector.extract_strided_slice %323 {offsets = [0, 9], sizes = [1, 64], strides = [1, 1]} : vector<1x82xf32> to vector<1x64xf32>
    %329 = vector.extract_strided_slice %323 {offsets = [0, 10], sizes = [1, 64], strides = [1, 1]} : vector<1x82xf32> to vector<1x64xf32>
    %330 = vector.extract_strided_slice %323 {offsets = [0, 16], sizes = [1, 64], strides = [1, 1]} : vector<1x82xf32> to vector<1x64xf32>
    %331 = vector.extract_strided_slice %323 {offsets = [0, 17], sizes = [1, 64], strides = [1, 1]} : vector<1x82xf32> to vector<1x64xf32>
    %332 = vector.extract_strided_slice %323 {offsets = [0, 18], sizes = [1, 64], strides = [1, 1]} : vector<1x82xf32> to vector<1x64xf32>
    %c0_110 = arith.constant 0 : index
    %c0_111 = arith.constant 0 : index
    %c9 = arith.constant 9 : index
    %c0_112 = arith.constant 0 : index
    %333 = vector.load %arg5[%c0_110, %c0_111, %c9, %c0_112] : memref<1x1x10x82xf32, #tpu.memory_space<vmem>>, vector<1x1x1x82xf32>
    %334 = vector.shape_cast %333 : vector<1x1x1x82xf32> to vector<1x82xf32>
    %335 = vector.extract_strided_slice %334 {offsets = [0, 0], sizes = [1, 64], strides = [1, 1]} : vector<1x82xf32> to vector<1x64xf32>
    %336 = vector.extract_strided_slice %334 {offsets = [0, 1], sizes = [1, 64], strides = [1, 1]} : vector<1x82xf32> to vector<1x64xf32>
    %337 = vector.extract_strided_slice %334 {offsets = [0, 2], sizes = [1, 64], strides = [1, 1]} : vector<1x82xf32> to vector<1x64xf32>
    %338 = vector.extract_strided_slice %334 {offsets = [0, 8], sizes = [1, 64], strides = [1, 1]} : vector<1x82xf32> to vector<1x64xf32>
    %339 = vector.extract_strided_slice %334 {offsets = [0, 9], sizes = [1, 64], strides = [1, 1]} : vector<1x82xf32> to vector<1x64xf32>
    %340 = vector.extract_strided_slice %334 {offsets = [0, 10], sizes = [1, 64], strides = [1, 1]} : vector<1x82xf32> to vector<1x64xf32>
    %341 = vector.extract_strided_slice %334 {offsets = [0, 16], sizes = [1, 64], strides = [1, 1]} : vector<1x82xf32> to vector<1x64xf32>
    %342 = vector.extract_strided_slice %334 {offsets = [0, 17], sizes = [1, 64], strides = [1, 1]} : vector<1x82xf32> to vector<1x64xf32>
    %343 = vector.extract_strided_slice %334 {offsets = [0, 18], sizes = [1, 64], strides = [1, 1]} : vector<1x82xf32> to vector<1x64xf32>
    %344 = tpu.concatenate %313, %314, %315, %316, %317, %318, %319, %320, %321, %324, %325, %326, %327, %328, %329, %330 in 0 : vector<1x64xf32>, vector<1x64xf32>, vector<1x64xf32>, vector<1x64xf32>, vector<1x64xf32>, vector<1x64xf32>, vector<1x64xf32>, vector<1x64xf32>, vector<1x64xf32>, vector<1x64xf32>, vector<1x64xf32>, vector<1x64xf32>, vector<1x64xf32>, vector<1x64xf32>, vector<1x64xf32>, vector<1x64xf32> -> vector<16x64xf32>
    %345 = tpu.concatenate %331, %332, %335, %336, %337, %338, %339, %340, %341, %342, %343 in 0 : vector<1x64xf32>, vector<1x64xf32>, vector<1x64xf32>, vector<1x64xf32>, vector<1x64xf32>, vector<1x64xf32>, vector<1x64xf32>, vector<1x64xf32>, vector<1x64xf32>, vector<1x64xf32>, vector<1x64xf32> -> vector<11x64xf32>
    %346 = tpu.concatenate %344, %345 in 0 : vector<16x64xf32>, vector<11x64xf32> -> vector<27x64xf32>
    %347 = arith.mulf %346, %0 : vector<27x64xf32>
    %cst_113 = arith.constant dense<0.000000e+00> : vector<48x64xf32>
    %348 = tpu.matmul %1, %347, %cst_113 {dimension_numbers = #tpu.dot_dimension_numbers<[1], [0], [0], [1], [0, 0, 1, 1], [], []>} : vector<48x27xf32>, vector<27x64xf32>, vector<48x64xf32> -> vector<48x64xf32>
    %349 = vector.broadcast %2 : vector<48x1xf32> to vector<48x64xf32>
    %350 = arith.addf %348, %349 : vector<48x64xf32>
    %351 = arith.truncf %350 : vector<48x64xf32> to vector<48x64xbf16>
    %c0_114 = arith.constant 0 : index
    %c0_115 = arith.constant 0 : index
    %c448 = arith.constant 448 : index
    %352 = vector.load %arg6[%c0_114, %c0_115, %c448] : memref<1x48x512xbf16, #tpu.memory_space<vmem>>, vector<1x48x64xbf16>
    %353 = vector.shape_cast %352 : vector<1x48x64xbf16> to vector<48x64xbf16>
    %354 = vector.shape_cast %351 : vector<48x64xbf16> to vector<1x48x64xbf16>
    tpu.vector_store %arg6[%c0_114, %c0_115, %c448], %354 {strides = array<i32>} : memref<1x48x512xbf16, #tpu.memory_space<vmem>>, vector<1x48x64xbf16>,
    return
  }
  func.func @transform_0(%arg0: i32, %arg1: i32) -> (i32, i32) {
    %c0_i32 = arith.constant 0 : i32
    %c0_i32_0 = arith.constant 0 : i32
    %c0_i32_1 = arith.constant 0 : i32
    return %c0_i32, %c0_i32_0 : i32, i32
  }
  func.func @transform_1(%arg0: i32, %arg1: i32) -> (i32, i32) {
    %c0_i32 = arith.constant 0 : i32
    %c0_i32_0 = arith.constant 0 : i32
    %c0_i32_1 = arith.constant 0 : i32
    return %c0_i32, %c0_i32_0 : i32, i32
  }
  func.func @transform_2(%arg0: i32, %arg1: i32) -> (i32, i32) {
    %c0_i32 = arith.constant 0 : i32
    %c0_i32_0 = arith.constant 0 : i32
    %c0_i32_1 = arith.constant 0 : i32
    return %c0_i32, %c0_i32_0 : i32, i32
  }
  func.func @transform_3(%arg0: i32, %arg1: i32) -> (i32, i32, i32, i32) {
    %c0_i32 = arith.constant 0 : i32
    %c0_i32_0 = arith.constant 0 : i32
    %c0_i32_1 = arith.constant 0 : i32
    %c0_i32_2 = arith.constant 0 : i32
    return %arg0, %c0_i32, %c0_i32_0, %c0_i32_1 : i32, i32, i32, i32
  }
  func.func @transform_4(%arg0: i32, %arg1: i32) -> (i32, i32, i32) {
    %c0_i32 = arith.constant 0 : i32
    %c0_i32_0 = arith.constant 0 : i32
    return %arg0, %c0_i32, %arg1 : i32, i32, i32
  }
}

module attributes {stable_mosaic.version = 11 : i64} {
  func.func @_mlp_kernel(%arg0: memref<8x48xf32, #tpu.memory_space<vmem>>, %arg1: memref<48x192xf32, #tpu.memory_space<vmem>>, %arg2: memref<1x192xf32, #tpu.memory_space<vmem>>, %arg3: memref<192x192xf32, #tpu.memory_space<vmem>>, %arg4: memref<1x192xf32, #tpu.memory_space<vmem>>, %arg5: memref<8x192xf32, #tpu.memory_space<vmem>>) attributes {dimension_semantics = [], scalar_prefetch = 0 : i64, scratch_operands = 0 : i64, tpu.core_type = #tpu.core_type<tc>} {
    %c0 = arith.constant 0 : index
    %c0_0 = arith.constant 0 : index
    %0 = vector.load %arg0[%c0, %c0_0] : memref<8x48xf32, #tpu.memory_space<vmem>>, vector<8x48xf32>
    %c0_1 = arith.constant 0 : index
    %c0_2 = arith.constant 0 : index
    %1 = vector.load %arg1[%c0_1, %c0_2] : memref<48x192xf32, #tpu.memory_space<vmem>>, vector<48x192xf32>
    %cst = arith.constant dense<0.000000e+00> : vector<8x192xf32>
    %2 = tpu.matmul %0, %1, %cst {dimension_numbers = #tpu.dot_dimension_numbers<[1], [0], [0], [1], [0, 0, 1, 1], [], []>} : vector<8x48xf32>, vector<48x192xf32>, vector<8x192xf32> -> vector<8x192xf32>
    %c0_3 = arith.constant 0 : index
    %c0_4 = arith.constant 0 : index
    %3 = vector.load %arg2[%c0_3, %c0_4] : memref<1x192xf32, #tpu.memory_space<vmem>>, vector<1x192xf32>
    %4 = vector.broadcast %3 : vector<1x192xf32> to vector<8x192xf32>
    %5 = arith.addf %2, %4 : vector<8x192xf32>
    %6 = arith.negf %5 : vector<8x192xf32>
    %7 = math.exp %6 : vector<8x192xf32>
    %cst_5 = arith.constant 1.000000e+00 : f32
    %8 = vector.broadcast %cst_5 : f32 to vector<8x192xf32>
    %9 = arith.addf %8, %7 : vector<8x192xf32>
    %10 = arith.divf %8, %9 : vector<8x192xf32>
    %11 = arith.mulf %5, %10 : vector<8x192xf32>
    %c0_6 = arith.constant 0 : index
    %c0_7 = arith.constant 0 : index
    %12 = vector.load %arg3[%c0_6, %c0_7] : memref<192x192xf32, #tpu.memory_space<vmem>>, vector<192x192xf32>
    %cst_8 = arith.constant dense<0.000000e+00> : vector<8x192xf32>
    %13 = tpu.matmul %11, %12, %cst_8 {dimension_numbers = #tpu.dot_dimension_numbers<[1], [0], [0], [1], [0, 0, 1, 1], [], []>} : vector<8x192xf32>, vector<192x192xf32>, vector<8x192xf32> -> vector<8x192xf32>
    %c0_9 = arith.constant 0 : index
    %c0_10 = arith.constant 0 : index
    %14 = vector.load %arg4[%c0_9, %c0_10] : memref<1x192xf32, #tpu.memory_space<vmem>>, vector<1x192xf32>
    %15 = vector.broadcast %14 : vector<1x192xf32> to vector<8x192xf32>
    %16 = arith.addf %13, %15 : vector<8x192xf32>
    %17 = arith.negf %16 : vector<8x192xf32>
    %18 = math.exp %17 : vector<8x192xf32>
    %cst_11 = arith.constant 1.000000e+00 : f32
    %19 = vector.broadcast %cst_11 : f32 to vector<8x192xf32>
    %20 = arith.addf %19, %18 : vector<8x192xf32>
    %21 = arith.divf %19, %20 : vector<8x192xf32>
    %22 = arith.mulf %16, %21 : vector<8x192xf32>
    %c0_12 = arith.constant 0 : index
    %c0_13 = arith.constant 0 : index
    %23 = vector.load %arg5[%c0_12, %c0_13] : memref<8x192xf32, #tpu.memory_space<vmem>>, vector<8x192xf32>
    tpu.vector_store %arg5[%c0_12, %c0_13], %22 {strides = array<i32>} : memref<8x192xf32, #tpu.memory_space<vmem>>, vector<8x192xf32>,
    return
  }
}

</mosaic_0001>

<llo_original>
// kernel: my_model_forward.2
$region0: #{my_model_forward.2}
  #allocation0 [shape = 'u32[]', space=smem, size = 0x4, offset = 0x4, fixed_abs, tag = 'smem constant byte address 0x4 - core index']
  #allocation1 [shape = 'u32[144,128]{1,0:T(1,128)}', space=vmem, size = 0x12000, scoped, tag = 'internal scratch']
  %s0 = inlined_call_operand.vmem [shape: f32[8,48], index: 0, kind: input, shape index: {}]
  %s1 = inlined_call_operand.vmem [shape: f32[48,192], index: 1, kind: input, shape index: {}]
  %s2 = inlined_call_operand.vmem [shape: f32[1,192], index: 2, kind: input, shape index: {}]
  %s3 = inlined_call_operand.vmem [shape: f32[192,192], index: 3, kind: input, shape index: {}]
  %s4 = inlined_call_operand.vmem [shape: f32[1,192], index: 4, kind: input, shape index: {}]
  %s5 = inlined_call_operand.vmem [shape: f32[8,192], index: 5, kind: output, shape index: {}]
  %s6 = sld [smem:[#allocation0]]
  $region30: #{my_model_forward.2} parent=0
    _
  %s8 = ssub.s32 1, %s6
  %s9 = scalar_select 0, %s8, %s6
  // Predicated region
  $region2: #{my_model_forward.2} parent=0 // pred_check
    _
  $region3: #{my_model_forward.2} parent=0 // pred_check_branch
    %11 = sbr.rel (0) target = $region5
  $region4: #{my_model_forward.2} parent=0 // pred_region
    _
  $region5: #{my_model_forward.2} parent=0 // pred_fallthru
    _
  // Predicated region
  $region6: #{my_model_forward.2} parent=0 // pred_check
    _
  $region7: #{my_model_forward.2} parent=0 // pred_check_branch
    %13 = sbr.rel (0) target = $region9
  $region8: #{my_model_forward.2} parent=0 // pred_region
    _
  $region9: #{my_model_forward.2} parent=0 // pred_fallthru
    _
  // Predicated region
  $region10: #{my_model_forward.2} parent=0 // pred_check
    _
  $region11: #{my_model_forward.2} parent=0 // pred_check_branch
    %15 = sbr.rel (0) target = $region13
  $region12: #{my_model_forward.2} parent=0 // pred_region
    _
  $region13: #{my_model_forward.2} parent=0 // pred_fallthru
    _
  // Predicated region
  $region14: #{my_model_forward.2} parent=0 // pred_check
    _
  $region15: #{my_model_forward.2} parent=0 // pred_check_branch
    %17 = sbr.rel (0) target = $region17
  $region16: #{my_model_forward.2} parent=0 // pred_region
    _
  $region17: #{my_model_forward.2} parent=0 // pred_fallthru
    _
  // Predicated region
  $region18: #{my_model_forward.2} parent=0 // pred_check
    _
  $region19: #{my_model_forward.2} parent=0 // pred_check_branch
    %19 = sbr.rel (0) target = $region21
  $region20: #{my_model_forward.2} parent=0 // pred_region
    _
  $region21: #{my_model_forward.2} parent=0 // pred_fallthru
    _
  %v20 = vld [vmem:[%s0] sm:$0xff]
  %v21 = vld [vmem:[%s1] sm:$0xff]
  %v22 = vld [vmem:[%s1 + $0x8] sm:$0xff]
  %v23 = vld [vmem:[%s1 + $0x10] sm:$0xff]
  %v24 = vld [vmem:[%s1 + $0x18] sm:$0xff]
  %v25 = vld [vmem:[%s1 + $0x20] sm:$0xff]
  %v26 = vld [vmem:[%s1 + $0x28] sm:$0xff]
  %v27 = vld [vmem:[%s1 + $0x30] sm:$0xff]
  %v28 = vld [vmem:[%s1 + $0x38] sm:$0xff]
  %v29 = vld [vmem:[%s1 + $0x40] sm:$0xff]
  %v30 = vld [vmem:[%s1 + $0x48] sm:$0xff]
  %v31 = vld [vmem:[%s1 + $0x50] sm:$0xff]
  %v32 = vld [vmem:[%s1 + $0x58] sm:$0xff]
  %v33 = vld [vmem:[%s2] sm:$0x3]
  %v35 = vlaneseq
  %v36 = vshrl.u32 %v35, 7
  %v37 = vsub.s32 0, %v36
  %v38 = vrot.slane %v33, %v37
  %v39 = vlaneseq
  %v40 = vshrl.u32 %v39, 7
  %v41 = vsub.s32 1, %v40
  %v42 = vrot.slane %v33, %v41
  %vm45 = vcmask 392192
  %v47 = vsel %vm45, %v20, 0
  %49 = vmatprep.subr.mxu0 0.0
  %50 = vmatpush1.msra.mxu0 0.0
  %51 = vmatprep.subr.mxu0 0.0
  %52 = vmatpush1.msra.mxu0 0.0
  %53 = vmatprep.subr.mxu0 0.0
  %54 = vmatpush1.msra.mxu0 0.0
  %55 = vmatprep.subr.mxu0 0.0
  %56 = vmatpush1.msra.mxu0 0.0
  %57 = vmatprep.subr.mxu0 0.0
  %58 = vmatpush1.msra.mxu0 0.0
  %59 = vmatprep.subr.mxu0 0.0
  %60 = vmatpush1.msra.mxu0 0.0
  %61 = vmatprep.subr.mxu0 0.0
  %62 = vmatpush1.msra.mxu0 0.0
  %63 = vmatprep.subr.mxu0 0.0
  %64 = vmatpush1.msra.mxu0 0.0
  %65 = vmatprep.subr.mxu0 0.0
  %66 = vmatpush1.msra.mxu0 0.0
  %67 = vmatprep.subr.mxu0 0.0
  %68 = vmatpush1.msra.mxu0 0.0
  %69 = vmatprep.subr.mxu0 %v32
  %70 = vmatpush1.msra.mxu0 %v31
  %71 = vmatprep.subr.mxu0 %v30
  %72 = vmatpush1.msra.mxu0 %v29
  %73 = vmatprep.subr.mxu0 %v28
  %74 = vmatpush1.msra.mxu0 %v27
  %75 = vmatprep.subr.mxu0 %v26
  %76 = vmatpush1.msra.mxu0 %v25
  %77 = vmatprep.subr.mxu0 %v24
  %78 = vmatpush1.msra.mxu0 %v23
  %79 = vmatprep.subr.mxu0 %v22
  %80 = vmatpush1.msra.mxu0 %v21
  %81 = vmatprep.subr.mxu0 0.0
  %82 = vmatpush2.msra.mxu0 0.0
  %83 = vmatprep.subr.mxu0 0.0
  %84 = vmatpush2.msra.mxu0 0.0
  %85 = vmatprep.subr.mxu0 0.0
  %86 = vmatpush2.msra.mxu0 0.0
  %87 = vmatprep.subr.mxu0 0.0
  %88 = vmatpush2.msra.mxu0 0.0
  %89 = vmatprep.subr.mxu0 0.0
  %90 = vmatpush2.msra.mxu0 0.0
  %91 = vmatprep.subr.mxu0 0.0
  %92 = vmatpush2.msra.mxu0 0.0
  %93 = vmatprep.subr.mxu0 0.0
  %94 = vmatpush2.msra.mxu0 0.0
  %95 = vmatprep.subr.mxu0 0.0
  %96 = vmatpush2.msra.mxu0 0.0
  %97 = vmatprep.subr.mxu0 0.0
  %98 = vmatpush2.msra.mxu0 0.0
  %99 = vmatprep.subr.mxu0 0.0
  %100 = vmatpush2.msra.mxu0 0.0
  %101 = vmatprep.subr.mxu0 0.0
  %102 = vmatpush2.msra.mxu0 0.0
  %103 = vmatprep.subr.mxu0 0.0
  %104 = vmatpush2.msra.mxu0 0.0
  %105 = vmatprep.subr.mxu0 0.0
  %106 = vmatpush2.msra.mxu0 0.0
  %107 = vmatprep.subr.mxu0 0.0
  %108 = vmatpush2.msra.mxu0 0.0
  %109 = vmatprep.subr.mxu0 0.0
  %110 = vmatpush2.msra.mxu0 0.0
  %111 = vmatprep.subr.mxu0 0.0
  %112 = vmatpush2.msra.mxu0 0.0
  %113 = vmatprep.mubr.f32.mxu0 0.0
  %114 = vmatmul.mubr.f32.gmra.mxu0 %v47
  %v115 = vpop.f32.mrf.mxu0
  %v116 = vadd.f32 %v38, %v115
  %v117 = vpop.f32.mrf.mxu0
  %v118 = vadd.f32 %v42, %v117
  %119 = vdwg.mxu0
  %v120 = vxor.u32 %v116, 2147483648
  %v121 = vxor.u32 %v118, 2147483648
  %v122 = vmul.f32 %v120, 1.442695
  %v123 = vpow.pop %v122
  %v124 = vmul.f32 %v121, 1.442695
  %v125 = vpow.pop %v124
  %v126 = vadd.f32 %v123, 1.0
  %v127 = vadd.f32 %v125, 1.0
  %v128 = vrcp.pop %v126
  %v129 = vmul.f32 1.0, %v128
  %v130 = vrcp.pop %v127
  %v131 = vmul.f32 1.0, %v130
  %v132 = vmul.f32 %v116, %v129
  %v133 = vmul.f32 %v118, %v131
  %v134 = vld [vmem:[%s3] sm:$0xff]
  %v135 = vld [vmem:[%s3 + $0x8] sm:$0xff]
  %v136 = vld [vmem:[%s3 + $0x10] sm:$0xff]
  %v137 = vld [vmem:[%s3 + $0x18] sm:$0xff]
  %v138 = vld [vmem:[%s3 + $0x20] sm:$0xff]
  %v139 = vld [vmem:[%s3 + $0x28] sm:$0xff]
  %v140 = vld [vmem:[%s3 + $0x30] sm:$0xff]
  %v141 = vld [vmem:[%s3 + $0x38] sm:$0xff]
  %v142 = vld [vmem:[%s3 + $0x40] sm:$0xff]
  %v143 = vld [vmem:[%s3 + $0x48] sm:$0xff]
  %v144 = vld [vmem:[%s3 + $0x50] sm:$0xff]
  %v145 = vld [vmem:[%s3 + $0x58] sm:$0xff]
  %v146 = vld [vmem:[%s3 + $0x60] sm:$0xff]
  %v147 = vld [vmem:[%s3 + $0x68] sm:$0xff]
  %v148 = vld [vmem:[%s3 + $0x70] sm:$0xff]
  %v149 = vld [vmem:[%s3 + $0x78] sm:$0xff]
  %v150 = vld [vmem:[%s3 + $0x80] sm:$0xff]
  %v151 = vld [vmem:[%s3 + $0x88] sm:$0xff]
  %v152 = vld [vmem:[%s3 + $0x90] sm:$0xff]
  %v153 = vld [vmem:[%s3 + $0x98] sm:$0xff]
  %v154 = vld [vmem:[%s3 + $0xa0] sm:$0xff]
  %v155 = vld [vmem:[%s3 + $0xa8] sm:$0xff]
  %v156 = vld [vmem:[%s3 + $0xb0] sm:$0xff]
  %v157 = vld [vmem:[%s3 + $0xb8] sm:$0xff]
  %v158 = vld [vmem:[%s3 + $0xc0] sm:$0xff]
  %v159 = vld [vmem:[%s3 + $0xc8] sm:$0xff]
  %v160 = vld [vmem:[%s3 + $0xd0] sm:$0xff]
  %v161 = vld [vmem:[%s3 + $0xd8] sm:$0xff]
  %v162 = vld [vmem:[%s3 + $0xe0] sm:$0xff]
  %v163 = vld [vmem:[%s3 + $0xe8] sm:$0xff]
  %v164 = vld [vmem:[%s3 + $0xf0] sm:$0xff]
  %v165 = vld [vmem:[%s3 + $0xf8] sm:$0xff]
  %v166 = vld [vmem:[%s3 + $0x100] sm:$0xff]
  %v167 = vld [vmem:[%s3 + $0x108] sm:$0xff]
  %v168 = vld [vmem:[%s3 + $0x110] sm:$0xff]
  %v169 = vld [vmem:[%s3 + $0x118] sm:$0xff]
  %v170 = vld [vmem:[%s3 + $0x120] sm:$0xff]
  %v171 = vld [vmem:[%s3 + $0x128] sm:$0xff]
  %v172 = vld [vmem:[%s3 + $0x130] sm:$0xff]
  %v173 = vld [vmem:[%s3 + $0x138] sm:$0xff]
  %v174 = vld [vmem:[%s3 + $0x140] sm:$0xff]
  %v175 = vld [vmem:[%s3 + $0x148] sm:$0xff]
  %v176 = vld [vmem:[%s3 + $0x150] sm:$0xff]
  %v177 = vld [vmem:[%s3 + $0x158] sm:$0xff]
  %v178 = vld [vmem:[%s3 + $0x160] sm:$0xff]
  %v179 = vld [vmem:[%s3 + $0x168] sm:$0xff]
  %v180 = vld [vmem:[%s3 + $0x170] sm:$0xff]
  %v181 = vld [vmem:[%s3 + $0x178] sm:$0xff]
  %v182 = vld [vmem:[%s4] sm:$0x3]
  %v184 = vlaneseq
  %v185 = vshrl.u32 %v184, 7
  %v186 = vsub.s32 0, %v185
  %v187 = vrot.slane %v182, %v186
  %v188 = vlaneseq
  %v189 = vshrl.u32 %v188, 7
  %v190 = vsub.s32 1, %v189
  %v191 = vrot.slane %v182, %v190
  %vm194 = vcmask 523264
  %v196 = vsel %vm194, %v133, 0
  %198 = vmatprep.subr.mxu0 %v165
  %199 = vmatpush1.msra.mxu0 %v164
  %200 = vmatprep.subr.mxu0 %v163
  %201 = vmatpush1.msra.mxu0 %v162
  %202 = vmatprep.subr.mxu0 %v161
  %203 = vmatpush1.msra.mxu0 %v160
  %204 = vmatprep.subr.mxu0 %v159
  %205 = vmatpush1.msra.mxu0 %v158
  %206 = vmatprep.subr.mxu0 %v157
  %207 = vmatpush1.msra.mxu0 %v156
  %208 = vmatprep.subr.mxu0 %v155
  %209 = vmatpush1.msra.mxu0 %v154
  %210 = vmatprep.subr.mxu0 %v153
  %211 = vmatpush1.msra.mxu0 %v152
  %212 = vmatprep.subr.mxu0 %v151
  %213 = vmatpush1.msra.mxu0 %v150
  %214 = vmatprep.subr.mxu0 %v149
  %215 = vmatpush1.msra.mxu0 %v148
  %216 = vmatprep.subr.mxu0 %v147
  %217 = vmatpush1.msra.mxu0 %v146
  %218 = vmatprep.subr.mxu0 %v145
  %219 = vmatpush1.msra.mxu0 %v144
  %220 = vmatprep.subr.mxu0 %v143
  %221 = vmatpush1.msra.mxu0 %v142
  %222 = vmatprep.subr.mxu0 %v141
  %223 = vmatpush1.msra.mxu0 %v140
  %224 = vmatprep.subr.mxu0 %v139
  %225 = vmatpush1.msra.mxu0 %v138
  %226 = vmatprep.subr.mxu0 %v137
  %227 = vmatpush1.msra.mxu0 %v136
  %228 = vmatprep.subr.mxu0 %v135
  %229 = vmatpush1.msra.mxu0 %v134
  %230 = vmatprep.subr.mxu0 0.0
  %231 = vmatpush2.msra.mxu0 0.0
  %232 = vmatprep.subr.mxu0 0.0
  %233 = vmatpush2.msra.mxu0 0.0
  %234 = vmatprep.subr.mxu0 0.0
  %235 = vmatpush2.msra.mxu0 0.0
  %236 = vmatprep.subr.mxu0 0.0
  %237 = vmatpush2.msra.mxu0 0.0
  %238 = vmatprep.subr.mxu0 0.0
  %239 = vmatpush2.msra.mxu0 0.0
  %240 = vmatprep.subr.mxu0 0.0
  %241 = vmatpush2.msra.mxu0 0.0
  %242 = vmatprep.subr.mxu0 0.0
  %243 = vmatpush2.msra.mxu0 0.0
  %244 = vmatprep.subr.mxu0 0.0
  %245 = vmatpush2.msra.mxu0 0.0
  %246 = vmatprep.subr.mxu0 %v181
  %247 = vmatpush2.msra.mxu0 %v180
  %248 = vmatprep.subr.mxu0 %v179
  %249 = vmatpush2.msra.mxu0 %v178
  %250 = vmatprep.subr.mxu0 %v177
  %251 = vmatpush2.msra.mxu0 %v176
  %252 = vmatprep.subr.mxu0 %v175
  %253 = vmatpush2.msra.mxu0 %v174
  %254 = vmatprep.subr.mxu0 %v173
  %255 = vmatpush2.msra.mxu0 %v172
  %256 = vmatprep.subr.mxu0 %v171
  %257 = vmatpush2.msra.mxu0 %v170
  %258 = vmatprep.subr.mxu0 %v169
  %259 = vmatpush2.msra.mxu0 %v168
  %260 = vmatprep.subr.mxu0 %v167
  %261 = vmatpush2.msra.mxu0 %v166
  %262 = vmatprep.mubr.f32.mxu0 %v196
  %263 = vmatmul.mubr.f32.gmra.mxu0 %v132
  %v264 = vpop.f32.mrf.mxu0
  %v265 = vadd.f32 %v187, %v264
  %v266 = vpop.f32.mrf.mxu0
  %v267 = vadd.f32 %v191, %v266
  %268 = vdwg.mxu0
  %v269 = vxor.u32 %v265, 2147483648
  %v270 = vxor.u32 %v267, 2147483648
  %v271 = vmul.f32 %v269, 1.442695
  %v272 = vpow.pop %v271
  %v273 = vmul.f32 %v270, 1.442695
  %v274 = vpow.pop %v273
  %v275 = vadd.f32 %v272, 1.0
  %v276 = vadd.f32 %v274, 1.0
  %v277 = vrcp.pop %v275
  %v278 = vmul.f32 1.0, %v277
  %v279 = vrcp.pop %v276
  %v280 = vmul.f32 1.0, %v279
  %v281 = vmul.f32 %v265, %v278
  %v282 = vmul.f32 %v267, %v280
  %283 = vst [vmem:[%s5] sm:$0xff] %v281
  %284 = vst.msk [vmem:[%s5 + $0x8] sm:$0xff] %vm194, %v282
  // Predicated region
  $region22: #{my_model_forward.2} parent=0 // pred_check
    _
  $region23: #{my_model_forward.2} parent=0 // pred_check_branch
    %286 = sbr.rel (0) target = $region25
  $region24: #{my_model_forward.2} parent=0 // pred_region
    _
  $region25: #{my_model_forward.2} parent=0 // pred_fallthru
    _
  // Predicated region
  $region26: #{my_model_forward.2} parent=0 // pred_check
    _
  $region27: #{my_model_forward.2} parent=0 // pred_check_branch
    %288 = sbr.rel (0) target = $region29
  $region28: #{my_model_forward.2} parent=0 // pred_region
    _
  $region29: #{my_model_forward.2} parent=0 // pred_fallthru
    _

// kernel: my_model_forward.3
$region0: #{my_model_forward.3}
  #allocation0 [shape = 'u32[]', space=smem, size = 0x4, offset = 0x4, fixed_abs, tag = 'smem constant byte address 0x4 - core index']
  #allocation1 [shape = 'u32[144,128]{1,0:T(1,128)}', space=vmem, size = 0x12000, scoped, tag = 'internal scratch']
  %s0 = inlined_call_operand.vmem [shape: f32[27,64], index: 0, kind: input, shape index: {}]
  %s1 = inlined_call_operand.vmem [shape: f32[48,27], index: 1, kind: input, shape index: {}]
  %s2 = inlined_call_operand.vmem [shape: f32[48,1], index: 2, kind: input, shape index: {}]
  %s3 = inlined_call_operand.vmem [shape: f32[2,1,10,82], index: 3, kind: input, shape index: {}]
  %s4 = inlined_call_operand.vmem [shape: bf16[2,48,512], index: 4, kind: output, shape index: {}]
  %s5 = sld [smem:[#allocation0]]
  $region49: #{my_model_forward.3} parent=0
    _
  %s7 = ssub.s32 1, %s5
  %s8 = scalar_select 0, %s7, %s5
  loop: start=0, step=1, limit=4
  $region2: #{my_model_forward.3} parent=0 // loop_pre_header
    _
  $region3: #{my_model_forward.3} parent=0 // loop_header
    %s10 = sphi 0, %s14
    %p11 = scmp.ge.s32.totalorder %s10, 4
    %s17 = sphi 0, %s29
    %s18 = sphi 0, %s25
    %s19 = sphi 0, %s17
    %s20 = sphi 0, %s18
    %s21 = sphi 0, %s19
    %s22 = sphi 0, %s20
    %s30 = sphi 0, %s30
    %s32 = sphi 0, %s30
    %s33 = sphi 0, %s32
    %s47 = sphi 0, %s33
    %s51 = sphi 0, %s51
    %s53 = sphi 0, %s51
    %s54 = sphi 0, %s53
    %s68 = sphi 0, %s54
    %s72 = sphi 0, %s72
    %s74 = sphi 0, %s72
    %s75 = sphi 0, %s74
    %s89 = sphi 0, %s75
    %s95 = sphi 0, %s97
    %s98 = sphi 0, %s95
    %s99 = sphi 0, %s98
    %s115 = sphi 0, %s99
    %s123 = sphi 0, %s125
    %s126 = sphi 0, %s123
    %s127 = sphi 0, %s126
    %s143 = sphi 0, %s127
  $region4: #{my_model_forward.3} parent=0 // loop_header_branch
    %13 = sbr.rel (%p11) target = $region8
  $region5: #{my_model_forward.3} parent=0 // loop_body
    %s15 = ssub.s32 %s10, 1
    %s16 = ssub.s32 %s10, 2
    %s23 = sadd.s32 1, %s18
    %p24 = scmp.ge.s32.totalorder %s23, 1
    %s25 = scalar_select %p24, 0, %s23
    %s26 = sadd.s32 1, %s17
    %s27 = scalar_select %p24, %s26, %s17
    %p28 = scmp.ge.s32.totalorder %s27, 2
    %s29 = scalar_select %p28, 0, %s27
    %s31 = sadd.s32 %s30, 1
    %p34 = scmp.eq.s32.totalorder %s10, 1
    %p35 = scmp.ne.s32.totalorder %s30, %s32
    %p36 = scmp.eq.s32.totalorder %s10, 0
    %p37 = por %p35, %p36
    %p38 = scmp.ne.s32.totalorder %s30, %s32
    %p39 = scmp.eq.s32.totalorder %s15, 1
    %p40 = por %p38, %p39
    %p41 = scmp.ne.s32.totalorder %s32, %s33
    %p42 = scmp.eq.s32.totalorder %s15, 0
    %p43 = por %p41, %p42
    %p44 = scmp.ne.s32.totalorder %s32, %s33
    %p45 = scmp.eq.s32.totalorder %s16, 1
    %p46 = por %p44, %p45
    %p48 = scmp.ne.s32.totalorder %s33, %s47
    %p49 = scmp.eq.s32.totalorder %s16, 0
    %p50 = por %p48, %p49
    %s52 = sadd.s32 %s51, 1
    %p55 = scmp.eq.s32.totalorder %s10, 1
    %p56 = scmp.ne.s32.totalorder %s51, %s53
    %p57 = scmp.eq.s32.totalorder %s10, 0
    %p58 = por %p56, %p57
    %p59 = scmp.ne.s32.totalorder %s51, %s53
    %p60 = scmp.eq.s32.totalorder %s15, 1
    %p61 = por %p59, %p60
    %p62 = scmp.ne.s32.totalorder %s53, %s54
    %p63 = scmp.eq.s32.totalorder %s15, 0
    %p64 = por %p62, %p63
    %p65 = scmp.ne.s32.totalorder %s53, %s54
    %p66 = scmp.eq.s32.totalorder %s16, 1
    %p67 = por %p65, %p66
    %p69 = scmp.ne.s32.totalorder %s54, %s68
    %p70 = scmp.eq.s32.totalorder %s16, 0
    %p71 = por %p69, %p70
    %s73 = sadd.s32 %s72, 1
    %p76 = scmp.eq.s32.totalorder %s10, 1
    %p77 = scmp.ne.s32.totalorder %s72, %s74
    %p78 = scmp.eq.s32.totalorder %s10, 0
    %p79 = por %p77, %p78
    %p80 = scmp.ne.s32.totalorder %s72, %s74
    %p81 = scmp.eq.s32.totalorder %s15, 1
    %p82 = por %p80, %p81
    %p83 = scmp.ne.s32.totalorder %s74, %s75
    %p84 = scmp.eq.s32.totalorder %s15, 0
    %p85 = por %p83, %p84
    %p86 = scmp.ne.s32.totalorder %s74, %s75
    %p87 = scmp.eq.s32.totalorder %s16, 1
    %p88 = por %p86, %p87
    %p90 = scmp.ne.s32.totalorder %s75, %s89
    %p91 = scmp.eq.s32.totalorder %s16, 0
    %p92 = por %p90, %p91
    %s93 = ssub.s32 %s17, %s29
    %p94 = scmp.eq.s32.totalorder %s93, 0
    %s96 = sadd.s32 %s95, 1
    %s97 = scalar_select %p94, %s95, %s96
    %p100 = pneg %p94
    %p101 = scmp.eq.s32.totalorder %s10, 1
    %p102 = por %p100, %p101
    %p103 = scmp.ne.s32.totalorder %s95, %s98
    %p104 = scmp.eq.s32.totalorder %s10, 0
    %p105 = por %p103, %p104
    %p106 = scmp.ne.s32.totalorder %s95, %s98
    %p107 = scmp.eq.s32.totalorder %s15, 1
    %p108 = por %p106, %p107
    %p109 = scmp.ne.s32.totalorder %s98, %s99
    %p110 = scmp.eq.s32.totalorder %s15, 0
    %p111 = por %p109, %p110
    %p112 = scmp.ne.s32.totalorder %s98, %s99
    %p113 = scmp.eq.s32.totalorder %s16, 1
    %p114 = por %p112, %p113
    %p116 = scmp.ne.s32.totalorder %s99, %s115
    %p117 = scmp.eq.s32.totalorder %s16, 0
    %p118 = por %p116, %p117
    %s119 = ssub.s32 %s17, %s29
    %s120 = ssub.s32 %s18, %s25
    %s121 = sor.u32 %s119, %s120
    %p122 = scmp.eq.s32.totalorder %s121, 0
    %s124 = sadd.s32 %s123, 1
    %s125 = scalar_select %p122, %s123, %s124
    %p128 = pneg %p122
    %p129 = scmp.eq.s32.totalorder %s10, 1
    %p130 = por %p128, %p129
    %p131 = scmp.ne.s32.totalorder %s123, %s126
    %p132 = scmp.eq.s32.totalorder %s10, 0
    %p133 = por %p131, %p132
    %p134 = scmp.ne.s32.totalorder %s123, %s126
    %p135 = scmp.eq.s32.totalorder %s15, 1
    %p136 = por %p134, %p135
    %p137 = scmp.ne.s32.totalorder %s126, %s127
    %p138 = scmp.eq.s32.totalorder %s15, 0
    %p139 = por %p137, %p138
    %p140 = scmp.ne.s32.totalorder %s126, %s127
    %p141 = scmp.eq.s32.totalorder %s16, 1
    %p142 = por %p140, %p141
    %p144 = scmp.ne.s32.totalorder %s127, %s143
    %p145 = scmp.eq.s32.totalorder %s16, 0
    %p146 = por %p144, %p145
    %p147 = scmp.le.s32.totalorder 1, %s10
    %p148 = scmp.lt.s32.totalorder %s10, 3
    %p149 = pnand %p147, %p148
    %p150 = pneg %p149
    // Predicated region
    $region9: #{my_model_forward.3} parent=5 // pred_check
      _
    $region10: #{my_model_forward.3} parent=5 // pred_check_branch
      %152 = sbr.rel (%p149) target = $region12
    $region11: #{my_model_forward.3} parent=5 // pred_region
      %s153 = ssub.s32 %s10, 1
      // Predicated region
      $region13: #{my_model_forward.3} parent=11 // pred_check
        %p154 = pneg %p43
      $region14: #{my_model_forward.3} parent=11 // pred_check_branch
        %156 = sbr.rel (%p154) target = $region16
      $region15: #{my_model_forward.3} parent=11 // pred_region
        _
      $region16: #{my_model_forward.3} parent=11 // pred_fallthru
        _
      // Predicated region
      $region17: #{my_model_forward.3} parent=11 // pred_check
        %p157 = pneg %p64
      $region18: #{my_model_forward.3} parent=11 // pred_check_branch
        %159 = sbr.rel (%p157) target = $region20
      $region19: #{my_model_forward.3} parent=11 // pred_region
        _
      $region20: #{my_model_forward.3} parent=11 // pred_fallthru
        _
      // Predicated region
      $region21: #{my_model_forward.3} parent=11 // pred_check
        %p160 = pneg %p85
      $region22: #{my_model_forward.3} parent=11 // pred_check_branch
        %162 = sbr.rel (%p160) target = $region24
      $region23: #{my_model_forward.3} parent=11 // pred_region
        _
      $region24: #{my_model_forward.3} parent=11 // pred_fallthru
        _
    $region12: #{my_model_forward.3} parent=5 // pred_fallthru
      _
    %p163 = scmp.lt.s32.totalorder %s10, 2
    // Predicated region
    $region25: #{my_model_forward.3} parent=5 // pred_check
      %p164 = pneg %p163
    $region26: #{my_model_forward.3} parent=5 // pred_check_branch
      %166 = sbr.rel (%p164) target = $region28
    $region27: #{my_model_forward.3} parent=5 // pred_region
      // Predicated region
      $region29: #{my_model_forward.3} parent=27 // pred_check
        %p167 = pneg %p105
      $region30: #{my_model_forward.3} parent=27 // pred_check_branch
        %169 = sbr.rel (%p167) target = $region32
      $region31: #{my_model_forward.3} parent=27 // pred_region
        %p170 = scmp.lt.s32.totalorder %s17, 1
        %s171 = scalar_select %p170, %s17, 1
        %s172 = smul.addr %s171, 2
        %s173 = smul.addr %s172, 8
        %s174 = scalar_lea.vmem %s3, %s173
      $region32: #{my_model_forward.3} parent=27 // pred_fallthru
        _
    $region28: #{my_model_forward.3} parent=5 // pred_fallthru
      _
    %p175 = scmp.le.s32.totalorder 1, %s10
    %p176 = scmp.lt.s32.totalorder %s10, 3
    %p177 = pnand %p175, %p176
    %p178 = pneg %p177
    // Predicated region
    $region33: #{my_model_forward.3} parent=5 // pred_check
      _
    $region34: #{my_model_forward.3} parent=5 // pred_check_branch
      %180 = sbr.rel (%p177) target = $region36
    $region35: #{my_model_forward.3} parent=5 // pred_region
      %s181 = ssub.s32 %s10, 1
      %p182 = pneg %p43
      %p183 = pneg %p40
      %p184 = pneg %p64
      %p185 = pneg %p61
      %p186 = pneg %p85
      %p187 = pneg %p82
      %p188 = scmp.lt.s32.totalorder %s19, 1
      %s189 = scalar_select %p188, %s19, 1
      %s190 = smul.addr %s189, 2
      %s191 = smul.addr %s190, 8
      %s192 = scalar_lea.vmem %s3, %s191
      %p193 = pneg %p111
      %p194 = pneg %p108
      %p195 = pneg %p139
      %p196 = pneg %p136
      %s197 = smul.u32 4, %s20
      %p198 = scmp.lt.s32.totalorder %s19, 1
      %s199 = scalar_select %p198, %s19, 1
      %p200 = scmp.lt.s32.totalorder %s197, 3
      %s201 = scalar_select %p200, %s197, 3
      %s202 = smul.addr %s199, 24
      %s203 = sadd.s32 %s201, %s202
      %s204 = smul.addr %s203, 4
      %s205 = scalar_lea.vmem %s4, %s204
      %p206 = scmp.lt.s32.totalorder %s19, 1
      %s207 = scalar_select %p206, %s19, 1
      %s208 = smul.addr %s207, 2
      %s209 = smul.addr %s208, 8
      %s210 = scalar_lea.vmem %s3, %s209
      %s211 = smul.u32 4, %s20
      %p212 = scmp.lt.s32.totalorder %s19, 1
      %s213 = scalar_select %p212, %s19, 1
      %p214 = scmp.lt.s32.totalorder %s211, 3
      %s215 = scalar_select %p214, %s211, 3
      %s216 = smul.addr %s213, 24
      %s217 = sadd.s32 %s215, %s216
      %s218 = smul.addr %s217, 4
      %s219 = scalar_lea.vmem %s4, %s218
      %s220 = smul.u32 4, %s20
      %v221 = vld [vmem:[%s0] sm:$0xff]
      %v222 = vld [vmem:[%s0 + $0x8] sm:$0xff]
      %v223 = vld [vmem:[%s0 + $0x10] sm:$0xff]
      %v224 = vld [vmem:[%s0 + $0x18] sm:$0x7]
      %v225 = vld [vmem:[%s1] sm:$0xff]
      %v226 = vld [vmem:[%s1 + $0x8] sm:$0xff]
      %v227 = vld [vmem:[%s1 + $0x10] sm:$0xff]
      %v228 = vld [vmem:[%s1 + $0x18] sm:$0xff]
      %v229 = vld [vmem:[%s1 + $0x20] sm:$0xff]
      %v230 = vld [vmem:[%s1 + $0x28] sm:$0xff]
      %v231 = vld [vmem:[%s2] sm:$0xff]
      %v232 = vld [vmem:[%s2 + $0x8] sm:$0xff]
      %v233 = vld [vmem:[%s2 + $0x10] sm:$0xff]
      %v234 = vld [vmem:[%s2 + $0x18] sm:$0xff]
      %v235 = vld [vmem:[%s2 + $0x20] sm:$0xff]
      %v236 = vld [vmem:[%s2 + $0x28] sm:$0xff]
      %v237 = vld [vmem:[%s210] sm:$0x1]
      %v238 = vld [vmem:[%s210 + $0x1] sm:$0x1]
      %v239 = vld [vmem:[%s210 + $0x2] sm:$0x1]
      %v241 = vrot.slane %v237, 7
      %242 = vrot.lane.b32.xlu0 %v241, 127
      %v243 = vpop.permute.xlu0 %242
      %v245 = vrot.slane %v237, 6
      %246 = vrot.lane.b32.xlu0 %v245, 126
      %v247 = vpop.permute.xlu0 %246
      %v249 = vrot.slane %v237, 5
      %250 = vrot.lane.b32.xlu0 %v249, 120
      %v251 = vpop.permute.xlu0 %250
      %v253 = vrot.slane %v237, 4
      %254 = vrot.lane.b32.xlu0 %v253, 119
      %v255 = vpop.permute.xlu0 %254
      %v257 = vrot.slane %v237, 3
      %258 = vrot.lane.b32.xlu0 %v257, 118
      %v259 = vpop.permute.xlu0 %258
      %v261 = vrot.slane %v237, 2
      %262 = vrot.lane.b32.xlu0 %v261, 112
      %v263 = vpop.permute.xlu0 %262
      %v265 = vrot.slane %v237, 1
      %266 = vrot.lane.b32.xlu0 %v265, 111
      %v267 = vpop.permute.xlu0 %266
      %269 = vrot.lane.b32.xlu0 %v237, 110
      %v270 = vpop.permute.xlu0 %269
      %v273 = vrot.slane %v238, 7
      %v275 = vrot.slane %v238, 6
      %276 = vrot.lane.b32.xlu0 %v275, 127
      %v277 = vpop.permute.xlu0 %276
      %v279 = vrot.slane %v238, 5
      %280 = vrot.lane.b32.xlu0 %v279, 126
      %v281 = vpop.permute.xlu0 %280
      %v283 = vrot.slane %v238, 4
      %284 = vrot.lane.b32.xlu0 %v283, 120
      %v285 = vpop.permute.xlu0 %284
      %v287 = vrot.slane %v238, 3
      %288 = vrot.lane.b32.xlu0 %v287, 119
      %v289 = vpop.permute.xlu0 %288
      %v291 = vrot.slane %v238, 2
      %292 = vrot.lane.b32.xlu0 %v291, 118
      %v293 = vpop.permute.xlu0 %292
      %v295 = vrot.slane %v238, 1
      %296 = vrot.lane.b32.xlu0 %v295, 112
      %v297 = vpop.permute.xlu0 %296
      %vm299 = vcmask 1040384
      %v300 = vsel %vm299, %v237, %v243
      %vm301 = vcmask 1041408
      %v302 = vsel %vm301, %v300, %v247
      %vm303 = vcmask 1042432
      %v304 = vsel %vm303, %v302, %v251
      %vm305 = vcmask 1043456
      %v306 = vsel %vm305, %v304, %v255
      %vm307 = vcmask 1044480
      %v308 = vsel %vm307, %v306, %v259
      %vm309 = vcmask 1045504
      %v310 = vsel %vm309, %v308, %v263
      %vm311 = vcmask 1046528
      %v312 = vsel %vm311, %v310, %v267
      %v313 = vsel %vm299, %v270, %v273
      %v314 = vsel %vm301, %v313, %v277
      %v315 = vsel %vm303, %v314, %v281
      %v316 = vsel %vm305, %v315, %v285
      %v317 = vsel %vm307, %v316, %v289
      %v318 = vsel %vm309, %v317, %v293
      %v319 = vsel %vm311, %v318, %v297
      %320 = vrot.lane.b32.xlu0 %v273, 127
      %v321 = vpop.permute.xlu0 %320
      %v324 = vrot.slane %v239, 6
      %325 = vrot.lane.b32.xlu0 %v324, 17
      %v326 = vpop.permute.xlu0 %325
      %v328 = vrot.slane %v239, 5
      %329 = vrot.lane.b32.xlu0 %v328, 16
      %v330 = vpop.permute.xlu0 %329
      %v332 = vrot.slane %v239, 4
      %333 = vrot.lane.b32.xlu0 %v332, 15
      %v334 = vpop.permute.xlu0 %333
      %v336 = vrot.slane %v239, 3
      %337 = vrot.lane.b32.xlu0 %v336, 9
      %v338 = vpop.permute.xlu0 %337
      %v340 = vrot.slane %v239, 2
      %341 = vrot.lane.b32.xlu0 %v340, 8
      %v342 = vpop.permute.xlu0 %341
      %v344 = vrot.slane %v239, 1
      %345 = vrot.lane.b32.xlu0 %v344, 7
      %v346 = vpop.permute.xlu0 %345
      %348 = vrot.lane.b32.xlu0 %v239, 1
      %v349 = vpop.permute.xlu0 %348
      %v351 = vrot.slane %v239, 7
      %353 = vrot.lane.b32.xlu0 %v324, 127
      %v354 = vpop.permute.xlu0 %353
      %v356 = vsel %vm299, %v238, %v321
      %v357 = vsel %vm301, %v356, %v326
      %v358 = vsel %vm303, %v357, %v330
      %v359 = vsel %vm305, %v358, %v334
      %v360 = vsel %vm307, %v359, %v338
      %v361 = vsel %vm309, %v360, %v342
      %v362 = vsel %vm311, %v361, %v346
      %v363 = vsel %vm299, %v349, %v351
      %v364 = vsel %vm301, %v363, %v354
      %367 = vrot.lane.b32.xlu0 %v362, 111
      %v368 = vpop.permute.xlu0 %367
      %369 = vrot.lane.b32.xlu0 %v364, 111
      %v370 = vpop.permute.xlu0 %369
      %v373 = vmul.f32 %v312, %v221
      %v374 = vmul.f32 %v319, %v222
      %v375 = vmul.f32 %v368, %v223
      %v376 = vmul.f32 %v370, %v224
      %378 = vset.pattern.permute.xlu0 0
      %379 = vperm.xlu0 %378, %v231
      %v380 = vpop.permute.xlu0 %379
      %383 = vset.pattern.permute.xlu0 0
      %384 = vperm.xlu0 %383, %v232
      %v385 = vpop.permute.xlu0 %384
      %388 = vset.pattern.permute.xlu0 0
      %389 = vperm.xlu0 %388, %v233
      %v390 = vpop.permute.xlu0 %389
      %393 = vset.pattern.permute.xlu0 0
      %394 = vperm.xlu0 %393, %v234
      %v395 = vpop.permute.xlu0 %394
      %398 = vset.pattern.permute.xlu0 0
      %399 = vperm.xlu0 %398, %v235
      %v400 = vpop.permute.xlu0 %399
      %403 = vset.pattern.permute.xlu0 0
      %404 = vperm.xlu0 %403, %v236
      %v405 = vpop.permute.xlu0 %404
      %vm407 = vcmask 220160
      %v409 = vsel %vm407, %v225, 0
      %v412 = vsel %vm407, %v226, 0
      %v415 = vsel %vm407, %v227, 0
      %v418 = vsel %vm407, %v228, 0
      %v421 = vsel %vm407, %v229, 0
      %v424 = vsel %vm407, %v230, 0
      %v427 = vsel %vm303, %v376, 0
      %429 = vmatprep.subr.mxu0 0.0
      %430 = vmatpush1.msra.mxu0 0.0
      %431 = vmatprep.subr.mxu0 0.0
      %432 = vmatpush1.msra.mxu0 0.0
      %433 = vmatprep.subr.mxu0 0.0
      %434 = vmatpush1.msra.mxu0 0.0
      %435 = vmatprep.subr.mxu0 0.0
      %436 = vmatpush1.msra.mxu0 0.0
      %437 = vmatprep.subr.mxu0 0.0
      %438 = vmatpush1.msra.mxu0 0.0
      %439 = vmatprep.subr.mxu0 0.0
      %440 = vmatpush1.msra.mxu0 0.0
      %441 = vmatprep.subr.mxu0 0.0
      %442 = vmatpush1.msra.mxu0 0.0
      %443 = vmatprep.subr.mxu0 0.0
      %444 = vmatpush1.msra.mxu0 0.0
      %445 = vmatprep.subr.mxu0 0.0
      %446 = vmatpush1.msra.mxu0 0.0
      %447 = vmatprep.subr.mxu0 0.0
      %448 = vmatpush1.msra.mxu0 0.0
      %449 = vmatprep.subr.mxu0 0.0
      %450 = vmatpush1.msra.mxu0 0.0
      %451 = vmatprep.subr.mxu0 0.0
      %452 = vmatpush1.msra.mxu0 0.0
      %453 = vmatprep.subr.mxu0 0.0
      %454 = vmatpush1.msra.mxu0 %v427
      %455 = vmatprep.subr.mxu0 0.0
      %456 = vmatpush1.msra.mxu0 %v375
      %457 = vmatprep.subr.mxu0 0.0
      %458 = vmatpush1.msra.mxu0 %v374
      %459 = vmatprep.subr.mxu0 0.0
      %460 = vmatpush1.msra.mxu0 %v373
      %461 = vmatprep.subr.mxu0 0.0
      %462 = vmatpush2.msra.mxu0 0.0
      %463 = vmatprep.subr.mxu0 0.0
      %464 = vmatpush2.msra.mxu0 0.0
      %465 = vmatprep.subr.mxu0 0.0
      %466 = vmatpush2.msra.mxu0 0.0
      %467 = vmatprep.subr.mxu0 0.0
      %468 = vmatpush2.msra.mxu0 0.0
      %469 = vmatprep.subr.mxu0 0.0
      %470 = vmatpush2.msra.mxu0 0.0
      %471 = vmatprep.subr.mxu0 0.0
      %472 = vmatpush2.msra.mxu0 0.0
      %473 = vmatprep.subr.mxu0 0.0
      %474 = vmatpush2.msra.mxu0 0.0
      %475 = vmatprep.subr.mxu0 0.0
      %476 = vmatpush2.msra.mxu0 0.0
      %477 = vmatprep.subr.mxu0 0.0
      %478 = vmatpush2.msra.mxu0 0.0
      %479 = vmatprep.subr.mxu0 0.0
      %480 = vmatpush2.msra.mxu0 0.0
      %481 = vmatprep.subr.mxu0 0.0
      %482 = vmatpush2.msra.mxu0 0.0
      %483 = vmatprep.subr.mxu0 0.0
      %484 = vmatpush2.msra.mxu0 0.0
      %485 = vmatprep.subr.mxu0 0.0
      %486 = vmatpush2.msra.mxu0 0.0
      %487 = vmatprep.subr.mxu0 0.0
      %488 = vmatpush2.msra.mxu0 0.0
      %489 = vmatprep.subr.mxu0 0.0
      %490 = vmatpush2.msra.mxu0 0.0
      %491 = vmatprep.subr.mxu0 0.0
      %492 = vmatpush2.msra.mxu0 0.0
      %493 = vmatprep.mubr.f32.mxu0 0.0
      %494 = vmatmul.mubr.f32.gmra.mxu0 %v409
      %v495 = vpop.f32.mrf.mxu0
      %v496 = vadd.f32 %v380, %v495
      %v497 = vpop.f32.mrf.mxu0
      %498 = vmatprep.mubr.f32.mxu0 0.0
      %499 = vmatmul.mubr.f32.gmra.mxu0 %v412
      %v500 = vpop.f32.mrf.mxu0
      %v501 = vadd.f32 %v385, %v500
      %v502 = vpop.f32.mrf.mxu0
      %503 = vmatprep.mubr.f32.mxu0 0.0
      %504 = vmatmul.mubr.f32.gmra.mxu0 %v415
      %v505 = vpop.f32.mrf.mxu0
      %v506 = vadd.f32 %v390, %v505
      %v507 = vpop.f32.mrf.mxu0
      %508 = vmatprep.mubr.f32.mxu0 0.0
      %509 = vmatmul.mubr.f32.gmra.mxu0 %v418
      %v510 = vpop.f32.mrf.mxu0
      %v511 = vadd.f32 %v395, %v510
      %v512 = vpop.f32.mrf.mxu0
      %513 = vmatprep.mubr.f32.mxu0 0.0
      %514 = vmatmul.mubr.f32.gmra.mxu0 %v421
      %v515 = vpop.f32.mrf.mxu0
      %v516 = vadd.f32 %v400, %v515
      %v517 = vpop.f32.mrf.mxu0
      %518 = vmatprep.mubr.f32.mxu0 0.0
      %519 = vmatmul.mubr.f32.gmra.mxu0 %v424
      %v520 = vpop.f32.mrf.mxu0
      %v521 = vadd.f32 %v405, %v520
      %v522 = vpop.f32.mrf.mxu0
      %523 = vdwg.mxu0
      %v524 = vpack.c.bf16 %v501, %v496
      %v525 = vpack.c.bf16 %v511, %v506
      %v526 = vpack.c.bf16 %v521, %v516
      %v530 = vunpack.c.l.b16 %v524
      %v531 = vunpack.c.h.b16 %v524
      %v532 = vunpack.c.l.b16 %v525
      %v533 = vunpack.c.h.b16 %v525
      %v534 = vunpack.c.l.b16 %v526
      %v535 = vunpack.c.h.b16 %v526
      %v536 = vpack.c.b16 %v530, %v530
      %v537 = vpack.c.b16 %v531, %v531
      %v538 = vpack.c.b16 %v532, %v532
      %v539 = vpack.c.b16 %v533, %v533
      %v540 = vpack.c.b16 %v534, %v534
      %v541 = vpack.c.b16 %v535, %v535
      %vm548 = vcmask 519168
      %549 = vst.msk [vmem:[%s219] sm:$0xf] %vm548, %v536
      %550 = vst.msk [vmem:[%s219 + $0x10] sm:$0xf] %vm548, %v537
      %551 = vst.msk [vmem:[%s219 + $0x20] sm:$0xf] %vm548, %v538
      %552 = vst.msk [vmem:[%s219 + $0x30] sm:$0xf] %vm548, %v539
      %553 = vst.msk [vmem:[%s219 + $0x40] sm:$0xf] %vm548, %v540
      %554 = vst.msk [vmem:[%s219 + $0x50] sm:$0xf] %vm548, %v541
      %v555 = vld [vmem:[%s210 + $0x1] sm:$0x1]
      %v556 = vld [vmem:[%s210 + $0x2] sm:$0x1]
      %v557 = vld [vmem:[%s210 + $0x3] sm:$0x1]
      %v559 = vrot.slane %v555, 7
      %560 = vrot.lane.b32.xlu0 %v559, 127
      %v561 = vpop.permute.xlu0 %560
      %v563 = vrot.slane %v555, 6
      %564 = vrot.lane.b32.xlu0 %v563, 126
      %v565 = vpop.permute.xlu0 %564
      %v567 = vrot.slane %v555, 5
      %568 = vrot.lane.b32.xlu0 %v567, 120
      %v569 = vpop.permute.xlu0 %568
      %v571 = vrot.slane %v555, 4
      %572 = vrot.lane.b32.xlu0 %v571, 119
      %v573 = vpop.permute.xlu0 %572
      %v575 = vrot.slane %v555, 3
      %576 = vrot.lane.b32.xlu0 %v575, 118
      %v577 = vpop.permute.xlu0 %576
      %v579 = vrot.slane %v555, 2
      %580 = vrot.lane.b32.xlu0 %v579, 112
      %v581 = vpop.permute.xlu0 %580
      %v583 = vrot.slane %v555, 1
      %584 = vrot.lane.b32.xlu0 %v583, 111
      %v585 = vpop.permute.xlu0 %584
      %587 = vrot.lane.b32.xlu0 %v555, 110
      %v588 = vpop.permute.xlu0 %587
      %v591 = vrot.slane %v556, 7
      %v593 = vrot.slane %v556, 6
      %594 = vrot.lane.b32.xlu0 %v593, 127
      %v595 = vpop.permute.xlu0 %594
      %v597 = vrot.slane %v556, 5
      %598 = vrot.lane.b32.xlu0 %v597, 126
      %v599 = vpop.permute.xlu0 %598
      %v601 = vrot.slane %v556, 4
      %602 = vrot.lane.b32.xlu0 %v601, 120
      %v603 = vpop.permute.xlu0 %602
      %v605 = vrot.slane %v556, 3
      %606 = vrot.lane.b32.xlu0 %v605, 119
      %v607 = vpop.permute.xlu0 %606
      %v609 = vrot.slane %v556, 2
      %610 = vrot.lane.b32.xlu0 %v609, 118
      %v611 = vpop.permute.xlu0 %610
      %v613 = vrot.slane %v556, 1
      %614 = vrot.lane.b32.xlu0 %v613, 112
      %v615 = vpop.permute.xlu0 %614
      %v617 = vsel %vm299, %v555, %v561
      %v618 = vsel %vm301, %v617, %v565
      %v619 = vsel %vm303, %v618, %v569
      %v620 = vsel %vm305, %v619, %v573
      %v621 = vsel %vm307, %v620, %v577
      %v622 = vsel %vm309, %v621, %v581
      %v623 = vsel %vm311, %v622, %v585
      %v624 = vsel %vm299, %v588, %v591
      %v625 = vsel %vm301, %v624, %v595
      %v626 = vsel %vm303, %v625, %v599
      %v627 = vsel %vm305, %v626, %v603
      %v628 = vsel %vm307, %v627, %v607
      %v629 = vsel %vm309, %v628, %v611
      %v630 = vsel %vm311, %v629, %v615
      %631 = vrot.lane.b32.xlu0 %v591, 127
      %v632 = vpop.permute.xlu0 %631
      %v635 = vrot.slane %v557, 6
      %636 = vrot.lane.b32.xlu0 %v635, 17
      %v637 = vpop.permute.xlu0 %636
      %v639 = vrot.slane %v557, 5
      %640 = vrot.lane.b32.xlu0 %v639, 16
      %v641 = vpop.permute.xlu0 %640
      %v643 = vrot.slane %v557, 4
      %644 = vrot.lane.b32.xlu0 %v643, 15
      %v645 = vpop.permute.xlu0 %644
      %v647 = vrot.slane %v557, 3
      %648 = vrot.lane.b32.xlu0 %v647, 9
      %v649 = vpop.permute.xlu0 %648
      %v651 = vrot.slane %v557, 2
      %652 = vrot.lane.b32.xlu0 %v651, 8
      %v653 = vpop.permute.xlu0 %652
      %v655 = vrot.slane %v557, 1
      %656 = vrot.lane.b32.xlu0 %v655, 7
      %v657 = vpop.permute.xlu0 %656
      %659 = vrot.lane.b32.xlu0 %v557, 1
      %v660 = vpop.permute.xlu0 %659
      %v662 = vrot.slane %v557, 7
      %664 = vrot.lane.b32.xlu0 %v635, 127
      %v665 = vpop.permute.xlu0 %664
      %v667 = vsel %vm299, %v556, %v632
      %v668 = vsel %vm301, %v667, %v637
      %v669 = vsel %vm303, %v668, %v641
      %v670 = vsel %vm305, %v669, %v645
      %v671 = vsel %vm307, %v670, %v649
      %v672 = vsel %vm309, %v671, %v653
      %v673 = vsel %vm311, %v672, %v657
      %v674 = vsel %vm299, %v660, %v662
      %v675 = vsel %vm301, %v674, %v665
      %678 = vrot.lane.b32.xlu0 %v673, 111
      %v679 = vpop.permute.xlu0 %678
      %680 = vrot.lane.b32.xlu0 %v675, 111
      %v681 = vpop.permute.xlu0 %680
      %v684 = vmul.f32 %v623, %v221
      %v685 = vmul.f32 %v630, %v222
      %v686 = vmul.f32 %v679, %v223
      %v687 = vmul.f32 %v681, %v224
      %v689 = vsel %vm303, %v687, 0
      %691 = vmatprep.subr.mxu0 0.0
      %692 = vmatpush1.msra.mxu0 0.0
      %693 = vmatprep.subr.mxu0 0.0
      %694 = vmatpush1.msra.mxu0 0.0
      %695 = vmatprep.subr.mxu0 0.0
      %696 = vmatpush1.msra.mxu0 0.0
      %697 = vmatprep.subr.mxu0 0.0
      %698 = vmatpush1.msra.mxu0 0.0
      %699 = vmatprep.subr.mxu0 0.0
      %700 = vmatpush1.msra.mxu0 0.0
      %701 = vmatprep.subr.mxu0 0.0
      %702 = vmatpush1.msra.mxu0 0.0
      %703 = vmatprep.subr.mxu0 0.0
      %704 = vmatpush1.msra.mxu0 0.0
      %705 = vmatprep.subr.mxu0 0.0
      %706 = vmatpush1.msra.mxu0 0.0
      %707 = vmatprep.subr.mxu0 0.0
      %708 = vmatpush1.msra.mxu0 0.0
      %709 = vmatprep.subr.mxu0 0.0
      %710 = vmatpush1.msra.mxu0 0.0
      %711 = vmatprep.subr.mxu0 0.0
      %712 = vmatpush1.msra.mxu0 0.0
      %713 = vmatprep.subr.mxu0 0.0
      %714 = vmatpush1.msra.mxu0 0.0
      %715 = vmatprep.subr.mxu0 0.0
      %716 = vmatpush1.msra.mxu0 %v689
      %717 = vmatprep.subr.mxu0 0.0
      %718 = vmatpush1.msra.mxu0 %v686
      %719 = vmatprep.subr.mxu0 0.0
      %720 = vmatpush1.msra.mxu0 %v685
      %721 = vmatprep.subr.mxu0 0.0
      %722 = vmatpush1.msra.mxu0 %v684
      %723 = vmatprep.subr.mxu0 0.0
      %724 = vmatpush2.msra.mxu0 0.0
      %725 = vmatprep.subr.mxu0 0.0
      %726 = vmatpush2.msra.mxu0 0.0
      %727 = vmatprep.subr.mxu0 0.0
      %728 = vmatpush2.msra.mxu0 0.0
      %729 = vmatprep.subr.mxu0 0.0
      %730 = vmatpush2.msra.mxu0 0.0
      %731 = vmatprep.subr.mxu0 0.0
      %732 = vmatpush2.msra.mxu0 0.0
      %733 = vmatprep.subr.mxu0 0.0
      %734 = vmatpush2.msra.mxu0 0.0
      %735 = vmatprep.subr.mxu0 0.0
      %736 = vmatpush2.msra.mxu0 0.0
      %737 = vmatprep.subr.mxu0 0.0
      %738 = vmatpush2.msra.mxu0 0.0
      %739 = vmatprep.subr.mxu0 0.0
      %740 = vmatpush2.msra.mxu0 0.0
      %741 = vmatprep.subr.mxu0 0.0
      %742 = vmatpush2.msra.mxu0 0.0
      %743 = vmatprep.subr.mxu0 0.0
      %744 = vmatpush2.msra.mxu0 0.0
      %745 = vmatprep.subr.mxu0 0.0
      %746 = vmatpush2.msra.mxu0 0.0
      %747 = vmatprep.subr.mxu0 0.0
      %748 = vmatpush2.msra.mxu0 0.0
      %749 = vmatprep.subr.mxu0 0.0
      %750 = vmatpush2.msra.mxu0 0.0
      %751 = vmatprep.subr.mxu0 0.0
      %752 = vmatpush2.msra.mxu0 0.0
      %753 = vmatprep.subr.mxu0 0.0
      %754 = vmatpush2.msra.mxu0 0.0
      %755 = vmatprep.mubr.f32.mxu0 0.0
      %756 = vmatmul.mubr.f32.gmra.mxu0 %v409
      %v757 = vpop.f32.mrf.mxu0
      %v758 = vadd.f32 %v380, %v757
      %v759 = vpop.f32.mrf.mxu0
      %760 = vmatprep.mubr.f32.mxu0 0.0
      %761 = vmatmul.mubr.f32.gmra.mxu0 %v412
      %v762 = vpop.f32.mrf.mxu0
      %v763 = vadd.f32 %v385, %v762
      %v764 = vpop.f32.mrf.mxu0
      %765 = vmatprep.mubr.f32.mxu0 0.0
      %766 = vmatmul.mubr.f32.gmra.mxu0 %v415
      %v767 = vpop.f32.mrf.mxu0
      %v768 = vadd.f32 %v390, %v767
      %v769 = vpop.f32.mrf.mxu0
      %770 = vmatprep.mubr.f32.mxu0 0.0
      %771 = vmatmul.mubr.f32.gmra.mxu0 %v418
      %v772 = vpop.f32.mrf.mxu0
      %v773 = vadd.f32 %v395, %v772
      %v774 = vpop.f32.mrf.mxu0
      %775 = vmatprep.mubr.f32.mxu0 0.0
      %776 = vmatmul.mubr.f32.gmra.mxu0 %v421
      %v777 = vpop.f32.mrf.mxu0
      %v778 = vadd.f32 %v400, %v777
      %v779 = vpop.f32.mrf.mxu0
      %780 = vmatprep.mubr.f32.mxu0 0.0
      %781 = vmatmul.mubr.f32.gmra.mxu0 %v424
      %v782 = vpop.f32.mrf.mxu0
      %v783 = vadd.f32 %v405, %v782
      %v784 = vpop.f32.mrf.mxu0
      %785 = vdwg.mxu0
      %v786 = vpack.c.bf16 %v763, %v758
      %v787 = vpack.c.bf16 %v773, %v768
      %v788 = vpack.c.bf16 %v783, %v778
      %v792 = vunpack.c.l.b16 %v786
      %v793 = vunpack.c.h.b16 %v786
      %v794 = vunpack.c.l.b16 %v787
      %v795 = vunpack.c.h.b16 %v787
      %v796 = vunpack.c.l.b16 %v788
      %v797 = vunpack.c.h.b16 %v788
      %v798 = vpack.c.b16 %v792, %v792
      %v799 = vpack.c.b16 %v793, %v793
      %v800 = vpack.c.b16 %v794, %v794
      %v801 = vpack.c.b16 %v795, %v795
      %v802 = vpack.c.b16 %v796, %v796
      %v803 = vpack.c.b16 %v797, %v797
      %804 = vrot.lane.b32.xlu0 %v798, 64
      %v805 = vpop.permute.xlu0 %804
      %806 = vrot.lane.b32.xlu0 %v799, 64
      %v807 = vpop.permute.xlu0 %806
      %808 = vrot.lane.b32.xlu0 %v800, 64
      %v809 = vpop.permute.xlu0 %808
      %810 = vrot.lane.b32.xlu0 %v801, 64
      %v811 = vpop.permute.xlu0 %810
      %812 = vrot.lane.b32.xlu0 %v802, 64
      %v813 = vpop.permute.xlu0 %812
      %814 = vrot.lane.b32.xlu0 %v803, 64
      %v815 = vpop.permute.xlu0 %814
      %vm822 = vcmask 1043968
      %823 = vst.msk [vmem:[%s219] sm:$0xf] %vm822, %v805
      %824 = vst.msk [vmem:[%s219 + $0x10] sm:$0xf] %vm822, %v807
      %825 = vst.msk [vmem:[%s219 + $0x20] sm:$0xf] %vm822, %v809
      %826 = vst.msk [vmem:[%s219 + $0x30] sm:$0xf] %vm822, %v811
      %827 = vst.msk [vmem:[%s219 + $0x40] sm:$0xf] %vm822, %v813
      %828 = vst.msk [vmem:[%s219 + $0x50] sm:$0xf] %vm822, %v815
      %v829 = vld [vmem:[%s210 + $0x2] sm:$0x1]
      %v830 = vld [vmem:[%s210 + $0x3] sm:$0x1]
      %v831 = vld [vmem:[%s210 + $0x4] sm:$0x1]
      %v833 = vrot.slane %v829, 7
      %834 = vrot.lane.b32.xlu0 %v833, 127
      %v835 = vpop.permute.xlu0 %834
      %v837 = vrot.slane %v829, 6
      %838 = vrot.lane.b32.xlu0 %v837, 126
      %v839 = vpop.permute.xlu0 %838
      %v841 = vrot.slane %v829, 5
      %842 = vrot.lane.b32.xlu0 %v841, 120
      %v843 = vpop.permute.xlu0 %842
      %v845 = vrot.slane %v829, 4
      %846 = vrot.lane.b32.xlu0 %v845, 119
      %v847 = vpop.permute.xlu0 %846
      %v849 = vrot.slane %v829, 3
      %850 = vrot.lane.b32.xlu0 %v849, 118
      %v851 = vpop.permute.xlu0 %850
      %v853 = vrot.slane %v829, 2
      %854 = vrot.lane.b32.xlu0 %v853, 112
      %v855 = vpop.permute.xlu0 %854
      %v857 = vrot.slane %v829, 1
      %858 = vrot.lane.b32.xlu0 %v857, 111
      %v859 = vpop.permute.xlu0 %858
      %861 = vrot.lane.b32.xlu0 %v829, 110
      %v862 = vpop.permute.xlu0 %861
      %v865 = vrot.slane %v830, 7
      %v867 = vrot.slane %v830, 6
      %868 = vrot.lane.b32.xlu0 %v867, 127
      %v869 = vpop.permute.xlu0 %868
      %v871 = vrot.slane %v830, 5
      %872 = vrot.lane.b32.xlu0 %v871, 126
      %v873 = vpop.permute.xlu0 %872
      %v875 = vrot.slane %v830, 4
      %876 = vrot.lane.b32.xlu0 %v875, 120
      %v877 = vpop.permute.xlu0 %876
      %v879 = vrot.slane %v830, 3
      %880 = vrot.lane.b32.xlu0 %v879, 119
      %v881 = vpop.permute.xlu0 %880
      %v883 = vrot.slane %v830, 2
      %884 = vrot.lane.b32.xlu0 %v883, 118
      %v885 = vpop.permute.xlu0 %884
      %v887 = vrot.slane %v830, 1
      %888 = vrot.lane.b32.xlu0 %v887, 112
      %v889 = vpop.permute.xlu0 %888
      %v891 = vsel %vm299, %v829, %v835
      %v892 = vsel %vm301, %v891, %v839
      %v893 = vsel %vm303, %v892, %v843
      %v894 = vsel %vm305, %v893, %v847
      %v895 = vsel %vm307, %v894, %v851
      %v896 = vsel %vm309, %v895, %v855
      %v897 = vsel %vm311, %v896, %v859
      %v898 = vsel %vm299, %v862, %v865
      %v899 = vsel %vm301, %v898, %v869
      %v900 = vsel %vm303, %v899, %v873
      %v901 = vsel %vm305, %v900, %v877
      %v902 = vsel %vm307, %v901, %v881
      %v903 = vsel %vm309, %v902, %v885
      %v904 = vsel %vm311, %v903, %v889
      %905 = vrot.lane.b32.xlu0 %v865, 127
      %v906 = vpop.permute.xlu0 %905
      %v909 = vrot.slane %v831, 6
      %910 = vrot.lane.b32.xlu0 %v909, 17
      %v911 = vpop.permute.xlu0 %910
      %v913 = vrot.slane %v831, 5
      %914 = vrot.lane.b32.xlu0 %v913, 16
      %v915 = vpop.permute.xlu0 %914
      %v917 = vrot.slane %v831, 4
      %918 = vrot.lane.b32.xlu0 %v917, 15
      %v919 = vpop.permute.xlu0 %918
      %v921 = vrot.slane %v831, 3
      %922 = vrot.lane.b32.xlu0 %v921, 9
      %v923 = vpop.permute.xlu0 %922
      %v925 = vrot.slane %v831, 2
      %926 = vrot.lane.b32.xlu0 %v925, 8
      %v927 = vpop.permute.xlu0 %926
      %v929 = vrot.slane %v831, 1
      %930 = vrot.lane.b32.xlu0 %v929, 7
      %v931 = vpop.permute.xlu0 %930
      %933 = vrot.lane.b32.xlu0 %v831, 1
      %v934 = vpop.permute.xlu0 %933
      %v936 = vrot.slane %v831, 7
      %938 = vrot.lane.b32.xlu0 %v909, 127
      %v939 = vpop.permute.xlu0 %938
      %v941 = vsel %vm299, %v830, %v906
      %v942 = vsel %vm301, %v941, %v911
      %v943 = vsel %vm303, %v942, %v915
      %v944 = vsel %vm305, %v943, %v919
      %v945 = vsel %vm307, %v944, %v923
      %v946 = vsel %vm309, %v945, %v927
      %v947 = vsel %vm311, %v946, %v931
      %v948 = vsel %vm299, %v934, %v936
      %v949 = vsel %vm301, %v948, %v939
      %952 = vrot.lane.b32.xlu0 %v947, 111
      %v953 = vpop.permute.xlu0 %952
      %954 = vrot.lane.b32.xlu0 %v949, 111
      %v955 = vpop.permute.xlu0 %954
      %v958 = vmul.f32 %v897, %v221
      %v959 = vmul.f32 %v904, %v222
      %v960 = vmul.f32 %v953, %v223
      %v961 = vmul.f32 %v955, %v224
      %v963 = vsel %vm303, %v961, 0
      %965 = vmatprep.subr.mxu0 0.0
      %966 = vmatpush1.msra.mxu0 0.0
      %967 = vmatprep.subr.mxu0 0.0
      %968 = vmatpush1.msra.mxu0 0.0
      %969 = vmatprep.subr.mxu0 0.0
      %970 = vmatpush1.msra.mxu0 0.0
      %971 = vmatprep.subr.mxu0 0.0
      %972 = vmatpush1.msra.mxu0 0.0
      %973 = vmatprep.subr.mxu0 0.0
      %974 = vmatpush1.msra.mxu0 0.0
      %975 = vmatprep.subr.mxu0 0.0
      %976 = vmatpush1.msra.mxu0 0.0
      %977 = vmatprep.subr.mxu0 0.0
      %978 = vmatpush1.msra.mxu0 0.0
      %979 = vmatprep.subr.mxu0 0.0
      %980 = vmatpush1.msra.mxu0 0.0
      %981 = vmatprep.subr.mxu0 0.0
      %982 = vmatpush1.msra.mxu0 0.0
      %983 = vmatprep.subr.mxu0 0.0
      %984 = vmatpush1.msra.mxu0 0.0
      %985 = vmatprep.subr.mxu0 0.0
      %986 = vmatpush1.msra.mxu0 0.0
      %987 = vmatprep.subr.mxu0 0.0
      %988 = vmatpush1.msra.mxu0 0.0
      %989 = vmatprep.subr.mxu0 0.0
      %990 = vmatpush1.msra.mxu0 %v963
      %991 = vmatprep.subr.mxu0 0.0
      %992 = vmatpush1.msra.mxu0 %v960
      %993 = vmatprep.subr.mxu0 0.0
      %994 = vmatpush1.msra.mxu0 %v959
      %995 = vmatprep.subr.mxu0 0.0
      %996 = vmatpush1.msra.mxu0 %v958
      %997 = vmatprep.subr.mxu0 0.0
      %998 = vmatpush2.msra.mxu0 0.0
      %999 = vmatprep.subr.mxu0 0.0
      %1000 = vmatpush2.msra.mxu0 0.0
      %1001 = vmatprep.subr.mxu0 0.0
      %1002 = vmatpush2.msra.mxu0 0.0
      %1003 = vmatprep.subr.mxu0 0.0
      %1004 = vmatpush2.msra.mxu0 0.0
      %1005 = vmatprep.subr.mxu0 0.0
      %1006 = vmatpush2.msra.mxu0 0.0
      %1007 = vmatprep.subr.mxu0 0.0
      %1008 = vmatpush2.msra.mxu0 0.0
      %1009 = vmatprep.subr.mxu0 0.0
      %1010 = vmatpush2.msra.mxu0 0.0
      %1011 = vmatprep.subr.mxu0 0.0
      %1012 = vmatpush2.msra.mxu0 0.0
      %1013 = vmatprep.subr.mxu0 0.0
      %1014 = vmatpush2.msra.mxu0 0.0
      %1015 = vmatprep.subr.mxu0 0.0
      %1016 = vmatpush2.msra.mxu0 0.0
      %1017 = vmatprep.subr.mxu0 0.0
      %1018 = vmatpush2.msra.mxu0 0.0
      %1019 = vmatprep.subr.mxu0 0.0
      %1020 = vmatpush2.msra.mxu0 0.0
      %1021 = vmatprep.subr.mxu0 0.0
      %1022 = vmatpush2.msra.mxu0 0.0
      %1023 = vmatprep.subr.mxu0 0.0
      %1024 = vmatpush2.msra.mxu0 0.0
      %1025 = vmatprep.subr.mxu0 0.0
      %1026 = vmatpush2.msra.mxu0 0.0
      %1027 = vmatprep.subr.mxu0 0.0
      %1028 = vmatpush2.msra.mxu0 0.0
      %1029 = vmatprep.mubr.f32.mxu0 0.0
      %1030 = vmatmul.mubr.f32.gmra.mxu0 %v409
      %v1031 = vpop.f32.mrf.mxu0
      %v1032 = vadd.f32 %v380, %v1031
      %v1033 = vpop.f32.mrf.mxu0
      %1034 = vmatprep.mubr.f32.mxu0 0.0
      %1035 = vmatmul.mubr.f32.gmra.mxu0 %v412
      %v1036 = vpop.f32.mrf.mxu0
      %v1037 = vadd.f32 %v385, %v1036
      %v1038 = vpop.f32.mrf.mxu0
      %1039 = vmatprep.mubr.f32.mxu0 0.0
      %1040 = vmatmul.mubr.f32.gmra.mxu0 %v415
      %v1041 = vpop.f32.mrf.mxu0
      %v1042 = vadd.f32 %v390, %v1041
      %v1043 = vpop.f32.mrf.mxu0
      %1044 = vmatprep.mubr.f32.mxu0 0.0
      %1045 = vmatmul.mubr.f32.gmra.mxu0 %v418
      %v1046 = vpop.f32.mrf.mxu0
      %v1047 = vadd.f32 %v395, %v1046
      %v1048 = vpop.f32.mrf.mxu0
      %1049 = vmatprep.mubr.f32.mxu0 0.0
      %1050 = vmatmul.mubr.f32.gmra.mxu0 %v421
      %v1051 = vpop.f32.mrf.mxu0
      %v1052 = vadd.f32 %v400, %v1051
      %v1053 = vpop.f32.mrf.mxu0
      %1054 = vmatprep.mubr.f32.mxu0 0.0
      %1055 = vmatmul.mubr.f32.gmra.mxu0 %v424
      %v1056 = vpop.f32.mrf.mxu0
      %v1057 = vadd.f32 %v405, %v1056
      %v1058 = vpop.f32.mrf.mxu0
      %1059 = vdwg.mxu0
      %v1060 = vpack.c.bf16 %v1037, %v1032
      %v1061 = vpack.c.bf16 %v1047, %v1042
      %v1062 = vpack.c.bf16 %v1057, %v1052
      %v1066 = vunpack.c.l.b16 %v1060
      %v1067 = vunpack.c.h.b16 %v1060
      %v1068 = vunpack.c.l.b16 %v1061
      %v1069 = vunpack.c.h.b16 %v1061
      %v1070 = vunpack.c.l.b16 %v1062
      %v1071 = vunpack.c.h.b16 %v1062
      %v1072 = vpack.c.b16 %v1066, %v1066
      %v1073 = vpack.c.b16 %v1067, %v1067
      %v1074 = vpack.c.b16 %v1068, %v1068
      %v1075 = vpack.c.b16 %v1069, %v1069
      %v1076 = vpack.c.b16 %v1070, %v1070
      %v1077 = vpack.c.b16 %v1071, %v1071
      %1084 = vst.msk [vmem:[%s219 + $0x4] sm:$0xf] %vm548, %v1072
      %1085 = vst.msk [vmem:[%s219 + $0x14] sm:$0xf] %vm548, %v1073
      %1086 = vst.msk [vmem:[%s219 + $0x24] sm:$0xf] %vm548, %v1074
      %1087 = vst.msk [vmem:[%s219 + $0x34] sm:$0xf] %vm548, %v1075
      %1088 = vst.msk [vmem:[%s219 + $0x44] sm:$0xf] %vm548, %v1076
      %1089 = vst.msk [vmem:[%s219 + $0x54] sm:$0xf] %vm548, %v1077
      %v1090 = vld [vmem:[%s210 + $0x3] sm:$0x1]
      %v1091 = vld [vmem:[%s210 + $0x4] sm:$0x1]
      %v1092 = vld [vmem:[%s210 + $0x5] sm:$0x1]
      %v1094 = vrot.slane %v1090, 7
      %1095 = vrot.lane.b32.xlu0 %v1094, 127
      %v1096 = vpop.permute.xlu0 %1095
      %v1098 = vrot.slane %v1090, 6
      %1099 = vrot.lane.b32.xlu0 %v1098, 126
      %v1100 = vpop.permute.xlu0 %1099
      %v1102 = vrot.slane %v1090, 5
      %1103 = vrot.lane.b32.xlu0 %v1102, 120
      %v1104 = vpop.permute.xlu0 %1103
      %v1106 = vrot.slane %v1090, 4
      %1107 = vrot.lane.b32.xlu0 %v1106, 119
      %v1108 = vpop.permute.xlu0 %1107
      %v1110 = vrot.slane %v1090, 3
      %1111 = vrot.lane.b32.xlu0 %v1110, 118
      %v1112 = vpop.permute.xlu0 %1111
      %v1114 = vrot.slane %v1090, 2
      %1115 = vrot.lane.b32.xlu0 %v1114, 112
      %v1116 = vpop.permute.xlu0 %1115
      %v1118 = vrot.slane %v1090, 1
      %1119 = vrot.lane.b32.xlu0 %v1118, 111
      %v1120 = vpop.permute.xlu0 %1119
      %1122 = vrot.lane.b32.xlu0 %v1090, 110
      %v1123 = vpop.permute.xlu0 %1122
      %v1126 = vrot.slane %v1091, 7
      %v1128 = vrot.slane %v1091, 6
      %1129 = vrot.lane.b32.xlu0 %v1128, 127
      %v1130 = vpop.permute.xlu0 %1129
      %v1132 = vrot.slane %v1091, 5
      %1133 = vrot.lane.b32.xlu0 %v1132, 126
      %v1134 = vpop.permute.xlu0 %1133
      %v1136 = vrot.slane %v1091, 4
      %1137 = vrot.lane.b32.xlu0 %v1136, 120
      %v1138 = vpop.permute.xlu0 %1137
      %v1140 = vrot.slane %v1091, 3
      %1141 = vrot.lane.b32.xlu0 %v1140, 119
      %v1142 = vpop.permute.xlu0 %1141
      %v1144 = vrot.slane %v1091, 2
      %1145 = vrot.lane.b32.xlu0 %v1144, 118
      %v1146 = vpop.permute.xlu0 %1145
      %v1148 = vrot.slane %v1091, 1
      %1149 = vrot.lane.b32.xlu0 %v1148, 112
      %v1150 = vpop.permute.xlu0 %1149
      %v1152 = vsel %vm299, %v1090, %v1096
      %v1153 = vsel %vm301, %v1152, %v1100
      %v1154 = vsel %vm303, %v1153, %v1104
      %v1155 = vsel %vm305, %v1154, %v1108
      %v1156 = vsel %vm307, %v1155, %v1112
      %v1157 = vsel %vm309, %v1156, %v1116
      %v1158 = vsel %vm311, %v1157, %v1120
      %v1159 = vsel %vm299, %v1123, %v1126
      %v1160 = vsel %vm301, %v1159, %v1130
      %v1161 = vsel %vm303, %v1160, %v1134
      %v1162 = vsel %vm305, %v1161, %v1138
      %v1163 = vsel %vm307, %v1162, %v1142
      %v1164 = vsel %vm309, %v1163, %v1146
      %v1165 = vsel %vm311, %v1164, %v1150
      %1166 = vrot.lane.b32.xlu0 %v1126, 127
      %v1167 = vpop.permute.xlu0 %1166
      %v1170 = vrot.slane %v1092, 6
      %1171 = vrot.lane.b32.xlu0 %v1170, 17
      %v1172 = vpop.permute.xlu0 %1171
      %v1174 = vrot.slane %v1092, 5
      %1175 = vrot.lane.b32.xlu0 %v1174, 16
      %v1176 = vpop.permute.xlu0 %1175
      %v1178 = vrot.slane %v1092, 4
      %1179 = vrot.lane.b32.xlu0 %v1178, 15
      %v1180 = vpop.permute.xlu0 %1179
      %v1182 = vrot.slane %v1092, 3
      %1183 = vrot.lane.b32.xlu0 %v1182, 9
      %v1184 = vpop.permute.xlu0 %1183
      %v1186 = vrot.slane %v1092, 2
      %1187 = vrot.lane.b32.xlu0 %v1186, 8
      %v1188 = vpop.permute.xlu0 %1187
      %v1190 = vrot.slane %v1092, 1
      %1191 = vrot.lane.b32.xlu0 %v1190, 7
      %v1192 = vpop.permute.xlu0 %1191
      %1194 = vrot.lane.b32.xlu0 %v1092, 1
      %v1195 = vpop.permute.xlu0 %1194
      %v1197 = vrot.slane %v1092, 7
      %1199 = vrot.lane.b32.xlu0 %v1170, 127
      %v1200 = vpop.permute.xlu0 %1199
      %v1202 = vsel %vm299, %v1091, %v1167
      %v1203 = vsel %vm301, %v1202, %v1172
      %v1204 = vsel %vm303, %v1203, %v1176
      %v1205 = vsel %vm305, %v1204, %v1180
      %v1206 = vsel %vm307, %v1205, %v1184
      %v1207 = vsel %vm309, %v1206, %v1188
      %v1208 = vsel %vm311, %v1207, %v1192
      %v1209 = vsel %vm299, %v1195, %v1197
      %v1210 = vsel %vm301, %v1209, %v1200
      %1213 = vrot.lane.b32.xlu0 %v1208, 111
      %v1214 = vpop.permute.xlu0 %1213
      %1215 = vrot.lane.b32.xlu0 %v1210, 111
      %v1216 = vpop.permute.xlu0 %1215
      %v1219 = vmul.f32 %v1158, %v221
      %v1220 = vmul.f32 %v1165, %v222
      %v1221 = vmul.f32 %v1214, %v223
      %v1222 = vmul.f32 %v1216, %v224
      %v1224 = vsel %vm303, %v1222, 0
      %1226 = vmatprep.subr.mxu0 0.0
      %1227 = vmatpush1.msra.mxu0 0.0
      %1228 = vmatprep.subr.mxu0 0.0
      %1229 = vmatpush1.msra.mxu0 0.0
      %1230 = vmatprep.subr.mxu0 0.0
      %1231 = vmatpush1.msra.mxu0 0.0
      %1232 = vmatprep.subr.mxu0 0.0
      %1233 = vmatpush1.msra.mxu0 0.0
      %1234 = vmatprep.subr.mxu0 0.0
      %1235 = vmatpush1.msra.mxu0 0.0
      %1236 = vmatprep.subr.mxu0 0.0
      %1237 = vmatpush1.msra.mxu0 0.0
      %1238 = vmatprep.subr.mxu0 0.0
      %1239 = vmatpush1.msra.mxu0 0.0
      %1240 = vmatprep.subr.mxu0 0.0
      %1241 = vmatpush1.msra.mxu0 0.0
      %1242 = vmatprep.subr.mxu0 0.0
      %1243 = vmatpush1.msra.mxu0 0.0
      %1244 = vmatprep.subr.mxu0 0.0
      %1245 = vmatpush1.msra.mxu0 0.0
      %1246 = vmatprep.subr.mxu0 0.0
      %1247 = vmatpush1.msra.mxu0 0.0
      %1248 = vmatprep.subr.mxu0 0.0
      %1249 = vmatpush1.msra.mxu0 0.0
      %1250 = vmatprep.subr.mxu0 0.0
      %1251 = vmatpush1.msra.mxu0 %v1224
      %1252 = vmatprep.subr.mxu0 0.0
      %1253 = vmatpush1.msra.mxu0 %v1221
      %1254 = vmatprep.subr.mxu0 0.0
      %1255 = vmatpush1.msra.mxu0 %v1220
      %1256 = vmatprep.subr.mxu0 0.0
      %1257 = vmatpush1.msra.mxu0 %v1219
      %1258 = vmatprep.subr.mxu0 0.0
      %1259 = vmatpush2.msra.mxu0 0.0
      %1260 = vmatprep.subr.mxu0 0.0
      %1261 = vmatpush2.msra.mxu0 0.0
      %1262 = vmatprep.subr.mxu0 0.0
      %1263 = vmatpush2.msra.mxu0 0.0
      %1264 = vmatprep.subr.mxu0 0.0
      %1265 = vmatpush2.msra.mxu0 0.0
      %1266 = vmatprep.subr.mxu0 0.0
      %1267 = vmatpush2.msra.mxu0 0.0
      %1268 = vmatprep.subr.mxu0 0.0
      %1269 = vmatpush2.msra.mxu0 0.0
      %1270 = vmatprep.subr.mxu0 0.0
      %1271 = vmatpush2.msra.mxu0 0.0
      %1272 = vmatprep.subr.mxu0 0.0
      %1273 = vmatpush2.msra.mxu0 0.0
      %1274 = vmatprep.subr.mxu0 0.0
      %1275 = vmatpush2.msra.mxu0 0.0
      %1276 = vmatprep.subr.mxu0 0.0
      %1277 = vmatpush2.msra.mxu0 0.0
      %1278 = vmatprep.subr.mxu0 0.0
      %1279 = vmatpush2.msra.mxu0 0.0
      %1280 = vmatprep.subr.mxu0 0.0
      %1281 = vmatpush2.msra.mxu0 0.0
      %1282 = vmatprep.subr.mxu0 0.0
      %1283 = vmatpush2.msra.mxu0 0.0
      %1284 = vmatprep.subr.mxu0 0.0
      %1285 = vmatpush2.msra.mxu0 0.0
      %1286 = vmatprep.subr.mxu0 0.0
      %1287 = vmatpush2.msra.mxu0 0.0
      %1288 = vmatprep.subr.mxu0 0.0
      %1289 = vmatpush2.msra.mxu0 0.0
      %1290 = vmatprep.mubr.f32.mxu0 0.0
      %1291 = vmatmul.mubr.f32.gmra.mxu0 %v409
      %v1292 = vpop.f32.mrf.mxu0
      %v1293 = vadd.f32 %v380, %v1292
      %v1294 = vpop.f32.mrf.mxu0
      %1295 = vmatprep.mubr.f32.mxu0 0.0
      %1296 = vmatmul.mubr.f32.gmra.mxu0 %v412
      %v1297 = vpop.f32.mrf.mxu0
      %v1298 = vadd.f32 %v385, %v1297
      %v1299 = vpop.f32.mrf.mxu0
      %1300 = vmatprep.mubr.f32.mxu0 0.0
      %1301 = vmatmul.mubr.f32.gmra.mxu0 %v415
      %v1302 = vpop.f32.mrf.mxu0
      %v1303 = vadd.f32 %v390, %v1302
      %v1304 = vpop.f32.mrf.mxu0
      %1305 = vmatprep.mubr.f32.mxu0 0.0
      %1306 = vmatmul.mubr.f32.gmra.mxu0 %v418
      %v1307 = vpop.f32.mrf.mxu0
      %v1308 = vadd.f32 %v395, %v1307
      %v1309 = vpop.f32.mrf.mxu0
      %1310 = vmatprep.mubr.f32.mxu0 0.0
      %1311 = vmatmul.mubr.f32.gmra.mxu0 %v421
      %v1312 = vpop.f32.mrf.mxu0
      %v1313 = vadd.f32 %v400, %v1312
      %v1314 = vpop.f32.mrf.mxu0
      %1315 = vmatprep.mubr.f32.mxu0 0.0
      %1316 = vmatmul.mubr.f32.gmra.mxu0 %v424
      %v1317 = vpop.f32.mrf.mxu0
      %v1318 = vadd.f32 %v405, %v1317
      %v1319 = vpop.f32.mrf.mxu0
      %1320 = vdwg.mxu0
      %v1321 = vpack.c.bf16 %v1298, %v1293
      %v1322 = vpack.c.bf16 %v1308, %v1303
      %v1323 = vpack.c.bf16 %v1318, %v1313
      %v1327 = vunpack.c.l.b16 %v1321
      %v1328 = vunpack.c.h.b16 %v1321
      %v1329 = vunpack.c.l.b16 %v1322
      %v1330 = vunpack.c.h.b16 %v1322
      %v1331 = vunpack.c.l.b16 %v1323
      %v1332 = vunpack.c.h.b16 %v1323
      %v1333 = vpack.c.b16 %v1327, %v1327
      %v1334 = vpack.c.b16 %v1328, %v1328
      %v1335 = vpack.c.b16 %v1329, %v1329
      %v1336 = vpack.c.b16 %v1330, %v1330
      %v1337 = vpack.c.b16 %v1331, %v1331
      %v1338 = vpack.c.b16 %v1332, %v1332
      %1339 = vrot.lane.b32.xlu0 %v1333, 64
      %v1340 = vpop.permute.xlu0 %1339
      %1341 = vrot.lane.b32.xlu0 %v1334, 64
      %v1342 = vpop.permute.xlu0 %1341
      %1343 = vrot.lane.b32.xlu0 %v1335, 64
      %v1344 = vpop.permute.xlu0 %1343
      %1345 = vrot.lane.b32.xlu0 %v1336, 64
      %v1346 = vpop.permute.xlu0 %1345
      %1347 = vrot.lane.b32.xlu0 %v1337, 64
      %v1348 = vpop.permute.xlu0 %1347
      %1349 = vrot.lane.b32.xlu0 %v1338, 64
      %v1350 = vpop.permute.xlu0 %1349
      %1357 = vst.msk [vmem:[%s219 + $0x4] sm:$0xf] %vm822, %v1340
      %1358 = vst.msk [vmem:[%s219 + $0x14] sm:$0xf] %vm822, %v1342
      %1359 = vst.msk [vmem:[%s219 + $0x24] sm:$0xf] %vm822, %v1344
      %1360 = vst.msk [vmem:[%s219 + $0x34] sm:$0xf] %vm822, %v1346
      %1361 = vst.msk [vmem:[%s219 + $0x44] sm:$0xf] %vm822, %v1348
      %1362 = vst.msk [vmem:[%s219 + $0x54] sm:$0xf] %vm822, %v1350
      %v1363 = vld [vmem:[%s210 + $0x4] sm:$0x1]
      %v1364 = vld [vmem:[%s210 + $0x5] sm:$0x1]
      %v1365 = vld [vmem:[%s210 + $0x6] sm:$0x1]
      %v1367 = vrot.slane %v1363, 7
      %1368 = vrot.lane.b32.xlu0 %v1367, 127
      %v1369 = vpop.permute.xlu0 %1368
      %v1371 = vrot.slane %v1363, 6
      %1372 = vrot.lane.b32.xlu0 %v1371, 126
      %v1373 = vpop.permute.xlu0 %1372
      %v1375 = vrot.slane %v1363, 5
      %1376 = vrot.lane.b32.xlu0 %v1375, 120
      %v1377 = vpop.permute.xlu0 %1376
      %v1379 = vrot.slane %v1363, 4
      %1380 = vrot.lane.b32.xlu0 %v1379, 119
      %v1381 = vpop.permute.xlu0 %1380
      %v1383 = vrot.slane %v1363, 3
      %1384 = vrot.lane.b32.xlu0 %v1383, 118
      %v1385 = vpop.permute.xlu0 %1384
      %v1387 = vrot.slane %v1363, 2
      %1388 = vrot.lane.b32.xlu0 %v1387, 112
      %v1389 = vpop.permute.xlu0 %1388
      %v1391 = vrot.slane %v1363, 1
      %1392 = vrot.lane.b32.xlu0 %v1391, 111
      %v1393 = vpop.permute.xlu0 %1392
      %1395 = vrot.lane.b32.xlu0 %v1363, 110
      %v1396 = vpop.permute.xlu0 %1395
      %v1399 = vrot.slane %v1364, 7
      %v1401 = vrot.slane %v1364, 6
      %1402 = vrot.lane.b32.xlu0 %v1401, 127
      %v1403 = vpop.permute.xlu0 %1402
      %v1405 = vrot.slane %v1364, 5
      %1406 = vrot.lane.b32.xlu0 %v1405, 126
      %v1407 = vpop.permute.xlu0 %1406
      %v1409 = vrot.slane %v1364, 4
      %1410 = vrot.lane.b32.xlu0 %v1409, 120
      %v1411 = vpop.permute.xlu0 %1410
      %v1413 = vrot.slane %v1364, 3
      %1414 = vrot.lane.b32.xlu0 %v1413, 119
      %v1415 = vpop.permute.xlu0 %1414
      %v1417 = vrot.slane %v1364, 2
      %1418 = vrot.lane.b32.xlu0 %v1417, 118
      %v1419 = vpop.permute.xlu0 %1418
      %v1421 = vrot.slane %v1364, 1
      %1422 = vrot.lane.b32.xlu0 %v1421, 112
      %v1423 = vpop.permute.xlu0 %1422
      %v1425 = vsel %vm299, %v1363, %v1369
      %v1426 = vsel %vm301, %v1425, %v1373
      %v1427 = vsel %vm303, %v1426, %v1377
      %v1428 = vsel %vm305, %v1427, %v1381
      %v1429 = vsel %vm307, %v1428, %v1385
      %v1430 = vsel %vm309, %v1429, %v1389
      %v1431 = vsel %vm311, %v1430, %v1393
      %v1432 = vsel %vm299, %v1396, %v1399
      %v1433 = vsel %vm301, %v1432, %v1403
      %v1434 = vsel %vm303, %v1433, %v1407
      %v1435 = vsel %vm305, %v1434, %v1411
      %v1436 = vsel %vm307, %v1435, %v1415
      %v1437 = vsel %vm309, %v1436, %v1419
      %v1438 = vsel %vm311, %v1437, %v1423
      %1439 = vrot.lane.b32.xlu0 %v1399, 127
      %v1440 = vpop.permute.xlu0 %1439
      %v1443 = vrot.slane %v1365, 6
      %1444 = vrot.lane.b32.xlu0 %v1443, 17
      %v1445 = vpop.permute.xlu0 %1444
      %v1447 = vrot.slane %v1365, 5
      %1448 = vrot.lane.b32.xlu0 %v1447, 16
      %v1449 = vpop.permute.xlu0 %1448
      %v1451 = vrot.slane %v1365, 4
      %1452 = vrot.lane.b32.xlu0 %v1451, 15
      %v1453 = vpop.permute.xlu0 %1452
      %v1455 = vrot.slane %v1365, 3
      %1456 = vrot.lane.b32.xlu0 %v1455, 9
      %v1457 = vpop.permute.xlu0 %1456
      %v1459 = vrot.slane %v1365, 2
      %1460 = vrot.lane.b32.xlu0 %v1459, 8
      %v1461 = vpop.permute.xlu0 %1460
      %v1463 = vrot.slane %v1365, 1
      %1464 = vrot.lane.b32.xlu0 %v1463, 7
      %v1465 = vpop.permute.xlu0 %1464
      %1467 = vrot.lane.b32.xlu0 %v1365, 1
      %v1468 = vpop.permute.xlu0 %1467
      %v1470 = vrot.slane %v1365, 7
      %1472 = vrot.lane.b32.xlu0 %v1443, 127
      %v1473 = vpop.permute.xlu0 %1472
      %v1475 = vsel %vm299, %v1364, %v1440
      %v1476 = vsel %vm301, %v1475, %v1445
      %v1477 = vsel %vm303, %v1476, %v1449
      %v1478 = vsel %vm305, %v1477, %v1453
      %v1479 = vsel %vm307, %v1478, %v1457
      %v1480 = vsel %vm309, %v1479, %v1461
      %v1481 = vsel %vm311, %v1480, %v1465
      %v1482 = vsel %vm299, %v1468, %v1470
      %v1483 = vsel %vm301, %v1482, %v1473
      %1486 = vrot.lane.b32.xlu0 %v1481, 111
      %v1487 = vpop.permute.xlu0 %1486
      %1488 = vrot.lane.b32.xlu0 %v1483, 111
      %v1489 = vpop.permute.xlu0 %1488
      %v1492 = vmul.f32 %v1431, %v221
      %v1493 = vmul.f32 %v1438, %v222
      %v1494 = vmul.f32 %v1487, %v223
      %v1495 = vmul.f32 %v1489, %v224
      %v1497 = vsel %vm303, %v1495, 0
      %1499 = vmatprep.subr.mxu0 0.0
      %1500 = vmatpush1.msra.mxu0 0.0
      %1501 = vmatprep.subr.mxu0 0.0
      %1502 = vmatpush1.msra.mxu0 0.0
      %1503 = vmatprep.subr.mxu0 0.0
      %1504 = vmatpush1.msra.mxu0 0.0
      %1505 = vmatprep.subr.mxu0 0.0
      %1506 = vmatpush1.msra.mxu0 0.0
      %1507 = vmatprep.subr.mxu0 0.0
      %1508 = vmatpush1.msra.mxu0 0.0
      %1509 = vmatprep.subr.mxu0 0.0
      %1510 = vmatpush1.msra.mxu0 0.0
      %1511 = vmatprep.subr.mxu0 0.0
      %1512 = vmatpush1.msra.mxu0 0.0
      %1513 = vmatprep.subr.mxu0 0.0
      %1514 = vmatpush1.msra.mxu0 0.0
      %1515 = vmatprep.subr.mxu0 0.0
      %1516 = vmatpush1.msra.mxu0 0.0
      %1517 = vmatprep.subr.mxu0 0.0
      %1518 = vmatpush1.msra.mxu0 0.0
      %1519 = vmatprep.subr.mxu0 0.0
      %1520 = vmatpush1.msra.mxu0 0.0
      %1521 = vmatprep.subr.mxu0 0.0
      %1522 = vmatpush1.msra.mxu0 0.0
      %1523 = vmatprep.subr.mxu0 0.0
      %1524 = vmatpush1.msra.mxu0 %v1497
      %1525 = vmatprep.subr.mxu0 0.0
      %1526 = vmatpush1.msra.mxu0 %v1494
      %1527 = vmatprep.subr.mxu0 0.0
      %1528 = vmatpush1.msra.mxu0 %v1493
      %1529 = vmatprep.subr.mxu0 0.0
      %1530 = vmatpush1.msra.mxu0 %v1492
      %1531 = vmatprep.subr.mxu0 0.0
      %1532 = vmatpush2.msra.mxu0 0.0
      %1533 = vmatprep.subr.mxu0 0.0
      %1534 = vmatpush2.msra.mxu0 0.0
      %1535 = vmatprep.subr.mxu0 0.0
      %1536 = vmatpush2.msra.mxu0 0.0
      %1537 = vmatprep.subr.mxu0 0.0
      %1538 = vmatpush2.msra.mxu0 0.0
      %1539 = vmatprep.subr.mxu0 0.0
      %1540 = vmatpush2.msra.mxu0 0.0
      %1541 = vmatprep.subr.mxu0 0.0
      %1542 = vmatpush2.msra.mxu0 0.0
      %1543 = vmatprep.subr.mxu0 0.0
      %1544 = vmatpush2.msra.mxu0 0.0
      %1545 = vmatprep.subr.mxu0 0.0
      %1546 = vmatpush2.msra.mxu0 0.0
      %1547 = vmatprep.subr.mxu0 0.0
      %1548 = vmatpush2.msra.mxu0 0.0
      %1549 = vmatprep.subr.mxu0 0.0
      %1550 = vmatpush2.msra.mxu0 0.0
      %1551 = vmatprep.subr.mxu0 0.0
      %1552 = vmatpush2.msra.mxu0 0.0
      %1553 = vmatprep.subr.mxu0 0.0
      %1554 = vmatpush2.msra.mxu0 0.0
      %1555 = vmatprep.subr.mxu0 0.0
      %1556 = vmatpush2.msra.mxu0 0.0
      %1557 = vmatprep.subr.mxu0 0.0
      %1558 = vmatpush2.msra.mxu0 0.0
      %1559 = vmatprep.subr.mxu0 0.0
      %1560 = vmatpush2.msra.mxu0 0.0
      %1561 = vmatprep.subr.mxu0 0.0
      %1562 = vmatpush2.msra.mxu0 0.0
      %1563 = vmatprep.mubr.f32.mxu0 0.0
      %1564 = vmatmul.mubr.f32.gmra.mxu0 %v409
      %v1565 = vpop.f32.mrf.mxu0
      %v1566 = vadd.f32 %v380, %v1565
      %v1567 = vpop.f32.mrf.mxu0
      %1568 = vmatprep.mubr.f32.mxu0 0.0
      %1569 = vmatmul.mubr.f32.gmra.mxu0 %v412
      %v1570 = vpop.f32.mrf.mxu0
      %v1571 = vadd.f32 %v385, %v1570
      %v1572 = vpop.f32.mrf.mxu0
      %1573 = vmatprep.mubr.f32.mxu0 0.0
      %1574 = vmatmul.mubr.f32.gmra.mxu0 %v415
      %v1575 = vpop.f32.mrf.mxu0
      %v1576 = vadd.f32 %v390, %v1575
      %v1577 = vpop.f32.mrf.mxu0
      %1578 = vmatprep.mubr.f32.mxu0 0.0
      %1579 = vmatmul.mubr.f32.gmra.mxu0 %v418
      %v1580 = vpop.f32.mrf.mxu0
      %v1581 = vadd.f32 %v395, %v1580
      %v1582 = vpop.f32.mrf.mxu0
      %1583 = vmatprep.mubr.f32.mxu0 0.0
      %1584 = vmatmul.mubr.f32.gmra.mxu0 %v421
      %v1585 = vpop.f32.mrf.mxu0
      %v1586 = vadd.f32 %v400, %v1585
      %v1587 = vpop.f32.mrf.mxu0
      %1588 = vmatprep.mubr.f32.mxu0 0.0
      %1589 = vmatmul.mubr.f32.gmra.mxu0 %v424
      %v1590 = vpop.f32.mrf.mxu0
      %v1591 = vadd.f32 %v405, %v1590
      %v1592 = vpop.f32.mrf.mxu0
      %1593 = vdwg.mxu0
      %v1594 = vpack.c.bf16 %v1571, %v1566
      %v1595 = vpack.c.bf16 %v1581, %v1576
      %v1596 = vpack.c.bf16 %v1591, %v1586
      %v1600 = vunpack.c.l.b16 %v1594
      %v1601 = vunpack.c.h.b16 %v1594
      %v1602 = vunpack.c.l.b16 %v1595
      %v1603 = vunpack.c.h.b16 %v1595
      %v1604 = vunpack.c.l.b16 %v1596
      %v1605 = vunpack.c.h.b16 %v1596
      %v1606 = vpack.c.b16 %v1600, %v1600
      %v1607 = vpack.c.b16 %v1601, %v1601
      %v1608 = vpack.c.b16 %v1602, %v1602
      %v1609 = vpack.c.b16 %v1603, %v1603
      %v1610 = vpack.c.b16 %v1604, %v1604
      %v1611 = vpack.c.b16 %v1605, %v1605
      %1618 = vst.msk [vmem:[%s219 + $0x8] sm:$0xf] %vm548, %v1606
      %1619 = vst.msk [vmem:[%s219 + $0x18] sm:$0xf] %vm548, %v1607
      %1620 = vst.msk [vmem:[%s219 + $0x28] sm:$0xf] %vm548, %v1608
      %1621 = vst.msk [vmem:[%s219 + $0x38] sm:$0xf] %vm548, %v1609
      %1622 = vst.msk [vmem:[%s219 + $0x48] sm:$0xf] %vm548, %v1610
      %1623 = vst.msk [vmem:[%s219 + $0x58] sm:$0xf] %vm548, %v1611
      %v1624 = vld [vmem:[%s210 + $0x5] sm:$0x1]
      %v1625 = vld [vmem:[%s210 + $0x6] sm:$0x1]
      %v1626 = vld [vmem:[%s210 + $0x7] sm:$0x1]
      %v1628 = vrot.slane %v1624, 7
      %1629 = vrot.lane.b32.xlu0 %v1628, 127
      %v1630 = vpop.permute.xlu0 %1629
      %v1632 = vrot.slane %v1624, 6
      %1633 = vrot.lane.b32.xlu0 %v1632, 126
      %v1634 = vpop.permute.xlu0 %1633
      %v1636 = vrot.slane %v1624, 5
      %1637 = vrot.lane.b32.xlu0 %v1636, 120
      %v1638 = vpop.permute.xlu0 %1637
      %v1640 = vrot.slane %v1624, 4
      %1641 = vrot.lane.b32.xlu0 %v1640, 119
      %v1642 = vpop.permute.xlu0 %1641
      %v1644 = vrot.slane %v1624, 3
      %1645 = vrot.lane.b32.xlu0 %v1644, 118
      %v1646 = vpop.permute.xlu0 %1645
      %v1648 = vrot.slane %v1624, 2
      %1649 = vrot.lane.b32.xlu0 %v1648, 112
      %v1650 = vpop.permute.xlu0 %1649
      %v1652 = vrot.slane %v1624, 1
      %1653 = vrot.lane.b32.xlu0 %v1652, 111
      %v1654 = vpop.permute.xlu0 %1653
      %1656 = vrot.lane.b32.xlu0 %v1624, 110
      %v1657 = vpop.permute.xlu0 %1656
      %v1660 = vrot.slane %v1625, 7
      %v1662 = vrot.slane %v1625, 6
      %1663 = vrot.lane.b32.xlu0 %v1662, 127
      %v1664 = vpop.permute.xlu0 %1663
      %v1666 = vrot.slane %v1625, 5
      %1667 = vrot.lane.b32.xlu0 %v1666, 126
      %v1668 = vpop.permute.xlu0 %1667
      %v1670 = vrot.slane %v1625, 4
      %1671 = vrot.lane.b32.xlu0 %v1670, 120
      %v1672 = vpop.permute.xlu0 %1671
      %v1674 = vrot.slane %v1625, 3
      %1675 = vrot.lane.b32.xlu0 %v1674, 119
      %v1676 = vpop.permute.xlu0 %1675
      %v1678 = vrot.slane %v1625, 2
      %1679 = vrot.lane.b32.xlu0 %v1678, 118
      %v1680 = vpop.permute.xlu0 %1679
      %v1682 = vrot.slane %v1625, 1
      %1683 = vrot.lane.b32.xlu0 %v1682, 112
      %v1684 = vpop.permute.xlu0 %1683
      %v1686 = vsel %vm299, %v1624, %v1630
      %v1687 = vsel %vm301, %v1686, %v1634
      %v1688 = vsel %vm303, %v1687, %v1638
      %v1689 = vsel %vm305, %v1688, %v1642
      %v1690 = vsel %vm307, %v1689, %v1646
      %v1691 = vsel %vm309, %v1690, %v1650
      %v1692 = vsel %vm311, %v1691, %v1654
      %v1693 = vsel %vm299, %v1657, %v1660
      %v1694 = vsel %vm301, %v1693, %v1664
      %v1695 = vsel %vm303, %v1694, %v1668
      %v1696 = vsel %vm305, %v1695, %v1672
      %v1697 = vsel %vm307, %v1696, %v1676
      %v1698 = vsel %vm309, %v1697, %v1680
      %v1699 = vsel %vm311, %v1698, %v1684
      %1700 = vrot.lane.b32.xlu0 %v1660, 127
      %v1701 = vpop.permute.xlu0 %1700
      %v1704 = vrot.slane %v1626, 6
      %1705 = vrot.lane.b32.xlu0 %v1704, 17
      %v1706 = vpop.permute.xlu0 %1705
      %v1708 = vrot.slane %v1626, 5
      %1709 = vrot.lane.b32.xlu0 %v1708, 16
      %v1710 = vpop.permute.xlu0 %1709
      %v1712 = vrot.slane %v1626, 4
      %1713 = vrot.lane.b32.xlu0 %v1712, 15
      %v1714 = vpop.permute.xlu0 %1713
      %v1716 = vrot.slane %v1626, 3
      %1717 = vrot.lane.b32.xlu0 %v1716, 9
      %v1718 = vpop.permute.xlu0 %1717
      %v1720 = vrot.slane %v1626, 2
      %1721 = vrot.lane.b32.xlu0 %v1720, 8
      %v1722 = vpop.permute.xlu0 %1721
      %v1724 = vrot.slane %v1626, 1
      %1725 = vrot.lane.b32.xlu0 %v1724, 7
      %v1726 = vpop.permute.xlu0 %1725
      %1728 = vrot.lane.b32.xlu0 %v1626, 1
      %v1729 = vpop.permute.xlu0 %1728
      %v1731 = vrot.slane %v1626, 7
      %1733 = vrot.lane.b32.xlu0 %v1704, 127
      %v1734 = vpop.permute.xlu0 %1733
      %v1736 = vsel %vm299, %v1625, %v1701
      %v1737 = vsel %vm301, %v1736, %v1706
      %v1738 = vsel %vm303, %v1737, %v1710
      %v1739 = vsel %vm305, %v1738, %v1714
      %v1740 = vsel %vm307, %v1739, %v1718
      %v1741 = vsel %vm309, %v1740, %v1722
      %v1742 = vsel %vm311, %v1741, %v1726
      %v1743 = vsel %vm299, %v1729, %v1731
      %v1744 = vsel %vm301, %v1743, %v1734
      %1747 = vrot.lane.b32.xlu0 %v1742, 111
      %v1748 = vpop.permute.xlu0 %1747
      %1749 = vrot.lane.b32.xlu0 %v1744, 111
      %v1750 = vpop.permute.xlu0 %1749
      %v1753 = vmul.f32 %v1692, %v221
      %v1754 = vmul.f32 %v1699, %v222
      %v1755 = vmul.f32 %v1748, %v223
      %v1756 = vmul.f32 %v1750, %v224
      %v1758 = vsel %vm303, %v1756, 0
      %1760 = vmatprep.subr.mxu0 0.0
      %1761 = vmatpush1.msra.mxu0 0.0
      %1762 = vmatprep.subr.mxu0 0.0
      %1763 = vmatpush1.msra.mxu0 0.0
      %1764 = vmatprep.subr.mxu0 0.0
      %1765 = vmatpush1.msra.mxu0 0.0
      %1766 = vmatprep.subr.mxu0 0.0
      %1767 = vmatpush1.msra.mxu0 0.0
      %1768 = vmatprep.subr.mxu0 0.0
      %1769 = vmatpush1.msra.mxu0 0.0
      %1770 = vmatprep.subr.mxu0 0.0
      %1771 = vmatpush1.msra.mxu0 0.0
      %1772 = vmatprep.subr.mxu0 0.0
      %1773 = vmatpush1.msra.mxu0 0.0
      %1774 = vmatprep.subr.mxu0 0.0
      %1775 = vmatpush1.msra.mxu0 0.0
      %1776 = vmatprep.subr.mxu0 0.0
      %1777 = vmatpush1.msra.mxu0 0.0
      %1778 = vmatprep.subr.mxu0 0.0
      %1779 = vmatpush1.msra.mxu0 0.0
      %1780 = vmatprep.subr.mxu0 0.0
      %1781 = vmatpush1.msra.mxu0 0.0
      %1782 = vmatprep.subr.mxu0 0.0
      %1783 = vmatpush1.msra.mxu0 0.0
      %1784 = vmatprep.subr.mxu0 0.0
      %1785 = vmatpush1.msra.mxu0 %v1758
      %1786 = vmatprep.subr.mxu0 0.0
      %1787 = vmatpush1.msra.mxu0 %v1755
      %1788 = vmatprep.subr.mxu0 0.0
      %1789 = vmatpush1.msra.mxu0 %v1754
      %1790 = vmatprep.subr.mxu0 0.0
      %1791 = vmatpush1.msra.mxu0 %v1753
      %1792 = vmatprep.subr.mxu0 0.0
      %1793 = vmatpush2.msra.mxu0 0.0
      %1794 = vmatprep.subr.mxu0 0.0
      %1795 = vmatpush2.msra.mxu0 0.0
      %1796 = vmatprep.subr.mxu0 0.0
      %1797 = vmatpush2.msra.mxu0 0.0
      %1798 = vmatprep.subr.mxu0 0.0
      %1799 = vmatpush2.msra.mxu0 0.0
      %1800 = vmatprep.subr.mxu0 0.0
      %1801 = vmatpush2.msra.mxu0 0.0
      %1802 = vmatprep.subr.mxu0 0.0
      %1803 = vmatpush2.msra.mxu0 0.0
      %1804 = vmatprep.subr.mxu0 0.0
      %1805 = vmatpush2.msra.mxu0 0.0
      %1806 = vmatprep.subr.mxu0 0.0
      %1807 = vmatpush2.msra.mxu0 0.0
      %1808 = vmatprep.subr.mxu0 0.0
      %1809 = vmatpush2.msra.mxu0 0.0
      %1810 = vmatprep.subr.mxu0 0.0
      %1811 = vmatpush2.msra.mxu0 0.0
      %1812 = vmatprep.subr.mxu0 0.0
      %1813 = vmatpush2.msra.mxu0 0.0
      %1814 = vmatprep.subr.mxu0 0.0
      %1815 = vmatpush2.msra.mxu0 0.0
      %1816 = vmatprep.subr.mxu0 0.0
      %1817 = vmatpush2.msra.mxu0 0.0
      %1818 = vmatprep.subr.mxu0 0.0
      %1819 = vmatpush2.msra.mxu0 0.0
      %1820 = vmatprep.subr.mxu0 0.0
      %1821 = vmatpush2.msra.mxu0 0.0
      %1822 = vmatprep.subr.mxu0 0.0
      %1823 = vmatpush2.msra.mxu0 0.0
      %1824 = vmatprep.mubr.f32.mxu0 0.0
      %1825 = vmatmul.mubr.f32.gmra.mxu0 %v409
      %v1826 = vpop.f32.mrf.mxu0
      %v1827 = vadd.f32 %v380, %v1826
      %v1828 = vpop.f32.mrf.mxu0
      %1829 = vmatprep.mubr.f32.mxu0 0.0
      %1830 = vmatmul.mubr.f32.gmra.mxu0 %v412
      %v1831 = vpop.f32.mrf.mxu0
      %v1832 = vadd.f32 %v385, %v1831
      %v1833 = vpop.f32.mrf.mxu0
      %1834 = vmatprep.mubr.f32.mxu0 0.0
      %1835 = vmatmul.mubr.f32.gmra.mxu0 %v415
      %v1836 = vpop.f32.mrf.mxu0
      %v1837 = vadd.f32 %v390, %v1836
      %v1838 = vpop.f32.mrf.mxu0
      %1839 = vmatprep.mubr.f32.mxu0 0.0
      %1840 = vmatmul.mubr.f32.gmra.mxu0 %v418
      %v1841 = vpop.f32.mrf.mxu0
      %v1842 = vadd.f32 %v395, %v1841
      %v1843 = vpop.f32.mrf.mxu0
      %1844 = vmatprep.mubr.f32.mxu0 0.0
      %1845 = vmatmul.mubr.f32.gmra.mxu0 %v421
      %v1846 = vpop.f32.mrf.mxu0
      %v1847 = vadd.f32 %v400, %v1846
      %v1848 = vpop.f32.mrf.mxu0
      %1849 = vmatprep.mubr.f32.mxu0 0.0
      %1850 = vmatmul.mubr.f32.gmra.mxu0 %v424
      %v1851 = vpop.f32.mrf.mxu0
      %v1852 = vadd.f32 %v405, %v1851
      %v1853 = vpop.f32.mrf.mxu0
      %1854 = vdwg.mxu0
      %v1855 = vpack.c.bf16 %v1832, %v1827
      %v1856 = vpack.c.bf16 %v1842, %v1837
      %v1857 = vpack.c.bf16 %v1852, %v1847
      %v1861 = vunpack.c.l.b16 %v1855
      %v1862 = vunpack.c.h.b16 %v1855
      %v1863 = vunpack.c.l.b16 %v1856
      %v1864 = vunpack.c.h.b16 %v1856
      %v1865 = vunpack.c.l.b16 %v1857
      %v1866 = vunpack.c.h.b16 %v1857
      %v1867 = vpack.c.b16 %v1861, %v1861
      %v1868 = vpack.c.b16 %v1862, %v1862
      %v1869 = vpack.c.b16 %v1863, %v1863
      %v1870 = vpack.c.b16 %v1864, %v1864
      %v1871 = vpack.c.b16 %v1865, %v1865
      %v1872 = vpack.c.b16 %v1866, %v1866
      %1873 = vrot.lane.b32.xlu0 %v1867, 64
      %v1874 = vpop.permute.xlu0 %1873
      %1875 = vrot.lane.b32.xlu0 %v1868, 64
      %v1876 = vpop.permute.xlu0 %1875
      %1877 = vrot.lane.b32.xlu0 %v1869, 64
      %v1878 = vpop.permute.xlu0 %1877
      %1879 = vrot.lane.b32.xlu0 %v1870, 64
      %v1880 = vpop.permute.xlu0 %1879
      %1881 = vrot.lane.b32.xlu0 %v1871, 64
      %v1882 = vpop.permute.xlu0 %1881
      %1883 = vrot.lane.b32.xlu0 %v1872, 64
      %v1884 = vpop.permute.xlu0 %1883
      %1891 = vst.msk [vmem:[%s219 + $0x8] sm:$0xf] %vm822, %v1874
      %1892 = vst.msk [vmem:[%s219 + $0x18] sm:$0xf] %vm822, %v1876
      %1893 = vst.msk [vmem:[%s219 + $0x28] sm:$0xf] %vm822, %v1878
      %1894 = vst.msk [vmem:[%s219 + $0x38] sm:$0xf] %vm822, %v1880
      %1895 = vst.msk [vmem:[%s219 + $0x48] sm:$0xf] %vm822, %v1882
      %1896 = vst.msk [vmem:[%s219 + $0x58] sm:$0xf] %vm822, %v1884
      %v1897 = vld [vmem:[%s210 + $0x6] sm:$0x1]
      %v1898 = vld [vmem:[%s210 + $0x7] sm:$0x1]
      %v1899 = vld [vmem:[%s210 + $0x8] sm:$0x1]
      %v1901 = vrot.slane %v1897, 7
      %1902 = vrot.lane.b32.xlu0 %v1901, 127
      %v1903 = vpop.permute.xlu0 %1902
      %v1905 = vrot.slane %v1897, 6
      %1906 = vrot.lane.b32.xlu0 %v1905, 126
      %v1907 = vpop.permute.xlu0 %1906
      %v1909 = vrot.slane %v1897, 5
      %1910 = vrot.lane.b32.xlu0 %v1909, 120
      %v1911 = vpop.permute.xlu0 %1910
      %v1913 = vrot.slane %v1897, 4
      %1914 = vrot.lane.b32.xlu0 %v1913, 119
      %v1915 = vpop.permute.xlu0 %1914
      %v1917 = vrot.slane %v1897, 3
      %1918 = vrot.lane.b32.xlu0 %v1917, 118
      %v1919 = vpop.permute.xlu0 %1918
      %v1921 = vrot.slane %v1897, 2
      %1922 = vrot.lane.b32.xlu0 %v1921, 112
      %v1923 = vpop.permute.xlu0 %1922
      %v1925 = vrot.slane %v1897, 1
      %1926 = vrot.lane.b32.xlu0 %v1925, 111
      %v1927 = vpop.permute.xlu0 %1926
      %1929 = vrot.lane.b32.xlu0 %v1897, 110
      %v1930 = vpop.permute.xlu0 %1929
      %v1933 = vrot.slane %v1898, 7
      %v1935 = vrot.slane %v1898, 6
      %1936 = vrot.lane.b32.xlu0 %v1935, 127
      %v1937 = vpop.permute.xlu0 %1936
      %v1939 = vrot.slane %v1898, 5
      %1940 = vrot.lane.b32.xlu0 %v1939, 126
      %v1941 = vpop.permute.xlu0 %1940
      %v1943 = vrot.slane %v1898, 4
      %1944 = vrot.lane.b32.xlu0 %v1943, 120
      %v1945 = vpop.permute.xlu0 %1944
      %v1947 = vrot.slane %v1898, 3
      %1948 = vrot.lane.b32.xlu0 %v1947, 119
      %v1949 = vpop.permute.xlu0 %1948
      %v1951 = vrot.slane %v1898, 2
      %1952 = vrot.lane.b32.xlu0 %v1951, 118
      %v1953 = vpop.permute.xlu0 %1952
      %v1955 = vrot.slane %v1898, 1
      %1956 = vrot.lane.b32.xlu0 %v1955, 112
      %v1957 = vpop.permute.xlu0 %1956
      %v1959 = vsel %vm299, %v1897, %v1903
      %v1960 = vsel %vm301, %v1959, %v1907
      %v1961 = vsel %vm303, %v1960, %v1911
      %v1962 = vsel %vm305, %v1961, %v1915
      %v1963 = vsel %vm307, %v1962, %v1919
      %v1964 = vsel %vm309, %v1963, %v1923
      %v1965 = vsel %vm311, %v1964, %v1927
      %v1966 = vsel %vm299, %v1930, %v1933
      %v1967 = vsel %vm301, %v1966, %v1937
      %v1968 = vsel %vm303, %v1967, %v1941
      %v1969 = vsel %vm305, %v1968, %v1945
      %v1970 = vsel %vm307, %v1969, %v1949
      %v1971 = vsel %vm309, %v1970, %v1953
      %v1972 = vsel %vm311, %v1971, %v1957
      %1973 = vrot.lane.b32.xlu0 %v1933, 127
      %v1974 = vpop.permute.xlu0 %1973
      %v1977 = vrot.slane %v1899, 6
      %1978 = vrot.lane.b32.xlu0 %v1977, 17
      %v1979 = vpop.permute.xlu0 %1978
      %v1981 = vrot.slane %v1899, 5
      %1982 = vrot.lane.b32.xlu0 %v1981, 16
      %v1983 = vpop.permute.xlu0 %1982
      %v1985 = vrot.slane %v1899, 4
      %1986 = vrot.lane.b32.xlu0 %v1985, 15
      %v1987 = vpop.permute.xlu0 %1986
      %v1989 = vrot.slane %v1899, 3
      %1990 = vrot.lane.b32.xlu0 %v1989, 9
      %v1991 = vpop.permute.xlu0 %1990
      %v1993 = vrot.slane %v1899, 2
      %1994 = vrot.lane.b32.xlu0 %v1993, 8
      %v1995 = vpop.permute.xlu0 %1994
      %v1997 = vrot.slane %v1899, 1
      %1998 = vrot.lane.b32.xlu0 %v1997, 7
      %v1999 = vpop.permute.xlu0 %1998
      %2001 = vrot.lane.b32.xlu0 %v1899, 1
      %v2002 = vpop.permute.xlu0 %2001
      %v2004 = vrot.slane %v1899, 7
      %2006 = vrot.lane.b32.xlu0 %v1977, 127
      %v2007 = vpop.permute.xlu0 %2006
      %v2009 = vsel %vm299, %v1898, %v1974
      %v2010 = vsel %vm301, %v2009, %v1979
      %v2011 = vsel %vm303, %v2010, %v1983
      %v2012 = vsel %vm305, %v2011, %v1987
      %v2013 = vsel %vm307, %v2012, %v1991
      %v2014 = vsel %vm309, %v2013, %v1995
      %v2015 = vsel %vm311, %v2014, %v1999
      %v2016 = vsel %vm299, %v2002, %v2004
      %v2017 = vsel %vm301, %v2016, %v2007
      %2020 = vrot.lane.b32.xlu0 %v2015, 111
      %v2021 = vpop.permute.xlu0 %2020
      %2022 = vrot.lane.b32.xlu0 %v2017, 111
      %v2023 = vpop.permute.xlu0 %2022
      %v2026 = vmul.f32 %v1965, %v221
      %v2027 = vmul.f32 %v1972, %v222
      %v2028 = vmul.f32 %v2021, %v223
      %v2029 = vmul.f32 %v2023, %v224
      %v2031 = vsel %vm303, %v2029, 0
      %2033 = vmatprep.subr.mxu0 0.0
      %2034 = vmatpush1.msra.mxu0 0.0
      %2035 = vmatprep.subr.mxu0 0.0
      %2036 = vmatpush1.msra.mxu0 0.0
      %2037 = vmatprep.subr.mxu0 0.0
      %2038 = vmatpush1.msra.mxu0 0.0
      %2039 = vmatprep.subr.mxu0 0.0
      %2040 = vmatpush1.msra.mxu0 0.0
      %2041 = vmatprep.subr.mxu0 0.0
      %2042 = vmatpush1.msra.mxu0 0.0
      %2043 = vmatprep.subr.mxu0 0.0
      %2044 = vmatpush1.msra.mxu0 0.0
      %2045 = vmatprep.subr.mxu0 0.0
      %2046 = vmatpush1.msra.mxu0 0.0
      %2047 = vmatprep.subr.mxu0 0.0
      %2048 = vmatpush1.msra.mxu0 0.0
      %2049 = vmatprep.subr.mxu0 0.0
      %2050 = vmatpush1.msra.mxu0 0.0
      %2051 = vmatprep.subr.mxu0 0.0
      %2052 = vmatpush1.msra.mxu0 0.0
      %2053 = vmatprep.subr.mxu0 0.0
      %2054 = vmatpush1.msra.mxu0 0.0
      %2055 = vmatprep.subr.mxu0 0.0
      %2056 = vmatpush1.msra.mxu0 0.0
      %2057 = vmatprep.subr.mxu0 0.0
      %2058 = vmatpush1.msra.mxu0 %v2031
      %2059 = vmatprep.subr.mxu0 0.0
      %2060 = vmatpush1.msra.mxu0 %v2028
      %2061 = vmatprep.subr.mxu0 0.0
      %2062 = vmatpush1.msra.mxu0 %v2027
      %2063 = vmatprep.subr.mxu0 0.0
      %2064 = vmatpush1.msra.mxu0 %v2026
      %2065 = vmatprep.subr.mxu0 0.0
      %2066 = vmatpush2.msra.mxu0 0.0
      %2067 = vmatprep.subr.mxu0 0.0
      %2068 = vmatpush2.msra.mxu0 0.0
      %2069 = vmatprep.subr.mxu0 0.0
      %2070 = vmatpush2.msra.mxu0 0.0
      %2071 = vmatprep.subr.mxu0 0.0
      %2072 = vmatpush2.msra.mxu0 0.0
      %2073 = vmatprep.subr.mxu0 0.0
      %2074 = vmatpush2.msra.mxu0 0.0
      %2075 = vmatprep.subr.mxu0 0.0
      %2076 = vmatpush2.msra.mxu0 0.0
      %2077 = vmatprep.subr.mxu0 0.0
      %2078 = vmatpush2.msra.mxu0 0.0
      %2079 = vmatprep.subr.mxu0 0.0
      %2080 = vmatpush2.msra.mxu0 0.0
      %2081 = vmatprep.subr.mxu0 0.0
      %2082 = vmatpush2.msra.mxu0 0.0
      %2083 = vmatprep.subr.mxu0 0.0
      %2084 = vmatpush2.msra.mxu0 0.0
      %2085 = vmatprep.subr.mxu0 0.0
      %2086 = vmatpush2.msra.mxu0 0.0
      %2087 = vmatprep.subr.mxu0 0.0
      %2088 = vmatpush2.msra.mxu0 0.0
      %2089 = vmatprep.subr.mxu0 0.0
      %2090 = vmatpush2.msra.mxu0 0.0
      %2091 = vmatprep.subr.mxu0 0.0
      %2092 = vmatpush2.msra.mxu0 0.0
      %2093 = vmatprep.subr.mxu0 0.0
      %2094 = vmatpush2.msra.mxu0 0.0
      %2095 = vmatprep.subr.mxu0 0.0
      %2096 = vmatpush2.msra.mxu0 0.0
      %2097 = vmatprep.mubr.f32.mxu0 0.0
      %2098 = vmatmul.mubr.f32.gmra.mxu0 %v409
      %v2099 = vpop.f32.mrf.mxu0
      %v2100 = vadd.f32 %v380, %v2099
      %v2101 = vpop.f32.mrf.mxu0
      %2102 = vmatprep.mubr.f32.mxu0 0.0
      %2103 = vmatmul.mubr.f32.gmra.mxu0 %v412
      %v2104 = vpop.f32.mrf.mxu0
      %v2105 = vadd.f32 %v385, %v2104
      %v2106 = vpop.f32.mrf.mxu0
      %2107 = vmatprep.mubr.f32.mxu0 0.0
      %2108 = vmatmul.mubr.f32.gmra.mxu0 %v415
      %v2109 = vpop.f32.mrf.mxu0
      %v2110 = vadd.f32 %v390, %v2109
      %v2111 = vpop.f32.mrf.mxu0
      %2112 = vmatprep.mubr.f32.mxu0 0.0
      %2113 = vmatmul.mubr.f32.gmra.mxu0 %v418
      %v2114 = vpop.f32.mrf.mxu0
      %v2115 = vadd.f32 %v395, %v2114
      %v2116 = vpop.f32.mrf.mxu0
      %2117 = vmatprep.mubr.f32.mxu0 0.0
      %2118 = vmatmul.mubr.f32.gmra.mxu0 %v421
      %v2119 = vpop.f32.mrf.mxu0
      %v2120 = vadd.f32 %v400, %v2119
      %v2121 = vpop.f32.mrf.mxu0
      %2122 = vmatprep.mubr.f32.mxu0 0.0
      %2123 = vmatmul.mubr.f32.gmra.mxu0 %v424
      %v2124 = vpop.f32.mrf.mxu0
      %v2125 = vadd.f32 %v405, %v2124
      %v2126 = vpop.f32.mrf.mxu0
      %2127 = vdwg.mxu0
      %v2128 = vpack.c.bf16 %v2105, %v2100
      %v2129 = vpack.c.bf16 %v2115, %v2110
      %v2130 = vpack.c.bf16 %v2125, %v2120
      %v2134 = vunpack.c.l.b16 %v2128
      %v2135 = vunpack.c.h.b16 %v2128
      %v2136 = vunpack.c.l.b16 %v2129
      %v2137 = vunpack.c.h.b16 %v2129
      %v2138 = vunpack.c.l.b16 %v2130
      %v2139 = vunpack.c.h.b16 %v2130
      %v2140 = vpack.c.b16 %v2134, %v2134
      %v2141 = vpack.c.b16 %v2135, %v2135
      %v2142 = vpack.c.b16 %v2136, %v2136
      %v2143 = vpack.c.b16 %v2137, %v2137
      %v2144 = vpack.c.b16 %v2138, %v2138
      %v2145 = vpack.c.b16 %v2139, %v2139
      %2152 = vst.msk [vmem:[%s219 + $0xc] sm:$0xf] %vm548, %v2140
      %2153 = vst.msk [vmem:[%s219 + $0x1c] sm:$0xf] %vm548, %v2141
      %2154 = vst.msk [vmem:[%s219 + $0x2c] sm:$0xf] %vm548, %v2142
      %2155 = vst.msk [vmem:[%s219 + $0x3c] sm:$0xf] %vm548, %v2143
      %2156 = vst.msk [vmem:[%s219 + $0x4c] sm:$0xf] %vm548, %v2144
      %2157 = vst.msk [vmem:[%s219 + $0x5c] sm:$0xf] %vm548, %v2145
      %v2158 = vld [vmem:[%s210 + $0x7] sm:$0x1]
      %v2159 = vld [vmem:[%s210 + $0x8] sm:$0x1]
      %v2160 = vld [vmem:[%s210 + $0x9] sm:$0x1]
      %v2162 = vrot.slane %v2158, 7
      %2163 = vrot.lane.b32.xlu0 %v2162, 127
      %v2164 = vpop.permute.xlu0 %2163
      %v2166 = vrot.slane %v2158, 6
      %2167 = vrot.lane.b32.xlu0 %v2166, 126
      %v2168 = vpop.permute.xlu0 %2167
      %v2170 = vrot.slane %v2158, 5
      %2171 = vrot.lane.b32.xlu0 %v2170, 120
      %v2172 = vpop.permute.xlu0 %2171
      %v2174 = vrot.slane %v2158, 4
      %2175 = vrot.lane.b32.xlu0 %v2174, 119
      %v2176 = vpop.permute.xlu0 %2175
      %v2178 = vrot.slane %v2158, 3
      %2179 = vrot.lane.b32.xlu0 %v2178, 118
      %v2180 = vpop.permute.xlu0 %2179
      %v2182 = vrot.slane %v2158, 2
      %2183 = vrot.lane.b32.xlu0 %v2182, 112
      %v2184 = vpop.permute.xlu0 %2183
      %v2186 = vrot.slane %v2158, 1
      %2187 = vrot.lane.b32.xlu0 %v2186, 111
      %v2188 = vpop.permute.xlu0 %2187
      %2190 = vrot.lane.b32.xlu0 %v2158, 110
      %v2191 = vpop.permute.xlu0 %2190
      %v2194 = vrot.slane %v2159, 7
      %v2196 = vrot.slane %v2159, 6
      %2197 = vrot.lane.b32.xlu0 %v2196, 127
      %v2198 = vpop.permute.xlu0 %2197
      %v2200 = vrot.slane %v2159, 5
      %2201 = vrot.lane.b32.xlu0 %v2200, 126
      %v2202 = vpop.permute.xlu0 %2201
      %v2204 = vrot.slane %v2159, 4
      %2205 = vrot.lane.b32.xlu0 %v2204, 120
      %v2206 = vpop.permute.xlu0 %2205
      %v2208 = vrot.slane %v2159, 3
      %2209 = vrot.lane.b32.xlu0 %v2208, 119
      %v2210 = vpop.permute.xlu0 %2209
      %v2212 = vrot.slane %v2159, 2
      %2213 = vrot.lane.b32.xlu0 %v2212, 118
      %v2214 = vpop.permute.xlu0 %2213
      %v2216 = vrot.slane %v2159, 1
      %2217 = vrot.lane.b32.xlu0 %v2216, 112
      %v2218 = vpop.permute.xlu0 %2217
      %v2220 = vsel %vm299, %v2158, %v2164
      %v2221 = vsel %vm301, %v2220, %v2168
      %v2222 = vsel %vm303, %v2221, %v2172
      %v2223 = vsel %vm305, %v2222, %v2176
      %v2224 = vsel %vm307, %v2223, %v2180
      %v2225 = vsel %vm309, %v2224, %v2184
      %v2226 = vsel %vm311, %v2225, %v2188
      %v2227 = vsel %vm299, %v2191, %v2194
      %v2228 = vsel %vm301, %v2227, %v2198
      %v2229 = vsel %vm303, %v2228, %v2202
      %v2230 = vsel %vm305, %v2229, %v2206
      %v2231 = vsel %vm307, %v2230, %v2210
      %v2232 = vsel %vm309, %v2231, %v2214
      %v2233 = vsel %vm311, %v2232, %v2218
      %2234 = vrot.lane.b32.xlu0 %v2194, 127
      %v2235 = vpop.permute.xlu0 %2234
      %v2238 = vrot.slane %v2160, 6
      %2239 = vrot.lane.b32.xlu0 %v2238, 17
      %v2240 = vpop.permute.xlu0 %2239
      %v2242 = vrot.slane %v2160, 5
      %2243 = vrot.lane.b32.xlu0 %v2242, 16
      %v2244 = vpop.permute.xlu0 %2243
      %v2246 = vrot.slane %v2160, 4
      %2247 = vrot.lane.b32.xlu0 %v2246, 15
      %v2248 = vpop.permute.xlu0 %2247
      %v2250 = vrot.slane %v2160, 3
      %2251 = vrot.lane.b32.xlu0 %v2250, 9
      %v2252 = vpop.permute.xlu0 %2251
      %v2254 = vrot.slane %v2160, 2
      %2255 = vrot.lane.b32.xlu0 %v2254, 8
      %v2256 = vpop.permute.xlu0 %2255
      %v2258 = vrot.slane %v2160, 1
      %2259 = vrot.lane.b32.xlu0 %v2258, 7
      %v2260 = vpop.permute.xlu0 %2259
      %2262 = vrot.lane.b32.xlu0 %v2160, 1
      %v2263 = vpop.permute.xlu0 %2262
      %v2265 = vrot.slane %v2160, 7
      %2267 = vrot.lane.b32.xlu0 %v2238, 127
      %v2268 = vpop.permute.xlu0 %2267
      %v2270 = vsel %vm299, %v2159, %v2235
      %v2271 = vsel %vm301, %v2270, %v2240
      %v2272 = vsel %vm303, %v2271, %v2244
      %v2273 = vsel %vm305, %v2272, %v2248
      %v2274 = vsel %vm307, %v2273, %v2252
      %v2275 = vsel %vm309, %v2274, %v2256
      %v2276 = vsel %vm311, %v2275, %v2260
      %v2277 = vsel %vm299, %v2263, %v2265
      %v2278 = vsel %vm301, %v2277, %v2268
      %2281 = vrot.lane.b32.xlu0 %v2276, 111
      %v2282 = vpop.permute.xlu0 %2281
      %2283 = vrot.lane.b32.xlu0 %v2278, 111
      %v2284 = vpop.permute.xlu0 %2283
      %v2287 = vmul.f32 %v2226, %v221
      %v2288 = vmul.f32 %v2233, %v222
      %v2289 = vmul.f32 %v2282, %v223
      %v2290 = vmul.f32 %v2284, %v224
      %v2292 = vsel %vm303, %v2290, 0
      %2294 = vmatprep.subr.mxu0 0.0
      %2295 = vmatpush1.msra.mxu0 0.0
      %2296 = vmatprep.subr.mxu0 0.0
      %2297 = vmatpush1.msra.mxu0 0.0
      %2298 = vmatprep.subr.mxu0 0.0
      %2299 = vmatpush1.msra.mxu0 0.0
      %2300 = vmatprep.subr.mxu0 0.0
      %2301 = vmatpush1.msra.mxu0 0.0
      %2302 = vmatprep.subr.mxu0 0.0
      %2303 = vmatpush1.msra.mxu0 0.0
      %2304 = vmatprep.subr.mxu0 0.0
      %2305 = vmatpush1.msra.mxu0 0.0
      %2306 = vmatprep.subr.mxu0 0.0
      %2307 = vmatpush1.msra.mxu0 0.0
      %2308 = vmatprep.subr.mxu0 0.0
      %2309 = vmatpush1.msra.mxu0 0.0
      %2310 = vmatprep.subr.mxu0 0.0
      %2311 = vmatpush1.msra.mxu0 0.0
      %2312 = vmatprep.subr.mxu0 0.0
      %2313 = vmatpush1.msra.mxu0 0.0
      %2314 = vmatprep.subr.mxu0 0.0
      %2315 = vmatpush1.msra.mxu0 0.0
      %2316 = vmatprep.subr.mxu0 0.0
      %2317 = vmatpush1.msra.mxu0 0.0
      %2318 = vmatprep.subr.mxu0 0.0
      %2319 = vmatpush1.msra.mxu0 %v2292
      %2320 = vmatprep.subr.mxu0 0.0
      %2321 = vmatpush1.msra.mxu0 %v2289
      %2322 = vmatprep.subr.mxu0 0.0
      %2323 = vmatpush1.msra.mxu0 %v2288
      %2324 = vmatprep.subr.mxu0 0.0
      %2325 = vmatpush1.msra.mxu0 %v2287
      %2326 = vmatprep.subr.mxu0 0.0
      %2327 = vmatpush2.msra.mxu0 0.0
      %2328 = vmatprep.subr.mxu0 0.0
      %2329 = vmatpush2.msra.mxu0 0.0
      %2330 = vmatprep.subr.mxu0 0.0
      %2331 = vmatpush2.msra.mxu0 0.0
      %2332 = vmatprep.subr.mxu0 0.0
      %2333 = vmatpush2.msra.mxu0 0.0
      %2334 = vmatprep.subr.mxu0 0.0
      %2335 = vmatpush2.msra.mxu0 0.0
      %2336 = vmatprep.subr.mxu0 0.0
      %2337 = vmatpush2.msra.mxu0 0.0
      %2338 = vmatprep.subr.mxu0 0.0
      %2339 = vmatpush2.msra.mxu0 0.0
      %2340 = vmatprep.subr.mxu0 0.0
      %2341 = vmatpush2.msra.mxu0 0.0
      %2342 = vmatprep.subr.mxu0 0.0
      %2343 = vmatpush2.msra.mxu0 0.0
      %2344 = vmatprep.subr.mxu0 0.0
      %2345 = vmatpush2.msra.mxu0 0.0
      %2346 = vmatprep.subr.mxu0 0.0
      %2347 = vmatpush2.msra.mxu0 0.0
      %2348 = vmatprep.subr.mxu0 0.0
      %2349 = vmatpush2.msra.mxu0 0.0
      %2350 = vmatprep.subr.mxu0 0.0
      %2351 = vmatpush2.msra.mxu0 0.0
      %2352 = vmatprep.subr.mxu0 0.0
      %2353 = vmatpush2.msra.mxu0 0.0
      %2354 = vmatprep.subr.mxu0 0.0
      %2355 = vmatpush2.msra.mxu0 0.0
      %2356 = vmatprep.subr.mxu0 0.0
      %2357 = vmatpush2.msra.mxu0 0.0
      %2358 = vmatprep.mubr.f32.mxu0 0.0
      %2359 = vmatmul.mubr.f32.gmra.mxu0 %v409
      %v2360 = vpop.f32.mrf.mxu0
      %v2361 = vadd.f32 %v380, %v2360
      %v2362 = vpop.f32.mrf.mxu0
      %2363 = vmatprep.mubr.f32.mxu0 0.0
      %2364 = vmatmul.mubr.f32.gmra.mxu0 %v412
      %v2365 = vpop.f32.mrf.mxu0
      %v2366 = vadd.f32 %v385, %v2365
      %v2367 = vpop.f32.mrf.mxu0
      %2368 = vmatprep.mubr.f32.mxu0 0.0
      %2369 = vmatmul.mubr.f32.gmra.mxu0 %v415
      %v2370 = vpop.f32.mrf.mxu0
      %v2371 = vadd.f32 %v390, %v2370
      %v2372 = vpop.f32.mrf.mxu0
      %2373 = vmatprep.mubr.f32.mxu0 0.0
      %2374 = vmatmul.mubr.f32.gmra.mxu0 %v418
      %v2375 = vpop.f32.mrf.mxu0
      %v2376 = vadd.f32 %v395, %v2375
      %v2377 = vpop.f32.mrf.mxu0
      %2378 = vmatprep.mubr.f32.mxu0 0.0
      %2379 = vmatmul.mubr.f32.gmra.mxu0 %v421
      %v2380 = vpop.f32.mrf.mxu0
      %v2381 = vadd.f32 %v400, %v2380
      %v2382 = vpop.f32.mrf.mxu0
      %2383 = vmatprep.mubr.f32.mxu0 0.0
      %2384 = vmatmul.mubr.f32.gmra.mxu0 %v424
      %v2385 = vpop.f32.mrf.mxu0
      %v2386 = vadd.f32 %v405, %v2385
      %v2387 = vpop.f32.mrf.mxu0
      %2388 = vdwg.mxu0
      %v2389 = vpack.c.bf16 %v2366, %v2361
      %v2390 = vpack.c.bf16 %v2376, %v2371
      %v2391 = vpack.c.bf16 %v2386, %v2381
      %v2395 = vunpack.c.l.b16 %v2389
      %v2396 = vunpack.c.h.b16 %v2389
      %v2397 = vunpack.c.l.b16 %v2390
      %v2398 = vunpack.c.h.b16 %v2390
      %v2399 = vunpack.c.l.b16 %v2391
      %v2400 = vunpack.c.h.b16 %v2391
      %v2401 = vpack.c.b16 %v2395, %v2395
      %v2402 = vpack.c.b16 %v2396, %v2396
      %v2403 = vpack.c.b16 %v2397, %v2397
      %v2404 = vpack.c.b16 %v2398, %v2398
      %v2405 = vpack.c.b16 %v2399, %v2399
      %v2406 = vpack.c.b16 %v2400, %v2400
      %2407 = vrot.lane.b32.xlu0 %v2401, 64
      %v2408 = vpop.permute.xlu0 %2407
      %2409 = vrot.lane.b32.xlu0 %v2402, 64
      %v2410 = vpop.permute.xlu0 %2409
      %2411 = vrot.lane.b32.xlu0 %v2403, 64
      %v2412 = vpop.permute.xlu0 %2411
      %2413 = vrot.lane.b32.xlu0 %v2404, 64
      %v2414 = vpop.permute.xlu0 %2413
      %2415 = vrot.lane.b32.xlu0 %v2405, 64
      %v2416 = vpop.permute.xlu0 %2415
      %2417 = vrot.lane.b32.xlu0 %v2406, 64
      %v2418 = vpop.permute.xlu0 %2417
      %2425 = vst.msk [vmem:[%s219 + $0xc] sm:$0xf] %vm822, %v2408
      %2426 = vst.msk [vmem:[%s219 + $0x1c] sm:$0xf] %vm822, %v2410
      %2427 = vst.msk [vmem:[%s219 + $0x2c] sm:$0xf] %vm822, %v2412
      %2428 = vst.msk [vmem:[%s219 + $0x3c] sm:$0xf] %vm822, %v2414
      %2429 = vst.msk [vmem:[%s219 + $0x4c] sm:$0xf] %vm822, %v2416
      %2430 = vst.msk [vmem:[%s219 + $0x5c] sm:$0xf] %vm822, %v2418
      %s2431 = smul.u32 4, %s20
      %p2432 = scmp.lt.s32.totalorder %s19, 1
      %s2433 = scalar_select %p2432, %s19, 1
      %p2434 = scmp.lt.s32.totalorder %s2431, 3
      %s2435 = scalar_select %p2434, %s2431, 3
      %s2436 = smul.addr %s2433, 24
      %s2437 = sadd.s32 %s2435, %s2436
      %s2438 = smul.addr %s2437, 4
      %s2439 = scalar_lea.vmem %s4, %s2438
      // Predicated region
      $region37: #{my_model_forward.3} parent=35 // pred_check
        %p2440 = pneg %p136
      $region38: #{my_model_forward.3} parent=35 // pred_check_branch
        %2442 = sbr.rel (%p2440) target = $region40
      $region39: #{my_model_forward.3} parent=35 // pred_region
        %s2443 = smul.u32 4, %s20
      $region40: #{my_model_forward.3} parent=35 // pred_fallthru
        _
    $region36: #{my_model_forward.3} parent=5 // pred_fallthru
      _
    %p2444 = scmp.le.s32.totalorder 2, %s10
    // Predicated region
    $region41: #{my_model_forward.3} parent=5 // pred_check
      %p2445 = pneg %p2444
    $region42: #{my_model_forward.3} parent=5 // pred_check_branch
      %2447 = sbr.rel (%p2445) target = $region44
    $region43: #{my_model_forward.3} parent=5 // pred_region
      %s2448 = ssub.s32 %s10, 2
      // Predicated region
      $region45: #{my_model_forward.3} parent=43 // pred_check
        %p2449 = pneg %p142
      $region46: #{my_model_forward.3} parent=43 // pred_check_branch
        %2451 = sbr.rel (%p2449) target = $region48
      $region47: #{my_model_forward.3} parent=43 // pred_region
        %s2452 = smul.u32 4, %s22
        %p2453 = scmp.lt.s32.totalorder %s21, 1
        %s2454 = scalar_select %p2453, %s21, 1
        %p2455 = scmp.lt.s32.totalorder %s2452, 3
        %s2456 = scalar_select %p2455, %s2452, 3
        %s2457 = smul.addr %s2454, 24
        %s2458 = sadd.s32 %s2456, %s2457
        %s2459 = smul.addr %s2458, 4
        %s2460 = scalar_lea.vmem %s4, %s2459
      $region48: #{my_model_forward.3} parent=43 // pred_fallthru
        _
    $region44: #{my_model_forward.3} parent=5 // pred_fallthru
      _
  $region6: #{my_model_forward.3} parent=0 // loop_footer
    %s14 = sadd.s32 1, %s10
  $region7: #{my_model_forward.3} parent=0 // loop_footer_branch
    %9 = sbr.rel target = $region3
  $region8: #{my_model_forward.3} parent=0 // loop_exit
    _

</llo_original>
